<compile_context>
chip_gen: v5e
topology: v5e:2x2
jax: 0.10.0
libtpu: 0.0.40
codegen_flags: <defaults>
</compile_context>

<pallas_src>
import functools

import numpy as np

import jax
import jax.numpy as jnp
from jax import lax
from jax.experimental import pallas as pl
from jax.experimental.pallas import tpu as pltpu  # noqa: F401  (TPU backend)

CHANNELS = 1
NDF = 64
NUM_CLASSES = 10
IMAGE_SIZE = 24            # 24 -> 12 -> 6 -> 3 -> 1 through the conv stack
NEG_SLOPE = 0.2
BN_EPS = 1e-5

C_IN = CHANNELS + NUM_CLASSES   # 11 input channels after the label concat
C_IN_PAD = 16                   # pad so layer-1 K = 16*4*4 = 256 (lane aligned)
N1_PAD = 128                    # layer-1 OC 64 -> 128 for lane-dense stores
SUBLANE = 8


def _round_up(x, m):
    return (x + m - 1) // m * m


# ----------------------------- Pallas kernels ------------------------------

def _conv_lrelu_kernel(p_ref, w_ref, o_ref):
    """o = leaky_relu(p @ w).  bf16 MXU inputs, f32 accumulation/epilogue."""
    y = jnp.dot(p_ref[...], w_ref[...], preferred_element_type=jnp.float32)
    o_ref[...] = jnp.where(y > 0, y, NEG_SLOPE * y).astype(o_ref.dtype)


def _conv_bn_lrelu_kernel(p_ref, w_ref, g_ref, b_ref, o_ref, *, valid_rows):
    """o = leaky_relu(batchnorm(p @ w)).

    BatchNorm uses batch statistics over the first `valid_rows` rows
    (PyTorch training-mode forward).  Padded rows are all-zero patches, so
    the sum / sum-of-squares are unaffected by the padding.
    """
    y = jnp.dot(p_ref[...], w_ref[...], preferred_element_type=jnp.float32)
    inv_m = 1.0 / float(valid_rows)
    mean = jnp.sum(y, axis=0, keepdims=True) * inv_m
    var = jnp.maximum(
        jnp.sum(y * y, axis=0, keepdims=True) * inv_m - mean * mean, 0.0)
    y = (y - mean) * lax.rsqrt(var + BN_EPS) * g_ref[...] + b_ref[...]
    o_ref[...] = jnp.where(y > 0, y, NEG_SLOPE * y).astype(o_ref.dtype)


def _conv_bn_lrelu_head_kernel(p_ref, w_ref, g_ref, b_ref, w4_ref, gsel_ref,
                               o_ref, *, valid_rows):
    """Fused layer 3 + layer 4 (the 3x3, OC=1 head) + sigmoid.

    y3 = leaky_relu(batchnorm(p @ w3))                         (MXU + VPU)
    logit[b] = sum_{r,c} y3[9*b + r, c] * w4[r, c]             (VPU mul + reduce)
    out = sigmoid(logit)

    `w4_ref` is the head conv weight tiled per batch element and zeroed on
    padded rows; `gsel_ref` is a (B, Mp) 0/1 matrix that sums the 9 spatial
    rows belonging to each batch element (also drops padded rows).  This keeps
    the N=1 output conv entirely off the MXU's lane-sparse path.
    """
    y = jnp.dot(p_ref[...], w_ref[...], preferred_element_type=jnp.float32)
    inv_m = 1.0 / float(valid_rows)
    mean = jnp.sum(y, axis=0, keepdims=True) * inv_m
    var = jnp.maximum(
        jnp.sum(y * y, axis=0, keepdims=True) * inv_m - mean * mean, 0.0)
    y = (y - mean) * lax.rsqrt(var + BN_EPS) * g_ref[...] + b_ref[...]
    y = jnp.where(y > 0, y, NEG_SLOPE * y)

    z = y * w4_ref[...]                                         # (Mp, 256)
    logits = jnp.sum(
        jnp.dot(gsel_ref[...], z, preferred_element_type=jnp.float32),
        axis=1, keepdims=True)                                  # (B, 1)
    e = jnp.exp(-jnp.abs(logits))                               # stable sigmoid
    o_ref[...] = jnp.where(logits >= 0.0, 1.0 / (1.0 + e), e / (1.0 + e))


def _single_block_call(kernel, out_shape, args):
    """Whole problem fits in one VMEM block on every TPU generation."""
    in_specs = [pl.BlockSpec(a.shape, lambda i: (0, 0)) for a in args]
    return pl.pallas_call(
        kernel,
        out_shape=out_shape,
        grid=(1,),
        in_specs=in_specs,
        out_specs=pl.BlockSpec(out_shape.shape, lambda i: (0, 0)),
        compiler_params=pltpu.CompilerParams(
            dimension_semantics=("arbitrary",)),
    )(*args)


# ------------------------------- JAX glue -----------------------------------

def _im2col_nhwc(x, kh, kw, stride, pad):
    """NHWC patch extraction: (B,H,W,C) -> ((B*OH*OW, KH*KW*C), OH, OW).

    Patch column order is (kh, kw, c), matching the weight matrices produced
    by prepare_params.  Only unit-op slices + one concat along the lane axis.
    """
    B, H, W, C = x.shape
    if pad:
        x = jnp.pad(x, ((0, 0), (pad, pad), (pad, pad), (0, 0)))
    Hp, Wp = H + 2 * pad, W + 2 * pad
    oh = (Hp - kh) // stride + 1
    ow = (Wp - kw) // stride + 1
    cols = [x[:, i:i + stride * oh:stride, j:j + stride * ow:stride, :]
            for i in range(kh) for j in range(kw)]
    patches = jnp.concatenate(cols, axis=-1)           # (B, oh, ow, kh*kw*C)
    return patches.reshape(B * oh * ow, kh * kw * C), oh, ow


def _pad_rows(m, rows):
    if m.shape[0] == rows:
        return m
    return jnp.pad(m, ((0, rows - m.shape[0]), (0, 0)))


def _conv_weight_to_matrix(w, c_pad=None, n_pad=None):
    """PyTorch (OC, C, KH, KW) conv weight -> (KH*KW*Cp, Np) bf16 matrix whose
    row order matches the (kh, kw, c) patch layout of _im2col_nhwc."""
    oc, c, kh, kw = w.shape
    cp = c if c_pad is None else c_pad
    npad = oc if n_pad is None else n_pad
    wm = jnp.transpose(w, (2, 3, 1, 0))                # (KH, KW, C, OC)
    wm = jnp.pad(wm, ((0, 0), (0, 0), (0, cp - c), (0, npad - oc)))
    return wm.reshape(kh * kw * cp, npad).astype(jnp.bfloat16)


def prepare_params(params):
    """One-time conversion of PyTorch-layout params into padded, MXU-friendly
    matrices consumed by the Pallas kernels (keeps it out of the hot path)."""
    w4 = params["w4"]                                   # (1, 256, 3, 3)
    w4r = jnp.transpose(w4[0], (1, 2, 0)).reshape(9, NDF * 4).astype(jnp.float32)
    return {
        "emb": params["emb"],
        "w1": _conv_weight_to_matrix(params["w1"], c_pad=C_IN_PAD, n_pad=N1_PAD),
        "w2": _conv_weight_to_matrix(params["w2"]),
        "g2": params["g2"].reshape(1, -1).astype(jnp.float32),
        "b2": params["b2"].reshape(1, -1).astype(jnp.float32),
        "w3": _conv_weight_to_matrix(params["w3"]),
        "g3": params["g3"].reshape(1, -1).astype(jnp.float32),
        "b3": params["b3"].reshape(1, -1).astype(jnp.float32),
        "w4r": w4r,                                     # (9, 256) head conv
    }


def _row_select_matrix(batch, spatial, rows_padded):
    """Compile-time (B, Mp) 0/1 matrix summing each batch's spatial rows."""
    rows = np.arange(rows_padded, dtype=np.int32)[None, :]
    bids = np.arange(batch, dtype=np.int32)[:, None]
    sel = (rows >= spatial * bids) & (rows < spatial * (bids + 1))
    return jnp.asarray(sel.astype(np.float32))


def discriminator_forward(prep, x, labels):
    """x: (B, 1, H, W) NCHW (PyTorch layout); labels: (B,) int32."""
    B, _, H, W = x.shape

    # Embedding lookup + channel concat, converted once to NHWC (channels=lane).
    emb = prep["emb"][labels]                                    # (B, 10)
    x_nhwc = jnp.transpose(x, (0, 2, 3, 1))                      # (B, H, W, 1)
    emb_map = jnp.broadcast_to(emb[:, None, None, :], (B, H, W, NUM_CLASSES))
    chan_pad = jnp.zeros((B, H, W, C_IN_PAD - C_IN), x.dtype)
    d_in = jnp.concatenate([x_nhwc, emb_map, chan_pad], axis=-1)  # (B,H,W,16)
    d_in = d_in.astype(jnp.bfloat16)

    # ---- layer 1: conv(16 -> 128pad, k4 s2 p1) + LeakyReLU ------------------
    p1, oh, ow = _im2col_nhwc(d_in, 4, 4, 2, 1)                  # (B*144, 256)
    m1 = p1.shape[0]
    m1p = _round_up(m1, SUBLANE)
    y1 = _single_block_call(
        _conv_lrelu_kernel,
        jax.ShapeDtypeStruct((m1p, N1_PAD), jnp.bfloat16),
        [_pad_rows(p1, m1p), prep["w1"]])
    h1 = y1[:m1, :NDF].reshape(B, oh, ow, NDF)                   # (B,12,12,64)

    # ---- layer 2: conv(64 -> 128, k4 s2 p1) + BN + LeakyReLU ----------------
    p2, oh, ow = _im2col_nhwc(h1, 4, 4, 2, 1)                    # (B*36, 1024)
    m2 = p2.shape[0]
    m2p = _round_up(m2, SUBLANE)
    y2 = _single_block_call(
        functools.partial(_conv_bn_lrelu_kernel, valid_rows=m2),
        jax.ShapeDtypeStruct((m2p, 2 * NDF), jnp.bfloat16),
        [_pad_rows(p2, m2p), prep["w2"], prep["g2"], prep["b2"]])
    h2 = y2[:m2].reshape(B, oh, ow, 2 * NDF)                     # (B,6,6,128)

    # ---- fused layers 3 + 4: conv + BN + LeakyReLU + 3x3 head + sigmoid -----
    p3, oh, ow = _im2col_nhwc(h2, 4, 4, 2, 1)                    # (B*9, 2048)
    spatial = oh * ow
    assert spatial == prep["w4r"].shape[0]   # head conv consumes 3x3 exactly
    m3 = p3.shape[0]
    m3p = _round_up(m3, SUBLANE)
    w4_full = _pad_rows(jnp.tile(prep["w4r"], (B, 1)), m3p)      # (m3p, 256)
    gsel = _row_select_matrix(B, spatial, m3p)                   # (B, m3p) const
    out = _single_block_call(
        functools.partial(_conv_bn_lrelu_head_kernel, valid_rows=m3),
        jax.ShapeDtypeStruct((B, 1), jnp.float32),
        [_pad_rows(p3, m3p), prep["w3"], prep["g3"], prep["b3"], w4_full, gsel])
    return out.reshape(B, 1, 1, 1)


def init_params(key):
    ks = jax.random.split(key, 5)
    std = 0.02
    return {
        "emb": jax.random.normal(ks[0], (NUM_CLASSES, NUM_CLASSES), jnp.float32),
        "w1": std * jax.random.normal(ks[1], (NDF, C_IN, 4, 4), jnp.float32),
        "w2": std * jax.random.normal(ks[2], (NDF * 2, NDF, 4, 4), jnp.float32),
        "g2": jnp.ones((NDF * 2,), jnp.float32),
        "b2": jnp.zeros((NDF * 2,), jnp.float32),
        "w3": std * jax.random.normal(ks[3], (NDF * 4, NDF * 2, 4, 4), jnp.float32),
        "g3": jnp.ones((NDF * 4,), jnp.float32),
        "b3": jnp.zeros((NDF * 4,), jnp.float32),
        "w4": std * jax.random.normal(ks[4], (1, NDF * 4, 3, 3), jnp.float32),
    }


if __name__ == "__main__":
    key = jax.random.PRNGKey(0)
    k_param, k_img, k_lab = jax.random.split(key, 3)

    params = init_params(k_param)
    prep = prepare_params(params)        # one-time weight re-layout (off hot path)

    batch = 2
    x = jax.random.normal(k_img, (batch, CHANNELS, IMAGE_SIZE, IMAGE_SIZE),
                          jnp.float32)
    labels = jax.random.randint(k_lab, (batch,), 0, NUM_CLASSES, jnp.int32)

    fwd = jax.jit(discriminator_forward)
    out = jax.block_until_ready(fwd(prep, x, labels))

    assert out.shape == (batch, 1, 1, 1), out.shape
    assert bool(jnp.all(jnp.isfinite(out)))
    assert bool(jnp.all((out >= 0.0) & (out <= 1.0)))
    print("KERNEL_OK")
</pallas_src>

<mosaic_0001>
module attributes {stable_mosaic.version = 11 : i64} {
  func.func @_conv_lrelu_kernel(%arg0: i32, %arg1: memref<288x256xbf16, #tpu.memory_space<vmem>>, %arg2: memref<256x128xbf16, #tpu.memory_space<vmem>>, %arg3: memref<288x128xbf16, #tpu.memory_space<vmem>>) attributes {dimension_semantics = [#tpu.dimension_semantics<arbitrary>], iteration_bounds = array<i64: 1>, scalar_prefetch = 0 : i64, scratch_operands = 0 : i64, tpu.core_type = #tpu.core_type<tc>, window_params = [{pipeline_mode = #tpu.pipeline_mode<synchronous>, transform_indices = @transform_0, window_bounds = array<i64: 288, 256>}, {pipeline_mode = #tpu.pipeline_mode<synchronous>, transform_indices = @transform_1, window_bounds = array<i64: 256, 128>}, {pipeline_mode = #tpu.pipeline_mode<synchronous>, transform_indices = @transform_2, window_bounds = array<i64: 288, 128>}]} {
    %c0 = arith.constant 0 : index
    %c0_0 = arith.constant 0 : index
    %0 = vector.load %arg1[%c0, %c0_0] : memref<288x256xbf16, #tpu.memory_space<vmem>>, vector<288x256xbf16>
    %c0_1 = arith.constant 0 : index
    %c0_2 = arith.constant 0 : index
    %1 = vector.load %arg2[%c0_1, %c0_2] : memref<256x128xbf16, #tpu.memory_space<vmem>>, vector<256x128xbf16>
    %cst = arith.constant dense<0.000000e+00> : vector<288x128xf32>
    %2 = tpu.matmul %0, %1, %cst {dimension_numbers = #tpu.dot_dimension_numbers<[1], [0], [0], [1], [0, 0, 1, 1], [], []>} : vector<288x256xbf16>, vector<256x128xbf16>, vector<288x128xf32> -> vector<288x128xf32>
    %cst_3 = arith.constant 0.000000e+00 : f32
    %3 = vector.broadcast %cst_3 : f32 to vector<288x128xf32>
    %4 = arith.cmpf ogt, %2, %3 : vector<288x128xf32>
    %cst_4 = arith.constant 2.000000e-01 : f32
    %5 = vector.broadcast %cst_4 : f32 to vector<288x128xf32>
    %6 = arith.mulf %5, %2 : vector<288x128xf32>
    %7 = arith.select %4, %2, %6 : vector<288x128xi1>, vector<288x128xf32>
    %8 = arith.truncf %7 : vector<288x128xf32> to vector<288x128xbf16>
    %c0_5 = arith.constant 0 : index
    %c0_6 = arith.constant 0 : index
    %9 = vector.load %arg3[%c0_5, %c0_6] : memref<288x128xbf16, #tpu.memory_space<vmem>>, vector<288x128xbf16>
    tpu.vector_store %arg3[%c0_5, %c0_6], %8 {strides = array<i32>} : memref<288x128xbf16, #tpu.memory_space<vmem>>, vector<288x128xbf16>,
    return
  }
  func.func @transform_0(%arg0: i32) -> (i32, i32) {
    %c0_i32 = arith.constant 0 : i32
    %c0_i32_0 = arith.constant 0 : i32
    %c0_i32_1 = arith.constant 0 : i32
    return %c0_i32, %c0_i32_0 : i32, i32
  }
  func.func @transform_1(%arg0: i32) -> (i32, i32) {
    %c0_i32 = arith.constant 0 : i32
    %c0_i32_0 = arith.constant 0 : i32
    %c0_i32_1 = arith.constant 0 : i32
    return %c0_i32, %c0_i32_0 : i32, i32
  }
  func.func @transform_2(%arg0: i32) -> (i32, i32) {
    %c0_i32 = arith.constant 0 : i32
    %c0_i32_0 = arith.constant 0 : i32
    %c0_i32_1 = arith.constant 0 : i32
    return %c0_i32, %c0_i32_0 : i32, i32
  }
}

module attributes {stable_mosaic.version = 11 : i64} {
  func.func @_conv_bn_lrelu_kernel(%arg0: i32, %arg1: memref<72x1024xbf16, #tpu.memory_space<vmem>>, %arg2: memref<1024x128xbf16, #tpu.memory_space<vmem>>, %arg3: memref<1x128xf32, #tpu.memory_space<vmem>>, %arg4: memref<1x128xf32, #tpu.memory_space<vmem>>, %arg5: memref<72x128xbf16, #tpu.memory_space<vmem>>) attributes {dimension_semantics = [#tpu.dimension_semantics<arbitrary>], iteration_bounds = array<i64: 1>, scalar_prefetch = 0 : i64, scratch_operands = 0 : i64, tpu.core_type = #tpu.core_type<tc>, window_params = [{pipeline_mode = #tpu.pipeline_mode<synchronous>, transform_indices = @transform_0, window_bounds = array<i64: 72, 1024>}, {pipeline_mode = #tpu.pipeline_mode<synchronous>, transform_indices = @transform_1, window_bounds = array<i64: 1024, 128>}, {pipeline_mode = #tpu.pipeline_mode<synchronous>, transform_indices = @transform_2, window_bounds = array<i64: 1, 128>}, {pipeline_mode = #tpu.pipeline_mode<synchronous>, transform_indices = @transform_3, window_bounds = array<i64: 1, 128>}, {pipeline_mode = #tpu.pipeline_mode<synchronous>, transform_indices = @transform_4, window_bounds = array<i64: 72, 128>}]} {
    %c0 = arith.constant 0 : index
    %c0_0 = arith.constant 0 : index
    %0 = vector.load %arg1[%c0, %c0_0] : memref<72x1024xbf16, #tpu.memory_space<vmem>>, vector<72x1024xbf16>
    %c0_1 = arith.constant 0 : index
    %c0_2 = arith.constant 0 : index
    %1 = vector.load %arg2[%c0_1, %c0_2] : memref<1024x128xbf16, #tpu.memory_space<vmem>>, vector<1024x128xbf16>
    %cst = arith.constant dense<0.000000e+00> : vector<72x128xf32>
    %2 = tpu.matmul %0, %1, %cst {dimension_numbers = #tpu.dot_dimension_numbers<[1], [0], [0], [1], [0, 0, 1, 1], [], []>} : vector<72x1024xbf16>, vector<1024x128xbf16>, vector<72x128xf32> -> vector<72x128xf32>
    %cst_3 = arith.constant dense<0.000000e+00> : vector<128xf32>
    %3 = vector.multi_reduction <add>, %2, %cst_3 [0] : vector<72x128xf32> to vector<128xf32>
    %4 = vector.shape_cast %3 : vector<128xf32> to vector<1x128xf32>
    %cst_4 = arith.constant 0.013888889 : f32
    %5 = vector.broadcast %cst_4 : f32 to vector<1x128xf32>
    %6 = arith.mulf %4, %5 : vector<1x128xf32>
    %7 = arith.mulf %2, %2 : vector<72x128xf32>
    %cst_5 = arith.constant dense<0.000000e+00> : vector<128xf32>
    %8 = vector.multi_reduction <add>, %7, %cst_5 [0] : vector<72x128xf32> to vector<128xf32>
    %9 = vector.shape_cast %8 : vector<128xf32> to vector<1x128xf32>
    %cst_6 = arith.constant 0.013888889 : f32
    %10 = vector.broadcast %cst_6 : f32 to vector<1x128xf32>
    %11 = arith.mulf %9, %10 : vector<1x128xf32>
    %12 = arith.mulf %6, %6 : vector<1x128xf32>
    %13 = arith.subf %11, %12 : vector<1x128xf32>
    %cst_7 = arith.constant 0.000000e+00 : f32
    %14 = vector.broadcast %cst_7 : f32 to vector<1x128xf32>
    %15 = arith.maximumf %13, %14 : vector<1x128xf32>
    %16 = vector.broadcast %6 : vector<1x128xf32> to vector<72x128xf32>
    %17 = arith.subf %2, %16 : vector<72x128xf32>
    %cst_8 = arith.constant 9.99999974E-6 : f32
    %18 = vector.broadcast %cst_8 : f32 to vector<1x128xf32>
    %19 = arith.addf %15, %18 : vector<1x128xf32>
    %20 = math.rsqrt %19 : vector<1x128xf32>
    %21 = vector.broadcast %20 : vector<1x128xf32> to vector<72x128xf32>
    %22 = arith.mulf %17, %21 : vector<72x128xf32>
    %c0_9 = arith.constant 0 : index
    %c0_10 = arith.constant 0 : index
    %23 = vector.load %arg3[%c0_9, %c0_10] : memref<1x128xf32, #tpu.memory_space<vmem>>, vector<1x128xf32>
    %24 = vector.broadcast %23 : vector<1x128xf32> to vector<72x128xf32>
    %25 = arith.mulf %22, %24 : vector<72x128xf32>
    %c0_11 = arith.constant 0 : index
    %c0_12 = arith.constant 0 : index
    %26 = vector.load %arg4[%c0_11, %c0_12] : memref<1x128xf32, #tpu.memory_space<vmem>>, vector<1x128xf32>
    %27 = vector.broadcast %26 : vector<1x128xf32> to vector<72x128xf32>
    %28 = arith.addf %25, %27 : vector<72x128xf32>
    %cst_13 = arith.constant 0.000000e+00 : f32
    %29 = vector.broadcast %cst_13 : f32 to vector<72x128xf32>
    %30 = arith.cmpf ogt, %28, %29 : vector<72x128xf32>
    %cst_14 = arith.constant 2.000000e-01 : f32
    %31 = vector.broadcast %cst_14 : f32 to vector<72x128xf32>
    %32 = arith.mulf %31, %28 : vector<72x128xf32>
    %33 = arith.select %30, %28, %32 : vector<72x128xi1>, vector<72x128xf32>
    %34 = arith.truncf %33 : vector<72x128xf32> to vector<72x128xbf16>
    %c0_15 = arith.constant 0 : index
    %c0_16 = arith.constant 0 : index
    %35 = vector.load %arg5[%c0_15, %c0_16] : memref<72x128xbf16, #tpu.memory_space<vmem>>, vector<72x128xbf16>
    tpu.vector_store %arg5[%c0_15, %c0_16], %34 {strides = array<i32>} : memref<72x128xbf16, #tpu.memory_space<vmem>>, vector<72x128xbf16>,
    return
  }
  func.func @transform_0(%arg0: i32) -> (i32, i32) {
    %c0_i32 = arith.constant 0 : i32
    %c0_i32_0 = arith.constant 0 : i32
    %c0_i32_1 = arith.constant 0 : i32
    return %c0_i32, %c0_i32_0 : i32, i32
  }
  func.func @transform_1(%arg0: i32) -> (i32, i32) {
    %c0_i32 = arith.constant 0 : i32
    %c0_i32_0 = arith.constant 0 : i32
    %c0_i32_1 = arith.constant 0 : i32
    return %c0_i32, %c0_i32_0 : i32, i32
  }
  func.func @transform_2(%arg0: i32) -> (i32, i32) {
    %c0_i32 = arith.constant 0 : i32
    %c0_i32_0 = arith.constant 0 : i32
    %c0_i32_1 = arith.constant 0 : i32
    return %c0_i32, %c0_i32_0 : i32, i32
  }
  func.func @transform_3(%arg0: i32) -> (i32, i32) {
    %c0_i32 = arith.constant 0 : i32
    %c0_i32_0 = arith.constant 0 : i32
    %c0_i32_1 = arith.constant 0 : i32
    return %c0_i32, %c0_i32_0 : i32, i32
  }
  func.func @transform_4(%arg0: i32) -> (i32, i32) {
    %c0_i32 = arith.constant 0 : i32
    %c0_i32_0 = arith.constant 0 : i32
    %c0_i32_1 = arith.constant 0 : i32
    return %c0_i32, %c0_i32_0 : i32, i32
  }
}

module attributes {stable_mosaic.version = 11 : i64} {
  func.func @_conv_bn_lrelu_head_kernel(%arg0: i32, %arg1: memref<24x2048xbf16, #tpu.memory_space<vmem>>, %arg2: memref<2048x256xbf16, #tpu.memory_space<vmem>>, %arg3: memref<1x256xf32, #tpu.memory_space<vmem>>, %arg4: memref<1x256xf32, #tpu.memory_space<vmem>>, %arg5: memref<24x256xf32, #tpu.memory_space<vmem>>, %arg6: memref<2x24xf32, #tpu.memory_space<vmem>>, %arg7: memref<2x1xf32, #tpu.memory_space<vmem>>) attributes {dimension_semantics = [#tpu.dimension_semantics<arbitrary>], iteration_bounds = array<i64: 1>, scalar_prefetch = 0 : i64, scratch_operands = 0 : i64, tpu.core_type = #tpu.core_type<tc>, window_params = [{pipeline_mode = #tpu.pipeline_mode<synchronous>, transform_indices = @transform_0, window_bounds = array<i64: 24, 2048>}, {pipeline_mode = #tpu.pipeline_mode<synchronous>, transform_indices = @transform_1, window_bounds = array<i64: 2048, 256>}, {pipeline_mode = #tpu.pipeline_mode<synchronous>, transform_indices = @transform_2, window_bounds = array<i64: 1, 256>}, {pipeline_mode = #tpu.pipeline_mode<synchronous>, transform_indices = @transform_3, window_bounds = array<i64: 1, 256>}, {pipeline_mode = #tpu.pipeline_mode<synchronous>, transform_indices = @transform_4, window_bounds = array<i64: 24, 256>}, {pipeline_mode = #tpu.pipeline_mode<synchronous>, transform_indices = @transform_5, window_bounds = array<i64: 2, 24>}, {pipeline_mode = #tpu.pipeline_mode<synchronous>, transform_indices = @transform_6, window_bounds = array<i64: 2, 1>}]} {
    %c0 = arith.constant 0 : index
    %c0_0 = arith.constant 0 : index
    %0 = vector.load %arg1[%c0, %c0_0] : memref<24x2048xbf16, #tpu.memory_space<vmem>>, vector<24x2048xbf16>
    %c0_1 = arith.constant 0 : index
    %c0_2 = arith.constant 0 : index
    %1 = vector.load %arg2[%c0_1, %c0_2] : memref<2048x256xbf16, #tpu.memory_space<vmem>>, vector<2048x256xbf16>
    %cst = arith.constant dense<0.000000e+00> : vector<24x256xf32>
    %2 = tpu.matmul %0, %1, %cst {dimension_numbers = #tpu.dot_dimension_numbers<[1], [0], [0], [1], [0, 0, 1, 1], [], []>} : vector<24x2048xbf16>, vector<2048x256xbf16>, vector<24x256xf32> -> vector<24x256xf32>
    %cst_3 = arith.constant dense<0.000000e+00> : vector<256xf32>
    %3 = vector.multi_reduction <add>, %2, %cst_3 [0] : vector<24x256xf32> to vector<256xf32>
    %4 = vector.shape_cast %3 : vector<256xf32> to vector<1x256xf32>
    %cst_4 = arith.constant 0.055555556 : f32
    %5 = vector.broadcast %cst_4 : f32 to vector<1x256xf32>
    %6 = arith.mulf %4, %5 : vector<1x256xf32>
    %7 = arith.mulf %2, %2 : vector<24x256xf32>
    %cst_5 = arith.constant dense<0.000000e+00> : vector<256xf32>
    %8 = vector.multi_reduction <add>, %7, %cst_5 [0] : vector<24x256xf32> to vector<256xf32>
    %9 = vector.shape_cast %8 : vector<256xf32> to vector<1x256xf32>
    %cst_6 = arith.constant 0.055555556 : f32
    %10 = vector.broadcast %cst_6 : f32 to vector<1x256xf32>
    %11 = arith.mulf %9, %10 : vector<1x256xf32>
    %12 = arith.mulf %6, %6 : vector<1x256xf32>
    %13 = arith.subf %11, %12 : vector<1x256xf32>
    %cst_7 = arith.constant 0.000000e+00 : f32
    %14 = vector.broadcast %cst_7 : f32 to vector<1x256xf32>
    %15 = arith.maximumf %13, %14 : vector<1x256xf32>
    %16 = vector.broadcast %6 : vector<1x256xf32> to vector<24x256xf32>
    %17 = arith.subf %2, %16 : vector<24x256xf32>
    %cst_8 = arith.constant 9.99999974E-6 : f32
    %18 = vector.broadcast %cst_8 : f32 to vector<1x256xf32>
    %19 = arith.addf %15, %18 : vector<1x256xf32>
    %20 = math.rsqrt %19 : vector<1x256xf32>
    %21 = vector.broadcast %20 : vector<1x256xf32> to vector<24x256xf32>
    %22 = arith.mulf %17, %21 : vector<24x256xf32>
    %c0_9 = arith.constant 0 : index
    %c0_10 = arith.constant 0 : index
    %23 = vector.load %arg3[%c0_9, %c0_10] : memref<1x256xf32, #tpu.memory_space<vmem>>, vector<1x256xf32>
    %24 = vector.broadcast %23 : vector<1x256xf32> to vector<24x256xf32>
    %25 = arith.mulf %22, %24 : vector<24x256xf32>
    %c0_11 = arith.constant 0 : index
    %c0_12 = arith.constant 0 : index
    %26 = vector.load %arg4[%c0_11, %c0_12] : memref<1x256xf32, #tpu.memory_space<vmem>>, vector<1x256xf32>
    %27 = vector.broadcast %26 : vector<1x256xf32> to vector<24x256xf32>
    %28 = arith.addf %25, %27 : vector<24x256xf32>
    %cst_13 = arith.constant 0.000000e+00 : f32
    %29 = vector.broadcast %cst_13 : f32 to vector<24x256xf32>
    %30 = arith.cmpf ogt, %28, %29 : vector<24x256xf32>
    %cst_14 = arith.constant 2.000000e-01 : f32
    %31 = vector.broadcast %cst_14 : f32 to vector<24x256xf32>
    %32 = arith.mulf %31, %28 : vector<24x256xf32>
    %33 = arith.select %30, %28, %32 : vector<24x256xi1>, vector<24x256xf32>
    %c0_15 = arith.constant 0 : index
    %c0_16 = arith.constant 0 : index
    %34 = vector.load %arg5[%c0_15, %c0_16] : memref<24x256xf32, #tpu.memory_space<vmem>>, vector<24x256xf32>
    %35 = arith.mulf %33, %34 : vector<24x256xf32>
    %c0_17 = arith.constant 0 : index
    %c0_18 = arith.constant 0 : index
    %36 = vector.load %arg6[%c0_17, %c0_18] : memref<2x24xf32, #tpu.memory_space<vmem>>, vector<2x24xf32>
    %cst_19 = arith.constant dense<0.000000e+00> : vector<2x256xf32>
    %37 = tpu.matmul %36, %35, %cst_19 {dimension_numbers = #tpu.dot_dimension_numbers<[1], [0], [0], [1], [0, 0, 1, 1], [], []>} : vector<2x24xf32>, vector<24x256xf32>, vector<2x256xf32> -> vector<2x256xf32>
    %cst_20 = arith.constant dense<0.000000e+00> : vector<2xf32>
    %38 = vector.multi_reduction <add>, %37, %cst_20 [1] : vector<2x256xf32> to vector<2xf32>
    %39 = vector.shape_cast %38 : vector<2xf32> to vector<2x1xf32>
    %40 = math.absf %39 : vector<2x1xf32>
    %cst_21 = arith.constant 0.000000e+00 : f32
    %41 = vector.broadcast %cst_21 : f32 to vector<2x1xf32>
    %42 = arith.subf %41, %40 : vector<2x1xf32>
    %43 = math.exp %42 : vector<2x1xf32>
    %cst_22 = arith.constant 0.000000e+00 : f32
    %44 = vector.broadcast %cst_22 : f32 to vector<2x1xf32>
    %45 = arith.cmpf oge, %39, %44 : vector<2x1xf32>
    %cst_23 = arith.constant 1.000000e+00 : f32
    %46 = vector.broadcast %cst_23 : f32 to vector<2x1xf32>
    %47 = arith.addf %46, %43 : vector<2x1xf32>
    %cst_24 = arith.constant 1.000000e+00 : f32
    %48 = vector.broadcast %cst_24 : f32 to vector<2x1xf32>
    %49 = arith.divf %48, %47 : vector<2x1xf32>
    %cst_25 = arith.constant 1.000000e+00 : f32
    %50 = vector.broadcast %cst_25 : f32 to vector<2x1xf32>
    %51 = arith.addf %50, %43 : vector<2x1xf32>
    %52 = arith.divf %43, %51 : vector<2x1xf32>
    %53 = arith.select %45, %49, %52 : vector<2x1xi1>, vector<2x1xf32>
    %c0_26 = arith.constant 0 : index
    %c0_27 = arith.constant 0 : index
    %54 = vector.load %arg7[%c0_26, %c0_27] : memref<2x1xf32, #tpu.memory_space<vmem>>, vector<2x1xf32>
    tpu.vector_store %arg7[%c0_26, %c0_27], %53 {strides = array<i32>} : memref<2x1xf32, #tpu.memory_space<vmem>>, vector<2x1xf32>,
    return
  }
  func.func @transform_0(%arg0: i32) -> (i32, i32) {
    %c0_i32 = arith.constant 0 : i32
    %c0_i32_0 = arith.constant 0 : i32
    %c0_i32_1 = arith.constant 0 : i32
    return %c0_i32, %c0_i32_0 : i32, i32
  }
  func.func @transform_1(%arg0: i32) -> (i32, i32) {
    %c0_i32 = arith.constant 0 : i32
    %c0_i32_0 = arith.constant 0 : i32
    %c0_i32_1 = arith.constant 0 : i32
    return %c0_i32, %c0_i32_0 : i32, i32
  }
  func.func @transform_2(%arg0: i32) -> (i32, i32) {
    %c0_i32 = arith.constant 0 : i32
    %c0_i32_0 = arith.constant 0 : i32
    %c0_i32_1 = arith.constant 0 : i32
    return %c0_i32, %c0_i32_0 : i32, i32
  }
  func.func @transform_3(%arg0: i32) -> (i32, i32) {
    %c0_i32 = arith.constant 0 : i32
    %c0_i32_0 = arith.constant 0 : i32
    %c0_i32_1 = arith.constant 0 : i32
    return %c0_i32, %c0_i32_0 : i32, i32
  }
  func.func @transform_4(%arg0: i32) -> (i32, i32) {
    %c0_i32 = arith.constant 0 : i32
    %c0_i32_0 = arith.constant 0 : i32
    %c0_i32_1 = arith.constant 0 : i32
    return %c0_i32, %c0_i32_0 : i32, i32
  }
  func.func @transform_5(%arg0: i32) -> (i32, i32) {
    %c0_i32 = arith.constant 0 : i32
    %c0_i32_0 = arith.constant 0 : i32
    %c0_i32_1 = arith.constant 0 : i32
    return %c0_i32, %c0_i32_0 : i32, i32
  }
  func.func @transform_6(%arg0: i32) -> (i32, i32) {
    %c0_i32 = arith.constant 0 : i32
    %c0_i32_0 = arith.constant 0 : i32
    %c0_i32_1 = arith.constant 0 : i32
    return %c0_i32, %c0_i32_0 : i32, i32
  }
}

</mosaic_0001>

<llo_original>
// kernel: discriminator_forward.3
$region0: #{discriminator_forward.3}
  #allocation0 [shape = 'u32[]', space=smem, size = 0x4, offset = 0x4, fixed_abs, tag = 'smem constant byte address 0x4 - core index']
  #allocation1 [shape = 'u32[72,128]{1,0:T(1,128)}', space=vmem, size = 0x9000, scoped, tag = 'internal scratch']
  %s0 = inlined_call_operand.vmem [shape: bf16[288,256], index: 0, kind: input, shape index: {}]
  %s1 = inlined_call_operand.vmem [shape: bf16[256,128], index: 1, kind: input, shape index: {}]
  %s2 = inlined_call_operand.vmem [shape: bf16[288,128], index: 2, kind: output, shape index: {}]
  %s3 = sld [smem:[#allocation0]]
  $region18: #{discriminator_forward.3} parent=0
    _
  %s5 = ssub.s32 1, %s3
  %s6 = scalar_select 0, %s5, %s3
  // Predicated region
  $region2: #{discriminator_forward.3} parent=0 // pred_check
    _
  $region3: #{discriminator_forward.3} parent=0 // pred_check_branch
    %8 = sbr.rel (0) target = $region5
  $region4: #{discriminator_forward.3} parent=0 // pred_region
    _
  $region5: #{discriminator_forward.3} parent=0 // pred_fallthru
    _
  // Predicated region
  $region6: #{discriminator_forward.3} parent=0 // pred_check
    _
  $region7: #{discriminator_forward.3} parent=0 // pred_check_branch
    %10 = sbr.rel (0) target = $region9
  $region8: #{discriminator_forward.3} parent=0 // pred_region
    _
  $region9: #{discriminator_forward.3} parent=0 // pred_fallthru
    _
  %v11 = vld [vmem:[%s0] sm:$0xff]
  %v12 = vld [vmem:[%s0 + $0x8] sm:$0xff]
  %v13 = vld [vmem:[%s0 + $0x10] sm:$0xff]
  %v14 = vld [vmem:[%s0 + $0x18] sm:$0xff]
  %v15 = vld [vmem:[%s0 + $0x20] sm:$0xff]
  %v16 = vld [vmem:[%s0 + $0x28] sm:$0xff]
  %v17 = vld [vmem:[%s0 + $0x30] sm:$0xff]
  %v18 = vld [vmem:[%s0 + $0x38] sm:$0xff]
  %v19 = vld [vmem:[%s0 + $0x40] sm:$0xff]
  %v20 = vld [vmem:[%s0 + $0x48] sm:$0xff]
  %v21 = vld [vmem:[%s0 + $0x50] sm:$0xff]
  %v22 = vld [vmem:[%s0 + $0x58] sm:$0xff]
  %v23 = vld [vmem:[%s0 + $0x60] sm:$0xff]
  %v24 = vld [vmem:[%s0 + $0x68] sm:$0xff]
  %v25 = vld [vmem:[%s0 + $0x70] sm:$0xff]
  %v26 = vld [vmem:[%s0 + $0x78] sm:$0xff]
  %v27 = vld [vmem:[%s0 + $0x80] sm:$0xff]
  %v28 = vld [vmem:[%s0 + $0x88] sm:$0xff]
  %v29 = vld [vmem:[%s0 + $0x90] sm:$0xff]
  %v30 = vld [vmem:[%s0 + $0x98] sm:$0xff]
  %v31 = vld [vmem:[%s0 + $0xa0] sm:$0xff]
  %v32 = vld [vmem:[%s0 + $0xa8] sm:$0xff]
  %v33 = vld [vmem:[%s0 + $0xb0] sm:$0xff]
  %v34 = vld [vmem:[%s0 + $0xb8] sm:$0xff]
  %v35 = vld [vmem:[%s0 + $0xc0] sm:$0xff]
  %v36 = vld [vmem:[%s0 + $0xc8] sm:$0xff]
  %v37 = vld [vmem:[%s0 + $0xd0] sm:$0xff]
  %v38 = vld [vmem:[%s0 + $0xd8] sm:$0xff]
  %v39 = vld [vmem:[%s0 + $0xe0] sm:$0xff]
  %v40 = vld [vmem:[%s0 + $0xe8] sm:$0xff]
  %v41 = vld [vmem:[%s0 + $0xf0] sm:$0xff]
  %v42 = vld [vmem:[%s0 + $0xf8] sm:$0xff]
  %v43 = vld [vmem:[%s0 + $0x100] sm:$0xff]
  %v44 = vld [vmem:[%s0 + $0x108] sm:$0xff]
  %v45 = vld [vmem:[%s0 + $0x110] sm:$0xff]
  %v46 = vld [vmem:[%s0 + $0x118] sm:$0xff]
  %v47 = vld [vmem:[%s1] sm:$0xf]
  %v48 = vld [vmem:[%s1 + $0x4] sm:$0xf]
  %v49 = vld [vmem:[%s1 + $0x8] sm:$0xf]
  %v50 = vld [vmem:[%s1 + $0xc] sm:$0xf]
  %v51 = vld [vmem:[%s1 + $0x10] sm:$0xf]
  %v52 = vld [vmem:[%s1 + $0x14] sm:$0xf]
  %v53 = vld [vmem:[%s1 + $0x18] sm:$0xf]
  %v54 = vld [vmem:[%s1 + $0x1c] sm:$0xf]
  %v55 = vld [vmem:[%s1 + $0x20] sm:$0xf]
  %v56 = vld [vmem:[%s1 + $0x24] sm:$0xf]
  %v57 = vld [vmem:[%s1 + $0x28] sm:$0xf]
  %v58 = vld [vmem:[%s1 + $0x2c] sm:$0xf]
  %v59 = vld [vmem:[%s1 + $0x30] sm:$0xf]
  %v60 = vld [vmem:[%s1 + $0x34] sm:$0xf]
  %v61 = vld [vmem:[%s1 + $0x38] sm:$0xf]
  %v62 = vld [vmem:[%s1 + $0x3c] sm:$0xf]
  %v63 = vld [vmem:[%s1 + $0x40] sm:$0xf]
  %v64 = vld [vmem:[%s1 + $0x44] sm:$0xf]
  %v65 = vld [vmem:[%s1 + $0x48] sm:$0xf]
  %v66 = vld [vmem:[%s1 + $0x4c] sm:$0xf]
  %v67 = vld [vmem:[%s1 + $0x50] sm:$0xf]
  %v68 = vld [vmem:[%s1 + $0x54] sm:$0xf]
  %v69 = vld [vmem:[%s1 + $0x58] sm:$0xf]
  %v70 = vld [vmem:[%s1 + $0x5c] sm:$0xf]
  %v71 = vld [vmem:[%s1 + $0x60] sm:$0xf]
  %v72 = vld [vmem:[%s1 + $0x64] sm:$0xf]
  %v73 = vld [vmem:[%s1 + $0x68] sm:$0xf]
  %v74 = vld [vmem:[%s1 + $0x6c] sm:$0xf]
  %v75 = vld [vmem:[%s1 + $0x70] sm:$0xf]
  %v76 = vld [vmem:[%s1 + $0x74] sm:$0xf]
  %v77 = vld [vmem:[%s1 + $0x78] sm:$0xf]
  %v78 = vld [vmem:[%s1 + $0x7c] sm:$0xf]
  %v115 = vunpack.c.l.b16 %v11
  %v116 = vunpack.c.h.b16 %v11
  %v117 = vunpack.c.l.b16 %v12
  %v118 = vunpack.c.h.b16 %v12
  %v119 = vunpack.c.l.b16 %v13
  %v120 = vunpack.c.h.b16 %v13
  %v121 = vunpack.c.l.b16 %v14
  %v122 = vunpack.c.h.b16 %v14
  %v123 = vunpack.c.l.b16 %v15
  %v124 = vunpack.c.h.b16 %v15
  %v125 = vunpack.c.l.b16 %v16
  %v126 = vunpack.c.h.b16 %v16
  %v127 = vunpack.c.l.b16 %v17
  %v128 = vunpack.c.h.b16 %v17
  %v129 = vunpack.c.l.b16 %v18
  %v130 = vunpack.c.h.b16 %v18
  %v131 = vunpack.c.l.b16 %v19
  %v132 = vunpack.c.h.b16 %v19
  %v133 = vunpack.c.l.b16 %v20
  %v134 = vunpack.c.h.b16 %v20
  %v135 = vunpack.c.l.b16 %v21
  %v136 = vunpack.c.h.b16 %v21
  %v137 = vunpack.c.l.b16 %v22
  %v138 = vunpack.c.h.b16 %v22
  %v139 = vunpack.c.l.b16 %v23
  %v140 = vunpack.c.h.b16 %v23
  %v141 = vunpack.c.l.b16 %v24
  %v142 = vunpack.c.h.b16 %v24
  %v143 = vunpack.c.l.b16 %v25
  %v144 = vunpack.c.h.b16 %v25
  %v145 = vunpack.c.l.b16 %v26
  %v146 = vunpack.c.h.b16 %v26
  %v147 = vunpack.c.l.b16 %v27
  %v148 = vunpack.c.h.b16 %v27
  %v149 = vunpack.c.l.b16 %v28
  %v150 = vunpack.c.h.b16 %v28
  %v151 = vunpack.c.l.b16 %v29
  %v152 = vunpack.c.h.b16 %v29
  %v153 = vunpack.c.l.b16 %v30
  %v154 = vunpack.c.h.b16 %v30
  %v155 = vunpack.c.l.b16 %v31
  %v156 = vunpack.c.h.b16 %v31
  %v157 = vunpack.c.l.b16 %v32
  %v158 = vunpack.c.h.b16 %v32
  %v159 = vunpack.c.l.b16 %v33
  %v160 = vunpack.c.h.b16 %v33
  %v161 = vunpack.c.l.b16 %v34
  %v162 = vunpack.c.h.b16 %v34
  %v163 = vunpack.c.l.b16 %v35
  %v164 = vunpack.c.h.b16 %v35
  %v165 = vunpack.c.l.b16 %v36
  %v166 = vunpack.c.h.b16 %v36
  %v167 = vunpack.c.l.b16 %v37
  %v168 = vunpack.c.h.b16 %v37
  %v169 = vunpack.c.l.b16 %v38
  %v170 = vunpack.c.h.b16 %v38
  %v171 = vunpack.c.l.b16 %v39
  %v172 = vunpack.c.h.b16 %v39
  %v173 = vunpack.c.l.b16 %v40
  %v174 = vunpack.c.h.b16 %v40
  %v175 = vunpack.c.l.b16 %v41
  %v176 = vunpack.c.h.b16 %v41
  %v177 = vunpack.c.l.b16 %v42
  %v178 = vunpack.c.h.b16 %v42
  %v179 = vunpack.c.l.b16 %v43
  %v180 = vunpack.c.h.b16 %v43
  %v181 = vunpack.c.l.b16 %v44
  %v182 = vunpack.c.h.b16 %v44
  %v183 = vunpack.c.l.b16 %v45
  %v184 = vunpack.c.h.b16 %v45
  %v185 = vunpack.c.l.b16 %v46
  %v186 = vunpack.c.h.b16 %v46
  %v187 = vpack.c.b16 %v117, %v115
  %v188 = vpack.c.b16 %v118, %v116
  %v189 = vpack.c.b16 %v121, %v119
  %v190 = vpack.c.b16 %v122, %v120
  %v191 = vpack.c.b16 %v125, %v123
  %v192 = vpack.c.b16 %v126, %v124
  %v193 = vpack.c.b16 %v129, %v127
  %v194 = vpack.c.b16 %v130, %v128
  %v195 = vpack.c.b16 %v133, %v131
  %v196 = vpack.c.b16 %v134, %v132
  %v197 = vpack.c.b16 %v137, %v135
  %v198 = vpack.c.b16 %v138, %v136
  %v199 = vpack.c.b16 %v141, %v139
  %v200 = vpack.c.b16 %v142, %v140
  %v201 = vpack.c.b16 %v145, %v143
  %v202 = vpack.c.b16 %v146, %v144
  %v203 = vpack.c.b16 %v149, %v147
  %v204 = vpack.c.b16 %v150, %v148
  %v205 = vpack.c.b16 %v153, %v151
  %v206 = vpack.c.b16 %v154, %v152
  %v207 = vpack.c.b16 %v157, %v155
  %v208 = vpack.c.b16 %v158, %v156
  %v209 = vpack.c.b16 %v161, %v159
  %v210 = vpack.c.b16 %v162, %v160
  %v211 = vpack.c.b16 %v165, %v163
  %v212 = vpack.c.b16 %v166, %v164
  %v213 = vpack.c.b16 %v169, %v167
  %v214 = vpack.c.b16 %v170, %v168
  %v215 = vpack.c.b16 %v173, %v171
  %v216 = vpack.c.b16 %v174, %v172
  %v217 = vpack.c.b16 %v177, %v175
  %v218 = vpack.c.b16 %v178, %v176
  %v219 = vpack.c.b16 %v181, %v179
  %v220 = vpack.c.b16 %v182, %v180
  %v221 = vpack.c.b16 %v185, %v183
  %v222 = vpack.c.b16 %v186, %v184
  %v291 = vunpack.c.l.b16 %v47
  %v292 = vunpack.c.l.b16 %v48
  %v293 = vunpack.c.l.b16 %v49
  %v294 = vunpack.c.l.b16 %v50
  %v295 = vunpack.c.l.b16 %v51
  %v296 = vunpack.c.l.b16 %v52
  %v297 = vunpack.c.l.b16 %v53
  %v298 = vunpack.c.l.b16 %v54
  %v299 = vunpack.c.l.b16 %v55
  %v300 = vunpack.c.l.b16 %v56
  %v301 = vunpack.c.l.b16 %v57
  %v302 = vunpack.c.l.b16 %v58
  %v303 = vunpack.c.l.b16 %v59
  %v304 = vunpack.c.l.b16 %v60
  %v305 = vunpack.c.l.b16 %v61
  %v306 = vunpack.c.l.b16 %v62
  %v307 = vunpack.c.l.b16 %v63
  %v308 = vunpack.c.l.b16 %v64
  %v309 = vunpack.c.l.b16 %v65
  %v310 = vunpack.c.l.b16 %v66
  %v311 = vunpack.c.l.b16 %v67
  %v312 = vunpack.c.l.b16 %v68
  %v313 = vunpack.c.l.b16 %v69
  %v314 = vunpack.c.l.b16 %v70
  %v315 = vunpack.c.l.b16 %v71
  %v316 = vunpack.c.l.b16 %v72
  %v317 = vunpack.c.l.b16 %v73
  %v318 = vunpack.c.l.b16 %v74
  %v319 = vunpack.c.l.b16 %v75
  %v320 = vunpack.c.l.b16 %v76
  %v321 = vunpack.c.l.b16 %v77
  %v322 = vunpack.c.l.b16 %v78
  %v323 = vpack.c.b16 %v292, %v291
  %v324 = vpack.c.b16 %v294, %v293
  %v325 = vpack.c.b16 %v296, %v295
  %v326 = vpack.c.b16 %v298, %v297
  %v327 = vpack.c.b16 %v300, %v299
  %v328 = vpack.c.b16 %v302, %v301
  %v329 = vpack.c.b16 %v304, %v303
  %v330 = vpack.c.b16 %v306, %v305
  %v331 = vpack.c.b16 %v308, %v307
  %v332 = vpack.c.b16 %v310, %v309
  %v333 = vpack.c.b16 %v312, %v311
  %v334 = vpack.c.b16 %v314, %v313
  %v335 = vpack.c.b16 %v316, %v315
  %v336 = vpack.c.b16 %v318, %v317
  %v337 = vpack.c.b16 %v320, %v319
  %v338 = vpack.c.b16 %v322, %v321
  %355 = vmatpush.bf16.msra.mxu0 %v330
  %356 = vmatpush.bf16.msra.mxu0 %v329
  %357 = vmatpush.bf16.msra.mxu0 %v328
  %358 = vmatpush.bf16.msra.mxu0 %v327
  %359 = vmatpush.bf16.msra.mxu0 %v326
  %360 = vmatpush.bf16.msra.mxu0 %v325
  %361 = vmatpush.bf16.msra.mxu0 %v324
  %362 = vmatpush.bf16.msra.mxu0 %v323
  %363 = vmatmul.bf16.gmra.mxu0 %v187
  %v364 = vpop.f32.mrf.mxu0
  %v365 = vadd.f32 0.0, %v364
  %v366 = vpop.f32.mrf.mxu0
  %v367 = vadd.f32 0.0, %v366
  %368 = vmatmul.bf16.gmra.mxu0 %v189
  %v369 = vpop.f32.mrf.mxu0
  %v370 = vadd.f32 0.0, %v369
  %v371 = vpop.f32.mrf.mxu0
  %v372 = vadd.f32 0.0, %v371
  %373 = vmatmul.bf16.gmra.mxu0 %v191
  %v374 = vpop.f32.mrf.mxu0
  %v375 = vadd.f32 0.0, %v374
  %v376 = vpop.f32.mrf.mxu0
  %v377 = vadd.f32 0.0, %v376
  %378 = vmatmul.bf16.gmra.mxu0 %v193
  %v379 = vpop.f32.mrf.mxu0
  %v380 = vadd.f32 0.0, %v379
  %v381 = vpop.f32.mrf.mxu0
  %v382 = vadd.f32 0.0, %v381
  %383 = vmatmul.bf16.gmra.mxu0 %v195
  %v384 = vpop.f32.mrf.mxu0
  %v385 = vadd.f32 0.0, %v384
  %v386 = vpop.f32.mrf.mxu0
  %v387 = vadd.f32 0.0, %v386
  %388 = vmatmul.bf16.gmra.mxu0 %v197
  %v389 = vpop.f32.mrf.mxu0
  %v390 = vadd.f32 0.0, %v389
  %v391 = vpop.f32.mrf.mxu0
  %v392 = vadd.f32 0.0, %v391
  %393 = vmatmul.bf16.gmra.mxu0 %v199
  %v394 = vpop.f32.mrf.mxu0
  %v395 = vadd.f32 0.0, %v394
  %v396 = vpop.f32.mrf.mxu0
  %v397 = vadd.f32 0.0, %v396
  %398 = vmatmul.bf16.gmra.mxu0 %v201
  %v399 = vpop.f32.mrf.mxu0
  %v400 = vadd.f32 0.0, %v399
  %v401 = vpop.f32.mrf.mxu0
  %v402 = vadd.f32 0.0, %v401
  %403 = vmatmul.bf16.gmra.mxu0 %v203
  %v404 = vpop.f32.mrf.mxu0
  %v405 = vadd.f32 0.0, %v404
  %v406 = vpop.f32.mrf.mxu0
  %v407 = vadd.f32 0.0, %v406
  %408 = vmatmul.bf16.gmra.mxu0 %v205
  %v409 = vpop.f32.mrf.mxu0
  %v410 = vadd.f32 0.0, %v409
  %v411 = vpop.f32.mrf.mxu0
  %v412 = vadd.f32 0.0, %v411
  %413 = vmatmul.bf16.gmra.mxu0 %v207
  %v414 = vpop.f32.mrf.mxu0
  %v415 = vadd.f32 0.0, %v414
  %v416 = vpop.f32.mrf.mxu0
  %v417 = vadd.f32 0.0, %v416
  %418 = vmatmul.bf16.gmra.mxu0 %v209
  %v419 = vpop.f32.mrf.mxu0
  %v420 = vadd.f32 0.0, %v419
  %v421 = vpop.f32.mrf.mxu0
  %v422 = vadd.f32 0.0, %v421
  %423 = vmatmul.bf16.gmra.mxu0 %v211
  %v424 = vpop.f32.mrf.mxu0
  %v425 = vadd.f32 0.0, %v424
  %v426 = vpop.f32.mrf.mxu0
  %v427 = vadd.f32 0.0, %v426
  %428 = vmatmul.bf16.gmra.mxu0 %v213
  %v429 = vpop.f32.mrf.mxu0
  %v430 = vadd.f32 0.0, %v429
  %v431 = vpop.f32.mrf.mxu0
  %v432 = vadd.f32 0.0, %v431
  %433 = vmatmul.bf16.gmra.mxu0 %v215
  %v434 = vpop.f32.mrf.mxu0
  %v435 = vadd.f32 0.0, %v434
  %v436 = vpop.f32.mrf.mxu0
  %v437 = vadd.f32 0.0, %v436
  %438 = vmatmul.bf16.gmra.mxu0 %v217
  %v439 = vpop.f32.mrf.mxu0
  %v440 = vadd.f32 0.0, %v439
  %v441 = vpop.f32.mrf.mxu0
  %v442 = vadd.f32 0.0, %v441
  %443 = vmatmul.bf16.gmra.mxu0 %v219
  %v444 = vpop.f32.mrf.mxu0
  %v445 = vadd.f32 0.0, %v444
  %v446 = vpop.f32.mrf.mxu0
  %v447 = vadd.f32 0.0, %v446
  %448 = vmatmul.bf16.gmra.mxu0 %v221
  %v449 = vpop.f32.mrf.mxu0
  %v450 = vadd.f32 0.0, %v449
  %v451 = vpop.f32.mrf.mxu0
  %v452 = vadd.f32 0.0, %v451
  %453 = vdwg.mxu0
  %454 = vmatpush.bf16.msra.mxu0 %v338
  %455 = vmatpush.bf16.msra.mxu0 %v337
  %456 = vmatpush.bf16.msra.mxu0 %v336
  %457 = vmatpush.bf16.msra.mxu0 %v335
  %458 = vmatpush.bf16.msra.mxu0 %v334
  %459 = vmatpush.bf16.msra.mxu0 %v333
  %460 = vmatpush.bf16.msra.mxu0 %v332
  %461 = vmatpush.bf16.msra.mxu0 %v331
  %462 = vmatmul.bf16.gmra.mxu0 %v188
  %v463 = vpop.f32.mrf.mxu0
  %v464 = vadd.f32 %v365, %v463
  %v465 = vpop.f32.mrf.mxu0
  %v466 = vadd.f32 %v367, %v465
  %467 = vmatmul.bf16.gmra.mxu0 %v190
  %v468 = vpop.f32.mrf.mxu0
  %v469 = vadd.f32 %v370, %v468
  %v470 = vpop.f32.mrf.mxu0
  %v471 = vadd.f32 %v372, %v470
  %472 = vmatmul.bf16.gmra.mxu0 %v192
  %v473 = vpop.f32.mrf.mxu0
  %v474 = vadd.f32 %v375, %v473
  %v475 = vpop.f32.mrf.mxu0
  %v476 = vadd.f32 %v377, %v475
  %477 = vmatmul.bf16.gmra.mxu0 %v194
  %v478 = vpop.f32.mrf.mxu0
  %v479 = vadd.f32 %v380, %v478
  %v480 = vpop.f32.mrf.mxu0
  %v481 = vadd.f32 %v382, %v480
  %482 = vmatmul.bf16.gmra.mxu0 %v196
  %v483 = vpop.f32.mrf.mxu0
  %v484 = vadd.f32 %v385, %v483
  %v485 = vpop.f32.mrf.mxu0
  %v486 = vadd.f32 %v387, %v485
  %487 = vmatmul.bf16.gmra.mxu0 %v198
  %v488 = vpop.f32.mrf.mxu0
  %v489 = vadd.f32 %v390, %v488
  %v490 = vpop.f32.mrf.mxu0
  %v491 = vadd.f32 %v392, %v490
  %492 = vmatmul.bf16.gmra.mxu0 %v200
  %v493 = vpop.f32.mrf.mxu0
  %v494 = vadd.f32 %v395, %v493
  %v495 = vpop.f32.mrf.mxu0
  %v496 = vadd.f32 %v397, %v495
  %497 = vmatmul.bf16.gmra.mxu0 %v202
  %v498 = vpop.f32.mrf.mxu0
  %v499 = vadd.f32 %v400, %v498
  %v500 = vpop.f32.mrf.mxu0
  %v501 = vadd.f32 %v402, %v500
  %502 = vmatmul.bf16.gmra.mxu0 %v204
  %v503 = vpop.f32.mrf.mxu0
  %v504 = vadd.f32 %v405, %v503
  %v505 = vpop.f32.mrf.mxu0
  %v506 = vadd.f32 %v407, %v505
  %507 = vmatmul.bf16.gmra.mxu0 %v206
  %v508 = vpop.f32.mrf.mxu0
  %v509 = vadd.f32 %v410, %v508
  %v510 = vpop.f32.mrf.mxu0
  %v511 = vadd.f32 %v412, %v510
  %512 = vmatmul.bf16.gmra.mxu0 %v208
  %v513 = vpop.f32.mrf.mxu0
  %v514 = vadd.f32 %v415, %v513
  %v515 = vpop.f32.mrf.mxu0
  %v516 = vadd.f32 %v417, %v515
  %517 = vmatmul.bf16.gmra.mxu0 %v210
  %v518 = vpop.f32.mrf.mxu0
  %v519 = vadd.f32 %v420, %v518
  %v520 = vpop.f32.mrf.mxu0
  %v521 = vadd.f32 %v422, %v520
  %522 = vmatmul.bf16.gmra.mxu0 %v212
  %v523 = vpop.f32.mrf.mxu0
  %v524 = vadd.f32 %v425, %v523
  %v525 = vpop.f32.mrf.mxu0
  %v526 = vadd.f32 %v427, %v525
  %527 = vmatmul.bf16.gmra.mxu0 %v214
  %v528 = vpop.f32.mrf.mxu0
  %v529 = vadd.f32 %v430, %v528
  %v530 = vpop.f32.mrf.mxu0
  %v531 = vadd.f32 %v432, %v530
  %532 = vmatmul.bf16.gmra.mxu0 %v216
  %v533 = vpop.f32.mrf.mxu0
  %v534 = vadd.f32 %v435, %v533
  %v535 = vpop.f32.mrf.mxu0
  %v536 = vadd.f32 %v437, %v535
  %537 = vmatmul.bf16.gmra.mxu0 %v218
  %v538 = vpop.f32.mrf.mxu0
  %v539 = vadd.f32 %v440, %v538
  %v540 = vpop.f32.mrf.mxu0
  %v541 = vadd.f32 %v442, %v540
  %542 = vmatmul.bf16.gmra.mxu0 %v220
  %v543 = vpop.f32.mrf.mxu0
  %v544 = vadd.f32 %v445, %v543
  %v545 = vpop.f32.mrf.mxu0
  %v546 = vadd.f32 %v447, %v545
  %547 = vmatmul.bf16.gmra.mxu0 %v222
  %v548 = vpop.f32.mrf.mxu0
  %v549 = vadd.f32 %v450, %v548
  %v550 = vpop.f32.mrf.mxu0
  %v551 = vadd.f32 %v452, %v550
  %552 = vdwg.mxu0
  %vm553 = vcmp.gt.f32.partialorder %v464, 0.0
  %vm554 = vcmp.gt.f32.partialorder %v466, 0.0
  %vm555 = vcmp.gt.f32.partialorder %v469, 0.0
  %vm556 = vcmp.gt.f32.partialorder %v471, 0.0
  %vm557 = vcmp.gt.f32.partialorder %v474, 0.0
  %vm558 = vcmp.gt.f32.partialorder %v476, 0.0
  %vm559 = vcmp.gt.f32.partialorder %v479, 0.0
  %vm560 = vcmp.gt.f32.partialorder %v481, 0.0
  %vm561 = vcmp.gt.f32.partialorder %v484, 0.0
  %vm562 = vcmp.gt.f32.partialorder %v486, 0.0
  %vm563 = vcmp.gt.f32.partialorder %v489, 0.0
  %vm564 = vcmp.gt.f32.partialorder %v491, 0.0
  %vm565 = vcmp.gt.f32.partialorder %v494, 0.0
  %vm566 = vcmp.gt.f32.partialorder %v496, 0.0
  %vm567 = vcmp.gt.f32.partialorder %v499, 0.0
  %vm568 = vcmp.gt.f32.partialorder %v501, 0.0
  %vm569 = vcmp.gt.f32.partialorder %v504, 0.0
  %vm570 = vcmp.gt.f32.partialorder %v506, 0.0
  %vm571 = vcmp.gt.f32.partialorder %v509, 0.0
  %vm572 = vcmp.gt.f32.partialorder %v511, 0.0
  %vm573 = vcmp.gt.f32.partialorder %v514, 0.0
  %vm574 = vcmp.gt.f32.partialorder %v516, 0.0
  %vm575 = vcmp.gt.f32.partialorder %v519, 0.0
  %vm576 = vcmp.gt.f32.partialorder %v521, 0.0
  %vm577 = vcmp.gt.f32.partialorder %v524, 0.0
  %vm578 = vcmp.gt.f32.partialorder %v526, 0.0
  %vm579 = vcmp.gt.f32.partialorder %v529, 0.0
  %vm580 = vcmp.gt.f32.partialorder %v531, 0.0
  %vm581 = vcmp.gt.f32.partialorder %v534, 0.0
  %vm582 = vcmp.gt.f32.partialorder %v536, 0.0
  %vm583 = vcmp.gt.f32.partialorder %v539, 0.0
  %vm584 = vcmp.gt.f32.partialorder %v541, 0.0
  %vm585 = vcmp.gt.f32.partialorder %v544, 0.0
  %vm586 = vcmp.gt.f32.partialorder %v546, 0.0
  %vm587 = vcmp.gt.f32.partialorder %v549, 0.0
  %vm588 = vcmp.gt.f32.partialorder %v551, 0.0
  %v589 = vmul.f32 %v464, 0.2
  %v590 = vmul.f32 %v466, 0.2
  %v591 = vmul.f32 %v469, 0.2
  %v592 = vmul.f32 %v471, 0.2
  %v593 = vmul.f32 %v474, 0.2
  %v594 = vmul.f32 %v476, 0.2
  %v595 = vmul.f32 %v479, 0.2
  %v596 = vmul.f32 %v481, 0.2
  %v597 = vmul.f32 %v484, 0.2
  %v598 = vmul.f32 %v486, 0.2
  %v599 = vmul.f32 %v489, 0.2
  %v600 = vmul.f32 %v491, 0.2
  %v601 = vmul.f32 %v494, 0.2
  %v602 = vmul.f32 %v496, 0.2
  %v603 = vmul.f32 %v499, 0.2
  %v604 = vmul.f32 %v501, 0.2
  %v605 = vmul.f32 %v504, 0.2
  %v606 = vmul.f32 %v506, 0.2
  %v607 = vmul.f32 %v509, 0.2
  %v608 = vmul.f32 %v511, 0.2
  %v609 = vmul.f32 %v514, 0.2
  %v610 = vmul.f32 %v516, 0.2
  %v611 = vmul.f32 %v519, 0.2
  %v612 = vmul.f32 %v521, 0.2
  %v613 = vmul.f32 %v524, 0.2
  %v614 = vmul.f32 %v526, 0.2
  %v615 = vmul.f32 %v529, 0.2
  %v616 = vmul.f32 %v531, 0.2
  %v617 = vmul.f32 %v534, 0.2
  %v618 = vmul.f32 %v536, 0.2
  %v619 = vmul.f32 %v539, 0.2
  %v620 = vmul.f32 %v541, 0.2
  %v621 = vmul.f32 %v544, 0.2
  %v622 = vmul.f32 %v546, 0.2
  %v623 = vmul.f32 %v549, 0.2
  %v624 = vmul.f32 %v551, 0.2
  %v625 = vsel %vm553, %v464, %v589
  %v626 = vsel %vm554, %v466, %v590
  %v627 = vsel %vm555, %v469, %v591
  %v628 = vsel %vm556, %v471, %v592
  %v629 = vsel %vm557, %v474, %v593
  %v630 = vsel %vm558, %v476, %v594
  %v631 = vsel %vm559, %v479, %v595
  %v632 = vsel %vm560, %v481, %v596
  %v633 = vsel %vm561, %v484, %v597
  %v634 = vsel %vm562, %v486, %v598
  %v635 = vsel %vm563, %v489, %v599
  %v636 = vsel %vm564, %v491, %v600
  %v637 = vsel %vm565, %v494, %v601
  %v638 = vsel %vm566, %v496, %v602
  %v639 = vsel %vm567, %v499, %v603
  %v640 = vsel %vm568, %v501, %v604
  %v641 = vsel %vm569, %v504, %v605
  %v642 = vsel %vm570, %v506, %v606
  %v643 = vsel %vm571, %v509, %v607
  %v644 = vsel %vm572, %v511, %v608
  %v645 = vsel %vm573, %v514, %v609
  %v646 = vsel %vm574, %v516, %v610
  %v647 = vsel %vm575, %v519, %v611
  %v648 = vsel %vm576, %v521, %v612
  %v649 = vsel %vm577, %v524, %v613
  %v650 = vsel %vm578, %v526, %v614
  %v651 = vsel %vm579, %v529, %v615
  %v652 = vsel %vm580, %v531, %v616
  %v653 = vsel %vm581, %v534, %v617
  %v654 = vsel %vm582, %v536, %v618
  %v655 = vsel %vm583, %v539, %v619
  %v656 = vsel %vm584, %v541, %v620
  %v657 = vsel %vm585, %v544, %v621
  %v658 = vsel %vm586, %v546, %v622
  %v659 = vsel %vm587, %v549, %v623
  %v660 = vsel %vm588, %v551, %v624
  %v661 = vpack.c.bf16 %v625, %v625
  %v662 = vpack.c.bf16 %v626, %v626
  %v663 = vpack.c.bf16 %v627, %v627
  %v664 = vpack.c.bf16 %v628, %v628
  %v665 = vpack.c.bf16 %v629, %v629
  %v666 = vpack.c.bf16 %v630, %v630
  %v667 = vpack.c.bf16 %v631, %v631
  %v668 = vpack.c.bf16 %v632, %v632
  %v669 = vpack.c.bf16 %v633, %v633
  %v670 = vpack.c.bf16 %v634, %v634
  %v671 = vpack.c.bf16 %v635, %v635
  %v672 = vpack.c.bf16 %v636, %v636
  %v673 = vpack.c.bf16 %v637, %v637
  %v674 = vpack.c.bf16 %v638, %v638
  %v675 = vpack.c.bf16 %v639, %v639
  %v676 = vpack.c.bf16 %v640, %v640
  %v677 = vpack.c.bf16 %v641, %v641
  %v678 = vpack.c.bf16 %v642, %v642
  %v679 = vpack.c.bf16 %v643, %v643
  %v680 = vpack.c.bf16 %v644, %v644
  %v681 = vpack.c.bf16 %v645, %v645
  %v682 = vpack.c.bf16 %v646, %v646
  %v683 = vpack.c.bf16 %v647, %v647
  %v684 = vpack.c.bf16 %v648, %v648
  %v685 = vpack.c.bf16 %v649, %v649
  %v686 = vpack.c.bf16 %v650, %v650
  %v687 = vpack.c.bf16 %v651, %v651
  %v688 = vpack.c.bf16 %v652, %v652
  %v689 = vpack.c.bf16 %v653, %v653
  %v690 = vpack.c.bf16 %v654, %v654
  %v691 = vpack.c.bf16 %v655, %v655
  %v692 = vpack.c.bf16 %v656, %v656
  %v693 = vpack.c.bf16 %v657, %v657
  %v694 = vpack.c.bf16 %v658, %v658
  %v695 = vpack.c.bf16 %v659, %v659
  %v696 = vpack.c.bf16 %v660, %v660
  %697 = vst [vmem:[%s2] sm:$0xf] %v661
  %698 = vst [vmem:[%s2 + $0x4] sm:$0xf] %v662
  %699 = vst [vmem:[%s2 + $0x8] sm:$0xf] %v663
  %700 = vst [vmem:[%s2 + $0xc] sm:$0xf] %v664
  %701 = vst [vmem:[%s2 + $0x10] sm:$0xf] %v665
  %702 = vst [vmem:[%s2 + $0x14] sm:$0xf] %v666
  %703 = vst [vmem:[%s2 + $0x18] sm:$0xf] %v667
  %704 = vst [vmem:[%s2 + $0x1c] sm:$0xf] %v668
  %705 = vst [vmem:[%s2 + $0x20] sm:$0xf] %v669
  %706 = vst [vmem:[%s2 + $0x24] sm:$0xf] %v670
  %707 = vst [vmem:[%s2 + $0x28] sm:$0xf] %v671
  %708 = vst [vmem:[%s2 + $0x2c] sm:$0xf] %v672
  %709 = vst [vmem:[%s2 + $0x30] sm:$0xf] %v673
  %710 = vst [vmem:[%s2 + $0x34] sm:$0xf] %v674
  %711 = vst [vmem:[%s2 + $0x38] sm:$0xf] %v675
  %712 = vst [vmem:[%s2 + $0x3c] sm:$0xf] %v676
  %713 = vst [vmem:[%s2 + $0x40] sm:$0xf] %v677
  %714 = vst [vmem:[%s2 + $0x44] sm:$0xf] %v678
  %715 = vst [vmem:[%s2 + $0x48] sm:$0xf] %v679
  %716 = vst [vmem:[%s2 + $0x4c] sm:$0xf] %v680
  %717 = vst [vmem:[%s2 + $0x50] sm:$0xf] %v681
  %718 = vst [vmem:[%s2 + $0x54] sm:$0xf] %v682
  %719 = vst [vmem:[%s2 + $0x58] sm:$0xf] %v683
  %720 = vst [vmem:[%s2 + $0x5c] sm:$0xf] %v684
  %721 = vst [vmem:[%s2 + $0x60] sm:$0xf] %v685
  %722 = vst [vmem:[%s2 + $0x64] sm:$0xf] %v686
  %723 = vst [vmem:[%s2 + $0x68] sm:$0xf] %v687
  %724 = vst [vmem:[%s2 + $0x6c] sm:$0xf] %v688
  %725 = vst [vmem:[%s2 + $0x70] sm:$0xf] %v689
  %726 = vst [vmem:[%s2 + $0x74] sm:$0xf] %v690
  %727 = vst [vmem:[%s2 + $0x78] sm:$0xf] %v691
  %728 = vst [vmem:[%s2 + $0x7c] sm:$0xf] %v692
  %729 = vst [vmem:[%s2 + $0x80] sm:$0xf] %v693
  %730 = vst [vmem:[%s2 + $0x84] sm:$0xf] %v694
  %731 = vst [vmem:[%s2 + $0x88] sm:$0xf] %v695
  %732 = vst [vmem:[%s2 + $0x8c] sm:$0xf] %v696
  // Predicated region
  $region10: #{discriminator_forward.3} parent=0 // pred_check
    _
  $region11: #{discriminator_forward.3} parent=0 // pred_check_branch
    %734 = sbr.rel (0) target = $region13
  $region12: #{discriminator_forward.3} parent=0 // pred_region
    _
  $region13: #{discriminator_forward.3} parent=0 // pred_fallthru
    _
  // Predicated region
  $region14: #{discriminator_forward.3} parent=0 // pred_check
    _
  $region15: #{discriminator_forward.3} parent=0 // pred_check_branch
    %736 = sbr.rel (0) target = $region17
  $region16: #{discriminator_forward.3} parent=0 // pred_region
    _
  $region17: #{discriminator_forward.3} parent=0 // pred_fallthru
    _

// kernel: discriminator_forward.4
$region0: #{discriminator_forward.4}
  #allocation0 [shape = 'u32[]', space=smem, size = 0x4, offset = 0x4, fixed_abs, tag = 'smem constant byte address 0x4 - core index']
  #allocation1 [shape = 'u32[72,128]{1,0:T(1,128)}', space=vmem, size = 0x9000, scoped, tag = 'internal scratch']
  %s0 = inlined_call_operand.vmem [shape: bf16[72,1024], index: 0, kind: input, shape index: {}]
  %s1 = inlined_call_operand.vmem [shape: bf16[1024,128], index: 1, kind: input, shape index: {}]
  %s2 = inlined_call_operand.vmem [shape: f32[1,128], index: 2, kind: input, shape index: {}]
  %s3 = inlined_call_operand.vmem [shape: f32[1,128], index: 3, kind: input, shape index: {}]
  %s4 = inlined_call_operand.vmem [shape: bf16[72,128], index: 4, kind: output, shape index: {}]
  %s5 = sld [smem:[#allocation0]]
  $region26: #{discriminator_forward.4} parent=0
    _
  %s7 = ssub.s32 1, %s5
  %s8 = scalar_select 0, %s7, %s5
  // Predicated region
  $region2: #{discriminator_forward.4} parent=0 // pred_check
    _
  $region3: #{discriminator_forward.4} parent=0 // pred_check_branch
    %10 = sbr.rel (0) target = $region5
  $region4: #{discriminator_forward.4} parent=0 // pred_region
    _
  $region5: #{discriminator_forward.4} parent=0 // pred_fallthru
    _
  // Predicated region
  $region6: #{discriminator_forward.4} parent=0 // pred_check
    _
  $region7: #{discriminator_forward.4} parent=0 // pred_check_branch
    %12 = sbr.rel (0) target = $region9
  $region8: #{discriminator_forward.4} parent=0 // pred_region
    _
  $region9: #{discriminator_forward.4} parent=0 // pred_fallthru
    _
  // Predicated region
  $region10: #{discriminator_forward.4} parent=0 // pred_check
    _
  $region11: #{discriminator_forward.4} parent=0 // pred_check_branch
    %14 = sbr.rel (0) target = $region13
  $region12: #{discriminator_forward.4} parent=0 // pred_region
    _
  $region13: #{discriminator_forward.4} parent=0 // pred_fallthru
    _
  // Predicated region
  $region14: #{discriminator_forward.4} parent=0 // pred_check
    _
  $region15: #{discriminator_forward.4} parent=0 // pred_check_branch
    %16 = sbr.rel (0) target = $region17
  $region16: #{discriminator_forward.4} parent=0 // pred_region
    _
  $region17: #{discriminator_forward.4} parent=0 // pred_fallthru
    _
  %v17 = vld [vmem:[%s0] sm:$0xff]
  %v18 = vld [vmem:[%s0 + $0x8] sm:$0xff]
  %v19 = vld [vmem:[%s0 + $0x10] sm:$0xff]
  %v20 = vld [vmem:[%s0 + $0x18] sm:$0xff]
  %v21 = vld [vmem:[%s0 + $0x20] sm:$0xff]
  %v22 = vld [vmem:[%s0 + $0x28] sm:$0xff]
  %v23 = vld [vmem:[%s0 + $0x30] sm:$0xff]
  %v24 = vld [vmem:[%s0 + $0x38] sm:$0xff]
  %v25 = vld [vmem:[%s0 + $0x40] sm:$0xff]
  %v26 = vld [vmem:[%s0 + $0x48] sm:$0xff]
  %v27 = vld [vmem:[%s0 + $0x50] sm:$0xff]
  %v28 = vld [vmem:[%s0 + $0x58] sm:$0xff]
  %v29 = vld [vmem:[%s0 + $0x60] sm:$0xff]
  %v30 = vld [vmem:[%s0 + $0x68] sm:$0xff]
  %v31 = vld [vmem:[%s0 + $0x70] sm:$0xff]
  %v32 = vld [vmem:[%s0 + $0x78] sm:$0xff]
  %v33 = vld [vmem:[%s0 + $0x80] sm:$0xff]
  %v34 = vld [vmem:[%s0 + $0x88] sm:$0xff]
  %v35 = vld [vmem:[%s0 + $0x90] sm:$0xff]
  %v36 = vld [vmem:[%s0 + $0x98] sm:$0xff]
  %v37 = vld [vmem:[%s0 + $0xa0] sm:$0xff]
  %v38 = vld [vmem:[%s0 + $0xa8] sm:$0xff]
  %v39 = vld [vmem:[%s0 + $0xb0] sm:$0xff]
  %v40 = vld [vmem:[%s0 + $0xb8] sm:$0xff]
  %v41 = vld [vmem:[%s0 + $0xc0] sm:$0xff]
  %v42 = vld [vmem:[%s0 + $0xc8] sm:$0xff]
  %v43 = vld [vmem:[%s0 + $0xd0] sm:$0xff]
  %v44 = vld [vmem:[%s0 + $0xd8] sm:$0xff]
  %v45 = vld [vmem:[%s0 + $0xe0] sm:$0xff]
  %v46 = vld [vmem:[%s0 + $0xe8] sm:$0xff]
  %v47 = vld [vmem:[%s0 + $0xf0] sm:$0xff]
  %v48 = vld [vmem:[%s0 + $0xf8] sm:$0xff]
  %v49 = vld [vmem:[%s0 + $0x100] sm:$0xff]
  %v50 = vld [vmem:[%s0 + $0x108] sm:$0xff]
  %v51 = vld [vmem:[%s0 + $0x110] sm:$0xff]
  %v52 = vld [vmem:[%s0 + $0x118] sm:$0xff]
  %v53 = vld [vmem:[%s1] sm:$0xf]
  %v54 = vld [vmem:[%s1 + $0x4] sm:$0xf]
  %v55 = vld [vmem:[%s1 + $0x8] sm:$0xf]
  %v56 = vld [vmem:[%s1 + $0xc] sm:$0xf]
  %v57 = vld [vmem:[%s1 + $0x10] sm:$0xf]
  %v58 = vld [vmem:[%s1 + $0x14] sm:$0xf]
  %v59 = vld [vmem:[%s1 + $0x18] sm:$0xf]
  %v60 = vld [vmem:[%s1 + $0x1c] sm:$0xf]
  %v61 = vld [vmem:[%s1 + $0x20] sm:$0xf]
  %v62 = vld [vmem:[%s1 + $0x24] sm:$0xf]
  %v63 = vld [vmem:[%s1 + $0x28] sm:$0xf]
  %v64 = vld [vmem:[%s1 + $0x2c] sm:$0xf]
  %v65 = vld [vmem:[%s1 + $0x30] sm:$0xf]
  %v66 = vld [vmem:[%s1 + $0x34] sm:$0xf]
  %v67 = vld [vmem:[%s1 + $0x38] sm:$0xf]
  %v68 = vld [vmem:[%s1 + $0x3c] sm:$0xf]
  %v69 = vld [vmem:[%s1 + $0x40] sm:$0xf]
  %v70 = vld [vmem:[%s1 + $0x44] sm:$0xf]
  %v71 = vld [vmem:[%s1 + $0x48] sm:$0xf]
  %v72 = vld [vmem:[%s1 + $0x4c] sm:$0xf]
  %v73 = vld [vmem:[%s1 + $0x50] sm:$0xf]
  %v74 = vld [vmem:[%s1 + $0x54] sm:$0xf]
  %v75 = vld [vmem:[%s1 + $0x58] sm:$0xf]
  %v76 = vld [vmem:[%s1 + $0x5c] sm:$0xf]
  %v77 = vld [vmem:[%s1 + $0x60] sm:$0xf]
  %v78 = vld [vmem:[%s1 + $0x64] sm:$0xf]
  %v79 = vld [vmem:[%s1 + $0x68] sm:$0xf]
  %v80 = vld [vmem:[%s1 + $0x6c] sm:$0xf]
  %v81 = vld [vmem:[%s1 + $0x70] sm:$0xf]
  %v82 = vld [vmem:[%s1 + $0x74] sm:$0xf]
  %v83 = vld [vmem:[%s1 + $0x78] sm:$0xf]
  %v84 = vld [vmem:[%s1 + $0x7c] sm:$0xf]
  %v85 = vld [vmem:[%s1 + $0x80] sm:$0xf]
  %v86 = vld [vmem:[%s1 + $0x84] sm:$0xf]
  %v87 = vld [vmem:[%s1 + $0x88] sm:$0xf]
  %v88 = vld [vmem:[%s1 + $0x8c] sm:$0xf]
  %v89 = vld [vmem:[%s1 + $0x90] sm:$0xf]
  %v90 = vld [vmem:[%s1 + $0x94] sm:$0xf]
  %v91 = vld [vmem:[%s1 + $0x98] sm:$0xf]
  %v92 = vld [vmem:[%s1 + $0x9c] sm:$0xf]
  %v93 = vld [vmem:[%s1 + $0xa0] sm:$0xf]
  %v94 = vld [vmem:[%s1 + $0xa4] sm:$0xf]
  %v95 = vld [vmem:[%s1 + $0xa8] sm:$0xf]
  %v96 = vld [vmem:[%s1 + $0xac] sm:$0xf]
  %v97 = vld [vmem:[%s1 + $0xb0] sm:$0xf]
  %v98 = vld [vmem:[%s1 + $0xb4] sm:$0xf]
  %v99 = vld [vmem:[%s1 + $0xb8] sm:$0xf]
  %v100 = vld [vmem:[%s1 + $0xbc] sm:$0xf]
  %v101 = vld [vmem:[%s1 + $0xc0] sm:$0xf]
  %v102 = vld [vmem:[%s1 + $0xc4] sm:$0xf]
  %v103 = vld [vmem:[%s1 + $0xc8] sm:$0xf]
  %v104 = vld [vmem:[%s1 + $0xcc] sm:$0xf]
  %v105 = vld [vmem:[%s1 + $0xd0] sm:$0xf]
  %v106 = vld [vmem:[%s1 + $0xd4] sm:$0xf]
  %v107 = vld [vmem:[%s1 + $0xd8] sm:$0xf]
  %v108 = vld [vmem:[%s1 + $0xdc] sm:$0xf]
  %v109 = vld [vmem:[%s1 + $0xe0] sm:$0xf]
  %v110 = vld [vmem:[%s1 + $0xe4] sm:$0xf]
  %v111 = vld [vmem:[%s1 + $0xe8] sm:$0xf]
  %v112 = vld [vmem:[%s1 + $0xec] sm:$0xf]
  %v113 = vld [vmem:[%s1 + $0xf0] sm:$0xf]
  %v114 = vld [vmem:[%s1 + $0xf4] sm:$0xf]
  %v115 = vld [vmem:[%s1 + $0xf8] sm:$0xf]
  %v116 = vld [vmem:[%s1 + $0xfc] sm:$0xf]
  %v117 = vld [vmem:[%s1 + $0x100] sm:$0xf]
  %v118 = vld [vmem:[%s1 + $0x104] sm:$0xf]
  %v119 = vld [vmem:[%s1 + $0x108] sm:$0xf]
  %v120 = vld [vmem:[%s1 + $0x10c] sm:$0xf]
  %v121 = vld [vmem:[%s1 + $0x110] sm:$0xf]
  %v122 = vld [vmem:[%s1 + $0x114] sm:$0xf]
  %v123 = vld [vmem:[%s1 + $0x118] sm:$0xf]
  %v124 = vld [vmem:[%s1 + $0x11c] sm:$0xf]
  %v125 = vld [vmem:[%s1 + $0x120] sm:$0xf]
  %v126 = vld [vmem:[%s1 + $0x124] sm:$0xf]
  %v127 = vld [vmem:[%s1 + $0x128] sm:$0xf]
  %v128 = vld [vmem:[%s1 + $0x12c] sm:$0xf]
  %v129 = vld [vmem:[%s1 + $0x130] sm:$0xf]
  %v130 = vld [vmem:[%s1 + $0x134] sm:$0xf]
  %v131 = vld [vmem:[%s1 + $0x138] sm:$0xf]
  %v132 = vld [vmem:[%s1 + $0x13c] sm:$0xf]
  %v133 = vld [vmem:[%s1 + $0x140] sm:$0xf]
  %v134 = vld [vmem:[%s1 + $0x144] sm:$0xf]
  %v135 = vld [vmem:[%s1 + $0x148] sm:$0xf]
  %v136 = vld [vmem:[%s1 + $0x14c] sm:$0xf]
  %v137 = vld [vmem:[%s1 + $0x150] sm:$0xf]
  %v138 = vld [vmem:[%s1 + $0x154] sm:$0xf]
  %v139 = vld [vmem:[%s1 + $0x158] sm:$0xf]
  %v140 = vld [vmem:[%s1 + $0x15c] sm:$0xf]
  %v141 = vld [vmem:[%s1 + $0x160] sm:$0xf]
  %v142 = vld [vmem:[%s1 + $0x164] sm:$0xf]
  %v143 = vld [vmem:[%s1 + $0x168] sm:$0xf]
  %v144 = vld [vmem:[%s1 + $0x16c] sm:$0xf]
  %v145 = vld [vmem:[%s1 + $0x170] sm:$0xf]
  %v146 = vld [vmem:[%s1 + $0x174] sm:$0xf]
  %v147 = vld [vmem:[%s1 + $0x178] sm:$0xf]
  %v148 = vld [vmem:[%s1 + $0x17c] sm:$0xf]
  %v149 = vld [vmem:[%s1 + $0x180] sm:$0xf]
  %v150 = vld [vmem:[%s1 + $0x184] sm:$0xf]
  %v151 = vld [vmem:[%s1 + $0x188] sm:$0xf]
  %v152 = vld [vmem:[%s1 + $0x18c] sm:$0xf]
  %v153 = vld [vmem:[%s1 + $0x190] sm:$0xf]
  %v154 = vld [vmem:[%s1 + $0x194] sm:$0xf]
  %v155 = vld [vmem:[%s1 + $0x198] sm:$0xf]
  %v156 = vld [vmem:[%s1 + $0x19c] sm:$0xf]
  %v157 = vld [vmem:[%s1 + $0x1a0] sm:$0xf]
  %v158 = vld [vmem:[%s1 + $0x1a4] sm:$0xf]
  %v159 = vld [vmem:[%s1 + $0x1a8] sm:$0xf]
  %v160 = vld [vmem:[%s1 + $0x1ac] sm:$0xf]
  %v161 = vld [vmem:[%s1 + $0x1b0] sm:$0xf]
  %v162 = vld [vmem:[%s1 + $0x1b4] sm:$0xf]
  %v163 = vld [vmem:[%s1 + $0x1b8] sm:$0xf]
  %v164 = vld [vmem:[%s1 + $0x1bc] sm:$0xf]
  %v165 = vld [vmem:[%s1 + $0x1c0] sm:$0xf]
  %v166 = vld [vmem:[%s1 + $0x1c4] sm:$0xf]
  %v167 = vld [vmem:[%s1 + $0x1c8] sm:$0xf]
  %v168 = vld [vmem:[%s1 + $0x1cc] sm:$0xf]
  %v169 = vld [vmem:[%s1 + $0x1d0] sm:$0xf]
  %v170 = vld [vmem:[%s1 + $0x1d4] sm:$0xf]
  %v171 = vld [vmem:[%s1 + $0x1d8] sm:$0xf]
  %v172 = vld [vmem:[%s1 + $0x1dc] sm:$0xf]
  %v173 = vld [vmem:[%s1 + $0x1e0] sm:$0xf]
  %v174 = vld [vmem:[%s1 + $0x1e4] sm:$0xf]
  %v175 = vld [vmem:[%s1 + $0x1e8] sm:$0xf]
  %v176 = vld [vmem:[%s1 + $0x1ec] sm:$0xf]
  %v177 = vld [vmem:[%s1 + $0x1f0] sm:$0xf]
  %v178 = vld [vmem:[%s1 + $0x1f4] sm:$0xf]
  %v179 = vld [vmem:[%s1 + $0x1f8] sm:$0xf]
  %v180 = vld [vmem:[%s1 + $0x1fc] sm:$0xf]
  %v217 = vunpack.c.l.b16 %v17
  %v218 = vunpack.c.h.b16 %v17
  %v219 = vunpack.c.l.b16 %v18
  %v220 = vunpack.c.h.b16 %v18
  %v221 = vunpack.c.l.b16 %v19
  %v222 = vunpack.c.h.b16 %v19
  %v223 = vunpack.c.l.b16 %v20
  %v224 = vunpack.c.h.b16 %v20
  %v225 = vunpack.c.l.b16 %v21
  %v226 = vunpack.c.h.b16 %v21
  %v227 = vunpack.c.l.b16 %v22
  %v228 = vunpack.c.h.b16 %v22
  %v229 = vunpack.c.l.b16 %v23
  %v230 = vunpack.c.h.b16 %v23
  %v231 = vunpack.c.l.b16 %v24
  %v232 = vunpack.c.h.b16 %v24
  %v233 = vunpack.c.l.b16 %v25
  %v234 = vunpack.c.h.b16 %v25
  %v235 = vunpack.c.l.b16 %v26
  %v236 = vunpack.c.h.b16 %v26
  %v237 = vunpack.c.l.b16 %v27
  %v238 = vunpack.c.h.b16 %v27
  %v239 = vunpack.c.l.b16 %v28
  %v240 = vunpack.c.h.b16 %v28
  %v241 = vunpack.c.l.b16 %v29
  %v242 = vunpack.c.h.b16 %v29
  %v243 = vunpack.c.l.b16 %v30
  %v244 = vunpack.c.h.b16 %v30
  %v245 = vunpack.c.l.b16 %v31
  %v246 = vunpack.c.h.b16 %v31
  %v247 = vunpack.c.l.b16 %v32
  %v248 = vunpack.c.h.b16 %v32
  %v249 = vunpack.c.l.b16 %v33
  %v250 = vunpack.c.h.b16 %v33
  %v251 = vunpack.c.l.b16 %v34
  %v252 = vunpack.c.h.b16 %v34
  %v253 = vunpack.c.l.b16 %v35
  %v254 = vunpack.c.h.b16 %v35
  %v255 = vunpack.c.l.b16 %v36
  %v256 = vunpack.c.h.b16 %v36
  %v257 = vunpack.c.l.b16 %v37
  %v258 = vunpack.c.h.b16 %v37
  %v259 = vunpack.c.l.b16 %v38
  %v260 = vunpack.c.h.b16 %v38
  %v261 = vunpack.c.l.b16 %v39
  %v262 = vunpack.c.h.b16 %v39
  %v263 = vunpack.c.l.b16 %v40
  %v264 = vunpack.c.h.b16 %v40
  %v265 = vunpack.c.l.b16 %v41
  %v266 = vunpack.c.h.b16 %v41
  %v267 = vunpack.c.l.b16 %v42
  %v268 = vunpack.c.h.b16 %v42
  %v269 = vunpack.c.l.b16 %v43
  %v270 = vunpack.c.h.b16 %v43
  %v271 = vunpack.c.l.b16 %v44
  %v272 = vunpack.c.h.b16 %v44
  %v273 = vunpack.c.l.b16 %v45
  %v274 = vunpack.c.h.b16 %v45
  %v275 = vunpack.c.l.b16 %v46
  %v276 = vunpack.c.h.b16 %v46
  %v277 = vunpack.c.l.b16 %v47
  %v278 = vunpack.c.h.b16 %v47
  %v279 = vunpack.c.l.b16 %v48
  %v280 = vunpack.c.h.b16 %v48
  %v281 = vunpack.c.l.b16 %v49
  %v282 = vunpack.c.h.b16 %v49
  %v283 = vunpack.c.l.b16 %v50
  %v284 = vunpack.c.h.b16 %v50
  %v285 = vunpack.c.l.b16 %v51
  %v286 = vunpack.c.h.b16 %v51
  %v287 = vunpack.c.l.b16 %v52
  %v288 = vunpack.c.h.b16 %v52
  %v289 = vpack.c.b16 %v225, %v217
  %v290 = vpack.c.b16 %v226, %v218
  %v291 = vpack.c.b16 %v227, %v219
  %v292 = vpack.c.b16 %v228, %v220
  %v293 = vpack.c.b16 %v229, %v221
  %v294 = vpack.c.b16 %v230, %v222
  %v295 = vpack.c.b16 %v231, %v223
  %v296 = vpack.c.b16 %v232, %v224
  %v297 = vpack.c.b16 %v241, %v233
  %v298 = vpack.c.b16 %v242, %v234
  %v299 = vpack.c.b16 %v243, %v235
  %v300 = vpack.c.b16 %v244, %v236
  %v301 = vpack.c.b16 %v245, %v237
  %v302 = vpack.c.b16 %v246, %v238
  %v303 = vpack.c.b16 %v247, %v239
  %v304 = vpack.c.b16 %v248, %v240
  %v305 = vpack.c.b16 %v257, %v249
  %v306 = vpack.c.b16 %v258, %v250
  %v307 = vpack.c.b16 %v259, %v251
  %v308 = vpack.c.b16 %v260, %v252
  %v309 = vpack.c.b16 %v261, %v253
  %v310 = vpack.c.b16 %v262, %v254
  %v311 = vpack.c.b16 %v263, %v255
  %v312 = vpack.c.b16 %v264, %v256
  %v313 = vpack.c.b16 %v273, %v265
  %v314 = vpack.c.b16 %v274, %v266
  %v315 = vpack.c.b16 %v275, %v267
  %v316 = vpack.c.b16 %v276, %v268
  %v317 = vpack.c.b16 %v277, %v269
  %v318 = vpack.c.b16 %v278, %v270
  %v319 = vpack.c.b16 %v279, %v271
  %v320 = vpack.c.b16 %v280, %v272
  %v321 = vpack.c.b16 %v281, %v281
  %v322 = vpack.c.b16 %v282, %v282
  %v323 = vpack.c.b16 %v283, %v283
  %v324 = vpack.c.b16 %v284, %v284
  %v325 = vpack.c.b16 %v285, %v285
  %v326 = vpack.c.b16 %v286, %v286
  %v327 = vpack.c.b16 %v287, %v287
  %v328 = vpack.c.b16 %v288, %v288
  %v497 = vunpack.c.l.b16 %v53
  %v498 = vunpack.c.l.b16 %v54
  %v499 = vunpack.c.l.b16 %v55
  %v500 = vunpack.c.l.b16 %v56
  %v501 = vunpack.c.l.b16 %v57
  %v502 = vunpack.c.l.b16 %v58
  %v503 = vunpack.c.l.b16 %v59
  %v504 = vunpack.c.l.b16 %v60
  %v505 = vunpack.c.l.b16 %v61
  %v506 = vunpack.c.l.b16 %v62
  %v507 = vunpack.c.l.b16 %v63
  %v508 = vunpack.c.l.b16 %v64
  %v509 = vunpack.c.l.b16 %v65
  %v510 = vunpack.c.l.b16 %v66
  %v511 = vunpack.c.l.b16 %v67
  %v512 = vunpack.c.l.b16 %v68
  %v513 = vunpack.c.l.b16 %v69
  %v514 = vunpack.c.l.b16 %v70
  %v515 = vunpack.c.l.b16 %v71
  %v516 = vunpack.c.l.b16 %v72
  %v517 = vunpack.c.l.b16 %v73
  %v518 = vunpack.c.l.b16 %v74
  %v519 = vunpack.c.l.b16 %v75
  %v520 = vunpack.c.l.b16 %v76
  %v521 = vunpack.c.l.b16 %v77
  %v522 = vunpack.c.l.b16 %v78
  %v523 = vunpack.c.l.b16 %v79
  %v524 = vunpack.c.l.b16 %v80
  %v525 = vunpack.c.l.b16 %v81
  %v526 = vunpack.c.l.b16 %v82
  %v527 = vunpack.c.l.b16 %v83
  %v528 = vunpack.c.l.b16 %v84
  %v529 = vunpack.c.l.b16 %v85
  %v530 = vunpack.c.l.b16 %v86
  %v531 = vunpack.c.l.b16 %v87
  %v532 = vunpack.c.l.b16 %v88
  %v533 = vunpack.c.l.b16 %v89
  %v534 = vunpack.c.l.b16 %v90
  %v535 = vunpack.c.l.b16 %v91
  %v536 = vunpack.c.l.b16 %v92
  %v537 = vunpack.c.l.b16 %v93
  %v538 = vunpack.c.l.b16 %v94
  %v539 = vunpack.c.l.b16 %v95
  %v540 = vunpack.c.l.b16 %v96
  %v541 = vunpack.c.l.b16 %v97
  %v542 = vunpack.c.l.b16 %v98
  %v543 = vunpack.c.l.b16 %v99
  %v544 = vunpack.c.l.b16 %v100
  %v545 = vunpack.c.l.b16 %v101
  %v546 = vunpack.c.l.b16 %v102
  %v547 = vunpack.c.l.b16 %v103
  %v548 = vunpack.c.l.b16 %v104
  %v549 = vunpack.c.l.b16 %v105
  %v550 = vunpack.c.l.b16 %v106
  %v551 = vunpack.c.l.b16 %v107
  %v552 = vunpack.c.l.b16 %v108
  %v553 = vunpack.c.l.b16 %v109
  %v554 = vunpack.c.l.b16 %v110
  %v555 = vunpack.c.l.b16 %v111
  %v556 = vunpack.c.l.b16 %v112
  %v557 = vunpack.c.l.b16 %v113
  %v558 = vunpack.c.l.b16 %v114
  %v559 = vunpack.c.l.b16 %v115
  %v560 = vunpack.c.l.b16 %v116
  %v561 = vunpack.c.l.b16 %v117
  %v562 = vunpack.c.l.b16 %v118
  %v563 = vunpack.c.l.b16 %v119
  %v564 = vunpack.c.l.b16 %v120
  %v565 = vunpack.c.l.b16 %v121
  %v566 = vunpack.c.l.b16 %v122
  %v567 = vunpack.c.l.b16 %v123
  %v568 = vunpack.c.l.b16 %v124
  %v569 = vunpack.c.l.b16 %v125
  %v570 = vunpack.c.l.b16 %v126
  %v571 = vunpack.c.l.b16 %v127
  %v572 = vunpack.c.l.b16 %v128
  %v573 = vunpack.c.l.b16 %v129
  %v574 = vunpack.c.l.b16 %v130
  %v575 = vunpack.c.l.b16 %v131
  %v576 = vunpack.c.l.b16 %v132
  %v577 = vunpack.c.l.b16 %v133
  %v578 = vunpack.c.l.b16 %v134
  %v579 = vunpack.c.l.b16 %v135
  %v580 = vunpack.c.l.b16 %v136
  %v581 = vunpack.c.l.b16 %v137
  %v582 = vunpack.c.l.b16 %v138
  %v583 = vunpack.c.l.b16 %v139
  %v584 = vunpack.c.l.b16 %v140
  %v585 = vunpack.c.l.b16 %v141
  %v586 = vunpack.c.l.b16 %v142
  %v587 = vunpack.c.l.b16 %v143
  %v588 = vunpack.c.l.b16 %v144
  %v589 = vunpack.c.l.b16 %v145
  %v590 = vunpack.c.l.b16 %v146
  %v591 = vunpack.c.l.b16 %v147
  %v592 = vunpack.c.l.b16 %v148
  %v593 = vunpack.c.l.b16 %v149
  %v594 = vunpack.c.l.b16 %v150
  %v595 = vunpack.c.l.b16 %v151
  %v596 = vunpack.c.l.b16 %v152
  %v597 = vunpack.c.l.b16 %v153
  %v598 = vunpack.c.l.b16 %v154
  %v599 = vunpack.c.l.b16 %v155
  %v600 = vunpack.c.l.b16 %v156
  %v601 = vunpack.c.l.b16 %v157
  %v602 = vunpack.c.l.b16 %v158
  %v603 = vunpack.c.l.b16 %v159
  %v604 = vunpack.c.l.b16 %v160
  %v605 = vunpack.c.l.b16 %v161
  %v606 = vunpack.c.l.b16 %v162
  %v607 = vunpack.c.l.b16 %v163
  %v608 = vunpack.c.l.b16 %v164
  %v609 = vunpack.c.l.b16 %v165
  %v610 = vunpack.c.l.b16 %v166
  %v611 = vunpack.c.l.b16 %v167
  %v612 = vunpack.c.l.b16 %v168
  %v613 = vunpack.c.l.b16 %v169
  %v614 = vunpack.c.l.b16 %v170
  %v615 = vunpack.c.l.b16 %v171
  %v616 = vunpack.c.l.b16 %v172
  %v617 = vunpack.c.l.b16 %v173
  %v618 = vunpack.c.l.b16 %v174
  %v619 = vunpack.c.l.b16 %v175
  %v620 = vunpack.c.l.b16 %v176
  %v621 = vunpack.c.l.b16 %v177
  %v622 = vunpack.c.l.b16 %v178
  %v623 = vunpack.c.l.b16 %v179
  %v624 = vunpack.c.l.b16 %v180
  %v625 = vpack.c.b16 %v498, %v497
  %v626 = vpack.c.b16 %v500, %v499
  %v627 = vpack.c.b16 %v502, %v501
  %v628 = vpack.c.b16 %v504, %v503
  %v629 = vpack.c.b16 %v506, %v505
  %v630 = vpack.c.b16 %v508, %v507
  %v631 = vpack.c.b16 %v510, %v509
  %v632 = vpack.c.b16 %v512, %v511
  %v633 = vpack.c.b16 %v514, %v513
  %v634 = vpack.c.b16 %v516, %v515
  %v635 = vpack.c.b16 %v518, %v517
  %v636 = vpack.c.b16 %v520, %v519
  %v637 = vpack.c.b16 %v522, %v521
  %v638 = vpack.c.b16 %v524, %v523
  %v639 = vpack.c.b16 %v526, %v525
  %v640 = vpack.c.b16 %v528, %v527
  %v641 = vpack.c.b16 %v530, %v529
  %v642 = vpack.c.b16 %v532, %v531
  %v643 = vpack.c.b16 %v534, %v533
  %v644 = vpack.c.b16 %v536, %v535
  %v645 = vpack.c.b16 %v538, %v537
  %v646 = vpack.c.b16 %v540, %v539
  %v647 = vpack.c.b16 %v542, %v541
  %v648 = vpack.c.b16 %v544, %v543
  %v649 = vpack.c.b16 %v546, %v545
  %v650 = vpack.c.b16 %v548, %v547
  %v651 = vpack.c.b16 %v550, %v549
  %v652 = vpack.c.b16 %v552, %v551
  %v653 = vpack.c.b16 %v554, %v553
  %v654 = vpack.c.b16 %v556, %v555
  %v655 = vpack.c.b16 %v558, %v557
  %v656 = vpack.c.b16 %v560, %v559
  %v657 = vpack.c.b16 %v562, %v561
  %v658 = vpack.c.b16 %v564, %v563
  %v659 = vpack.c.b16 %v566, %v565
  %v660 = vpack.c.b16 %v568, %v567
  %v661 = vpack.c.b16 %v570, %v569
  %v662 = vpack.c.b16 %v572, %v571
  %v663 = vpack.c.b16 %v574, %v573
  %v664 = vpack.c.b16 %v576, %v575
  %v665 = vpack.c.b16 %v578, %v577
  %v666 = vpack.c.b16 %v580, %v579
  %v667 = vpack.c.b16 %v582, %v581
  %v668 = vpack.c.b16 %v584, %v583
  %v669 = vpack.c.b16 %v586, %v585
  %v670 = vpack.c.b16 %v588, %v587
  %v671 = vpack.c.b16 %v590, %v589
  %v672 = vpack.c.b16 %v592, %v591
  %v673 = vpack.c.b16 %v594, %v593
  %v674 = vpack.c.b16 %v596, %v595
  %v675 = vpack.c.b16 %v598, %v597
  %v676 = vpack.c.b16 %v600, %v599
  %v677 = vpack.c.b16 %v602, %v601
  %v678 = vpack.c.b16 %v604, %v603
  %v679 = vpack.c.b16 %v606, %v605
  %v680 = vpack.c.b16 %v608, %v607
  %v681 = vpack.c.b16 %v610, %v609
  %v682 = vpack.c.b16 %v612, %v611
  %v683 = vpack.c.b16 %v614, %v613
  %v684 = vpack.c.b16 %v616, %v615
  %v685 = vpack.c.b16 %v618, %v617
  %v686 = vpack.c.b16 %v620, %v619
  %v687 = vpack.c.b16 %v622, %v621
  %v688 = vpack.c.b16 %v624, %v623
  %753 = vmatpush.bf16.msra.mxu0 %v632
  %754 = vmatpush.bf16.msra.mxu0 %v631
  %755 = vmatpush.bf16.msra.mxu0 %v630
  %756 = vmatpush.bf16.msra.mxu0 %v629
  %757 = vmatpush.bf16.msra.mxu0 %v628
  %758 = vmatpush.bf16.msra.mxu0 %v627
  %759 = vmatpush.bf16.msra.mxu0 %v626
  %760 = vmatpush.bf16.msra.mxu0 %v625
  %761 = vmatmul.bf16.gmra.mxu0 %v289
  %v762 = vpop.f32.mrf.mxu0
  %v763 = vadd.f32 0.0, %v762
  %v764 = vpop.f32.mrf.mxu0
  %v765 = vadd.f32 0.0, %v764
  %766 = vmatmul.bf16.gmra.mxu0 %v297
  %v767 = vpop.f32.mrf.mxu0
  %v768 = vadd.f32 0.0, %v767
  %v769 = vpop.f32.mrf.mxu0
  %v770 = vadd.f32 0.0, %v769
  %771 = vmatmul.bf16.gmra.mxu0 %v305
  %v772 = vpop.f32.mrf.mxu0
  %v773 = vadd.f32 0.0, %v772
  %v774 = vpop.f32.mrf.mxu0
  %v775 = vadd.f32 0.0, %v774
  %776 = vmatmul.bf16.gmra.mxu0 %v313
  %v777 = vpop.f32.mrf.mxu0
  %v778 = vadd.f32 0.0, %v777
  %v779 = vpop.f32.mrf.mxu0
  %v780 = vadd.f32 0.0, %v779
  %781 = vmatmul.bf16.gmra.mxu0 %v321
  %v782 = vpop.f32.mrf.mxu0
  %v783 = vadd.f32 0.0, %v782
  %v784 = vpop.f32.mrf.mxu0
  %785 = vdwg.mxu0
  %786 = vmatpush.bf16.msra.mxu0 %v640
  %787 = vmatpush.bf16.msra.mxu0 %v639
  %788 = vmatpush.bf16.msra.mxu0 %v638
  %789 = vmatpush.bf16.msra.mxu0 %v637
  %790 = vmatpush.bf16.msra.mxu0 %v636
  %791 = vmatpush.bf16.msra.mxu0 %v635
  %792 = vmatpush.bf16.msra.mxu0 %v634
  %793 = vmatpush.bf16.msra.mxu0 %v633
  %794 = vmatmul.bf16.gmra.mxu0 %v290
  %v795 = vpop.f32.mrf.mxu0
  %v796 = vadd.f32 %v763, %v795
  %v797 = vpop.f32.mrf.mxu0
  %v798 = vadd.f32 %v765, %v797
  %799 = vmatmul.bf16.gmra.mxu0 %v298
  %v800 = vpop.f32.mrf.mxu0
  %v801 = vadd.f32 %v768, %v800
  %v802 = vpop.f32.mrf.mxu0
  %v803 = vadd.f32 %v770, %v802
  %804 = vmatmul.bf16.gmra.mxu0 %v306
  %v805 = vpop.f32.mrf.mxu0
  %v806 = vadd.f32 %v773, %v805
  %v807 = vpop.f32.mrf.mxu0
  %v808 = vadd.f32 %v775, %v807
  %809 = vmatmul.bf16.gmra.mxu0 %v314
  %v810 = vpop.f32.mrf.mxu0
  %v811 = vadd.f32 %v778, %v810
  %v812 = vpop.f32.mrf.mxu0
  %v813 = vadd.f32 %v780, %v812
  %814 = vmatmul.bf16.gmra.mxu0 %v322
  %v815 = vpop.f32.mrf.mxu0
  %v816 = vadd.f32 %v783, %v815
  %v817 = vpop.f32.mrf.mxu0
  %818 = vdwg.mxu0
  %819 = vmatpush.bf16.msra.mxu0 %v648
  %820 = vmatpush.bf16.msra.mxu0 %v647
  %821 = vmatpush.bf16.msra.mxu0 %v646
  %822 = vmatpush.bf16.msra.mxu0 %v645
  %823 = vmatpush.bf16.msra.mxu0 %v644
  %824 = vmatpush.bf16.msra.mxu0 %v643
  %825 = vmatpush.bf16.msra.mxu0 %v642
  %826 = vmatpush.bf16.msra.mxu0 %v641
  %827 = vmatmul.bf16.gmra.mxu0 %v291
  %v828 = vpop.f32.mrf.mxu0
  %v829 = vadd.f32 %v796, %v828
  %v830 = vpop.f32.mrf.mxu0
  %v831 = vadd.f32 %v798, %v830
  %832 = vmatmul.bf16.gmra.mxu0 %v299
  %v833 = vpop.f32.mrf.mxu0
  %v834 = vadd.f32 %v801, %v833
  %v835 = vpop.f32.mrf.mxu0
  %v836 = vadd.f32 %v803, %v835
  %837 = vmatmul.bf16.gmra.mxu0 %v307
  %v838 = vpop.f32.mrf.mxu0
  %v839 = vadd.f32 %v806, %v838
  %v840 = vpop.f32.mrf.mxu0
  %v841 = vadd.f32 %v808, %v840
  %842 = vmatmul.bf16.gmra.mxu0 %v315
  %v843 = vpop.f32.mrf.mxu0
  %v844 = vadd.f32 %v811, %v843
  %v845 = vpop.f32.mrf.mxu0
  %v846 = vadd.f32 %v813, %v845
  %847 = vmatmul.bf16.gmra.mxu0 %v323
  %v848 = vpop.f32.mrf.mxu0
  %v849 = vadd.f32 %v816, %v848
  %v850 = vpop.f32.mrf.mxu0
  %851 = vdwg.mxu0
  %852 = vmatpush.bf16.msra.mxu0 %v656
  %853 = vmatpush.bf16.msra.mxu0 %v655
  %854 = vmatpush.bf16.msra.mxu0 %v654
  %855 = vmatpush.bf16.msra.mxu0 %v653
  %856 = vmatpush.bf16.msra.mxu0 %v652
  %857 = vmatpush.bf16.msra.mxu0 %v651
  %858 = vmatpush.bf16.msra.mxu0 %v650
  %859 = vmatpush.bf16.msra.mxu0 %v649
  %860 = vmatmul.bf16.gmra.mxu0 %v292
  %v861 = vpop.f32.mrf.mxu0
  %v862 = vadd.f32 %v829, %v861
  %v863 = vpop.f32.mrf.mxu0
  %v864 = vadd.f32 %v831, %v863
  %865 = vmatmul.bf16.gmra.mxu0 %v300
  %v866 = vpop.f32.mrf.mxu0
  %v867 = vadd.f32 %v834, %v866
  %v868 = vpop.f32.mrf.mxu0
  %v869 = vadd.f32 %v836, %v868
  %870 = vmatmul.bf16.gmra.mxu0 %v308
  %v871 = vpop.f32.mrf.mxu0
  %v872 = vadd.f32 %v839, %v871
  %v873 = vpop.f32.mrf.mxu0
  %v874 = vadd.f32 %v841, %v873
  %875 = vmatmul.bf16.gmra.mxu0 %v316
  %v876 = vpop.f32.mrf.mxu0
  %v877 = vadd.f32 %v844, %v876
  %v878 = vpop.f32.mrf.mxu0
  %v879 = vadd.f32 %v846, %v878
  %880 = vmatmul.bf16.gmra.mxu0 %v324
  %v881 = vpop.f32.mrf.mxu0
  %v882 = vadd.f32 %v849, %v881
  %v883 = vpop.f32.mrf.mxu0
  %884 = vdwg.mxu0
  %885 = vmatpush.bf16.msra.mxu0 %v664
  %886 = vmatpush.bf16.msra.mxu0 %v663
  %887 = vmatpush.bf16.msra.mxu0 %v662
  %888 = vmatpush.bf16.msra.mxu0 %v661
  %889 = vmatpush.bf16.msra.mxu0 %v660
  %890 = vmatpush.bf16.msra.mxu0 %v659
  %891 = vmatpush.bf16.msra.mxu0 %v658
  %892 = vmatpush.bf16.msra.mxu0 %v657
  %893 = vmatmul.bf16.gmra.mxu0 %v293
  %v894 = vpop.f32.mrf.mxu0
  %v895 = vadd.f32 %v862, %v894
  %v896 = vpop.f32.mrf.mxu0
  %v897 = vadd.f32 %v864, %v896
  %898 = vmatmul.bf16.gmra.mxu0 %v301
  %v899 = vpop.f32.mrf.mxu0
  %v900 = vadd.f32 %v867, %v899
  %v901 = vpop.f32.mrf.mxu0
  %v902 = vadd.f32 %v869, %v901
  %903 = vmatmul.bf16.gmra.mxu0 %v309
  %v904 = vpop.f32.mrf.mxu0
  %v905 = vadd.f32 %v872, %v904
  %v906 = vpop.f32.mrf.mxu0
  %v907 = vadd.f32 %v874, %v906
  %908 = vmatmul.bf16.gmra.mxu0 %v317
  %v909 = vpop.f32.mrf.mxu0
  %v910 = vadd.f32 %v877, %v909
  %v911 = vpop.f32.mrf.mxu0
  %v912 = vadd.f32 %v879, %v911
  %913 = vmatmul.bf16.gmra.mxu0 %v325
  %v914 = vpop.f32.mrf.mxu0
  %v915 = vadd.f32 %v882, %v914
  %v916 = vpop.f32.mrf.mxu0
  %917 = vdwg.mxu0
  %918 = vmatpush.bf16.msra.mxu0 %v672
  %919 = vmatpush.bf16.msra.mxu0 %v671
  %920 = vmatpush.bf16.msra.mxu0 %v670
  %921 = vmatpush.bf16.msra.mxu0 %v669
  %922 = vmatpush.bf16.msra.mxu0 %v668
  %923 = vmatpush.bf16.msra.mxu0 %v667
  %924 = vmatpush.bf16.msra.mxu0 %v666
  %925 = vmatpush.bf16.msra.mxu0 %v665
  %926 = vmatmul.bf16.gmra.mxu0 %v294
  %v927 = vpop.f32.mrf.mxu0
  %v928 = vadd.f32 %v895, %v927
  %v929 = vpop.f32.mrf.mxu0
  %v930 = vadd.f32 %v897, %v929
  %931 = vmatmul.bf16.gmra.mxu0 %v302
  %v932 = vpop.f32.mrf.mxu0
  %v933 = vadd.f32 %v900, %v932
  %v934 = vpop.f32.mrf.mxu0
  %v935 = vadd.f32 %v902, %v934
  %936 = vmatmul.bf16.gmra.mxu0 %v310
  %v937 = vpop.f32.mrf.mxu0
  %v938 = vadd.f32 %v905, %v937
  %v939 = vpop.f32.mrf.mxu0
  %v940 = vadd.f32 %v907, %v939
  %941 = vmatmul.bf16.gmra.mxu0 %v318
  %v942 = vpop.f32.mrf.mxu0
  %v943 = vadd.f32 %v910, %v942
  %v944 = vpop.f32.mrf.mxu0
  %v945 = vadd.f32 %v912, %v944
  %946 = vmatmul.bf16.gmra.mxu0 %v326
  %v947 = vpop.f32.mrf.mxu0
  %v948 = vadd.f32 %v915, %v947
  %v949 = vpop.f32.mrf.mxu0
  %950 = vdwg.mxu0
  %951 = vmatpush.bf16.msra.mxu0 %v680
  %952 = vmatpush.bf16.msra.mxu0 %v679
  %953 = vmatpush.bf16.msra.mxu0 %v678
  %954 = vmatpush.bf16.msra.mxu0 %v677
  %955 = vmatpush.bf16.msra.mxu0 %v676
  %956 = vmatpush.bf16.msra.mxu0 %v675
  %957 = vmatpush.bf16.msra.mxu0 %v674
  %958 = vmatpush.bf16.msra.mxu0 %v673
  %959 = vmatmul.bf16.gmra.mxu0 %v295
  %v960 = vpop.f32.mrf.mxu0
  %v961 = vadd.f32 %v928, %v960
  %v962 = vpop.f32.mrf.mxu0
  %v963 = vadd.f32 %v930, %v962
  %964 = vmatmul.bf16.gmra.mxu0 %v303
  %v965 = vpop.f32.mrf.mxu0
  %v966 = vadd.f32 %v933, %v965
  %v967 = vpop.f32.mrf.mxu0
  %v968 = vadd.f32 %v935, %v967
  %969 = vmatmul.bf16.gmra.mxu0 %v311
  %v970 = vpop.f32.mrf.mxu0
  %v971 = vadd.f32 %v938, %v970
  %v972 = vpop.f32.mrf.mxu0
  %v973 = vadd.f32 %v940, %v972
  %974 = vmatmul.bf16.gmra.mxu0 %v319
  %v975 = vpop.f32.mrf.mxu0
  %v976 = vadd.f32 %v943, %v975
  %v977 = vpop.f32.mrf.mxu0
  %v978 = vadd.f32 %v945, %v977
  %979 = vmatmul.bf16.gmra.mxu0 %v327
  %v980 = vpop.f32.mrf.mxu0
  %v981 = vadd.f32 %v948, %v980
  %v982 = vpop.f32.mrf.mxu0
  %983 = vdwg.mxu0
  %984 = vmatpush.bf16.msra.mxu0 %v688
  %985 = vmatpush.bf16.msra.mxu0 %v687
  %986 = vmatpush.bf16.msra.mxu0 %v686
  %987 = vmatpush.bf16.msra.mxu0 %v685
  %988 = vmatpush.bf16.msra.mxu0 %v684
  %989 = vmatpush.bf16.msra.mxu0 %v683
  %990 = vmatpush.bf16.msra.mxu0 %v682
  %991 = vmatpush.bf16.msra.mxu0 %v681
  %992 = vmatmul.bf16.gmra.mxu0 %v296
  %v993 = vpop.f32.mrf.mxu0
  %v994 = vadd.f32 %v961, %v993
  %v995 = vpop.f32.mrf.mxu0
  %v996 = vadd.f32 %v963, %v995
  %997 = vmatmul.bf16.gmra.mxu0 %v304
  %v998 = vpop.f32.mrf.mxu0
  %v999 = vadd.f32 %v966, %v998
  %v1000 = vpop.f32.mrf.mxu0
  %v1001 = vadd.f32 %v968, %v1000
  %1002 = vmatmul.bf16.gmra.mxu0 %v312
  %v1003 = vpop.f32.mrf.mxu0
  %v1004 = vadd.f32 %v971, %v1003
  %v1005 = vpop.f32.mrf.mxu0
  %v1006 = vadd.f32 %v973, %v1005
  %1007 = vmatmul.bf16.gmra.mxu0 %v320
  %v1008 = vpop.f32.mrf.mxu0
  %v1009 = vadd.f32 %v976, %v1008
  %v1010 = vpop.f32.mrf.mxu0
  %v1011 = vadd.f32 %v978, %v1010
  %1012 = vmatmul.bf16.gmra.mxu0 %v328
  %v1013 = vpop.f32.mrf.mxu0
  %v1014 = vadd.f32 %v981, %v1013
  %v1015 = vpop.f32.mrf.mxu0
  %1016 = vdwg.mxu0
  %v1017 = vadd.f32 %v994, %v996
  %v1018 = vadd.f32 %v1017, %v999
  %v1019 = vadd.f32 %v1018, %v1001
  %v1020 = vadd.f32 %v1019, %v1004
  %v1021 = vadd.f32 %v1020, %v1006
  %v1022 = vadd.f32 %v1021, %v1009
  %v1023 = vadd.f32 %v1022, %v1011
  %v1024 = vadd.f32 %v1023, %v1014
  %v1025 = vrot.slane %v1024, 4
  %v1026 = vadd.f32 %v1024, %v1025
  %v1027 = vrot.slane %v1026, 2
  %v1028 = vadd.f32 %v1026, %v1027
  %v1029 = vrot.slane %v1028, 1
  %v1030 = vadd.f32 %v1028, %v1029
  %v1031 = vmul.f32 %v1030, 0.013888889
  %v1032 = vmul.f32 %v994, %v994
  %v1033 = vmul.f32 %v996, %v996
  %v1034 = vmul.f32 %v999, %v999
  %v1035 = vmul.f32 %v1001, %v1001
  %v1036 = vmul.f32 %v1004, %v1004
  %v1037 = vmul.f32 %v1006, %v1006
  %v1038 = vmul.f32 %v1009, %v1009
  %v1039 = vmul.f32 %v1011, %v1011
  %v1040 = vmul.f32 %v1014, %v1014
  %v1041 = vadd.f32 %v1032, %v1033
  %v1042 = vadd.f32 %v1041, %v1034
  %v1043 = vadd.f32 %v1042, %v1035
  %v1044 = vadd.f32 %v1043, %v1036
  %v1045 = vadd.f32 %v1044, %v1037
  %v1046 = vadd.f32 %v1045, %v1038
  %v1047 = vadd.f32 %v1046, %v1039
  %v1048 = vadd.f32 %v1047, %v1040
  %v1049 = vrot.slane %v1048, 4
  %v1050 = vadd.f32 %v1048, %v1049
  %v1051 = vrot.slane %v1050, 2
  %v1052 = vadd.f32 %v1050, %v1051
  %v1053 = vrot.slane %v1052, 1
  %v1054 = vadd.f32 %v1052, %v1053
  %v1055 = vmul.f32 %v1054, 0.013888889
  %v1056 = vmul.f32 %v1031, %v1031
  %v1057 = vsub.f32 %v1055, %v1056
  %v1058 = vmax.f32 %v1057, 0.0
  %v1059 = vsub.f32 %v994, %v1031
  %v1060 = vsub.f32 %v996, %v1031
  %v1061 = vsub.f32 %v999, %v1031
  %v1062 = vsub.f32 %v1001, %v1031
  %v1063 = vsub.f32 %v1004, %v1031
  %v1064 = vsub.f32 %v1006, %v1031
  %v1065 = vsub.f32 %v1009, %v1031
  %v1066 = vsub.f32 %v1011, %v1031
  %v1067 = vsub.f32 %v1014, %v1031
  %v1068 = vadd.f32 %v1058, 1e-05
  %v1069 = vrsqrt.pop %v1068
  %v1070 = vmul.f32 %v1069, %v1068
  %v1071 = vmul.f32 %v1070, %v1069
  %v1072 = vmul.f32 0.5, %v1071
  %v1073 = vsub.f32 1.5, %v1072
  %v1074 = vmul.f32 %v1069, %v1073
  %vm1075 = vweird.f32 %v1068
  %vm1076 = vweird.f32 %v1069
  %vm1077 = vmor %vm1075, %vm1076
  %v1078 = vsel %vm1077, %v1069, %v1074
  %v1079 = vmul.f32 %v1059, %v1078
  %v1080 = vmul.f32 %v1060, %v1078
  %v1081 = vmul.f32 %v1061, %v1078
  %v1082 = vmul.f32 %v1062, %v1078
  %v1083 = vmul.f32 %v1063, %v1078
  %v1084 = vmul.f32 %v1064, %v1078
  %v1085 = vmul.f32 %v1065, %v1078
  %v1086 = vmul.f32 %v1066, %v1078
  %v1087 = vmul.f32 %v1067, %v1078
  %v1088 = vld [vmem:[%s2] sm:$0x1]
  %v1090 = vperm.slane %v1088, 0
  %v1092 = vmul.f32 %v1079, %v1090
  %v1093 = vmul.f32 %v1080, %v1090
  %v1094 = vmul.f32 %v1081, %v1090
  %v1095 = vmul.f32 %v1082, %v1090
  %v1096 = vmul.f32 %v1083, %v1090
  %v1097 = vmul.f32 %v1084, %v1090
  %v1098 = vmul.f32 %v1085, %v1090
  %v1099 = vmul.f32 %v1086, %v1090
  %v1100 = vmul.f32 %v1087, %v1090
  %v1101 = vld [vmem:[%s3] sm:$0x1]
  %v1103 = vperm.slane %v1101, 0
  %v1105 = vadd.f32 %v1092, %v1103
  %v1106 = vadd.f32 %v1093, %v1103
  %v1107 = vadd.f32 %v1094, %v1103
  %v1108 = vadd.f32 %v1095, %v1103
  %v1109 = vadd.f32 %v1096, %v1103
  %v1110 = vadd.f32 %v1097, %v1103
  %v1111 = vadd.f32 %v1098, %v1103
  %v1112 = vadd.f32 %v1099, %v1103
  %v1113 = vadd.f32 %v1100, %v1103
  %vm1114 = vcmp.gt.f32.partialorder %v1105, 0.0
  %vm1115 = vcmp.gt.f32.partialorder %v1106, 0.0
  %vm1116 = vcmp.gt.f32.partialorder %v1107, 0.0
  %vm1117 = vcmp.gt.f32.partialorder %v1108, 0.0
  %vm1118 = vcmp.gt.f32.partialorder %v1109, 0.0
  %vm1119 = vcmp.gt.f32.partialorder %v1110, 0.0
  %vm1120 = vcmp.gt.f32.partialorder %v1111, 0.0
  %vm1121 = vcmp.gt.f32.partialorder %v1112, 0.0
  %vm1122 = vcmp.gt.f32.partialorder %v1113, 0.0
  %v1123 = vmul.f32 %v1105, 0.2
  %v1124 = vmul.f32 %v1106, 0.2
  %v1125 = vmul.f32 %v1107, 0.2
  %v1126 = vmul.f32 %v1108, 0.2
  %v1127 = vmul.f32 %v1109, 0.2
  %v1128 = vmul.f32 %v1110, 0.2
  %v1129 = vmul.f32 %v1111, 0.2
  %v1130 = vmul.f32 %v1112, 0.2
  %v1131 = vmul.f32 %v1113, 0.2
  %v1132 = vsel %vm1114, %v1105, %v1123
  %v1133 = vsel %vm1115, %v1106, %v1124
  %v1134 = vsel %vm1116, %v1107, %v1125
  %v1135 = vsel %vm1117, %v1108, %v1126
  %v1136 = vsel %vm1118, %v1109, %v1127
  %v1137 = vsel %vm1119, %v1110, %v1128
  %v1138 = vsel %vm1120, %v1111, %v1129
  %v1139 = vsel %vm1121, %v1112, %v1130
  %v1140 = vsel %vm1122, %v1113, %v1131
  %v1141 = vpack.c.bf16 %v1132, %v1132
  %v1142 = vpack.c.bf16 %v1133, %v1133
  %v1143 = vpack.c.bf16 %v1134, %v1134
  %v1144 = vpack.c.bf16 %v1135, %v1135
  %v1145 = vpack.c.bf16 %v1136, %v1136
  %v1146 = vpack.c.bf16 %v1137, %v1137
  %v1147 = vpack.c.bf16 %v1138, %v1138
  %v1148 = vpack.c.bf16 %v1139, %v1139
  %v1149 = vpack.c.bf16 %v1140, %v1140
  %1150 = vst [vmem:[%s4] sm:$0xf] %v1141
  %1151 = vst [vmem:[%s4 + $0x4] sm:$0xf] %v1142
  %1152 = vst [vmem:[%s4 + $0x8] sm:$0xf] %v1143
  %1153 = vst [vmem:[%s4 + $0xc] sm:$0xf] %v1144
  %1154 = vst [vmem:[%s4 + $0x10] sm:$0xf] %v1145
  %1155 = vst [vmem:[%s4 + $0x14] sm:$0xf] %v1146
  %1156 = vst [vmem:[%s4 + $0x18] sm:$0xf] %v1147
  %1157 = vst [vmem:[%s4 + $0x1c] sm:$0xf] %v1148
  %1158 = vst [vmem:[%s4 + $0x20] sm:$0xf] %v1149
  // Predicated region
  $region18: #{discriminator_forward.4} parent=0 // pred_check
    _
  $region19: #{discriminator_forward.4} parent=0 // pred_check_branch
    %1160 = sbr.rel (0) target = $region21
  $region20: #{discriminator_forward.4} parent=0 // pred_region
    _
  $region21: #{discriminator_forward.4} parent=0 // pred_fallthru
    _
  // Predicated region
  $region22: #{discriminator_forward.4} parent=0 // pred_check
    _
  $region23: #{discriminator_forward.4} parent=0 // pred_check_branch
    %1162 = sbr.rel (0) target = $region25
  $region24: #{discriminator_forward.4} parent=0 // pred_region
    _
  $region25: #{discriminator_forward.4} parent=0 // pred_fallthru
    _

// kernel: tile.9
$region0: #{tile.9}
  %s0 = inlined_call_operand.vmem [shape: f32[2,9,256], index: 0, kind: input, shape index: {}]
  %s1 = inlined_call_operand.vmem [shape: f32[18,256], index: 1, kind: output, shape index: {}]
  %v2 = vld [vmem:[%s0] sm:$0xff]
  %3 = vst [vmem:[%s1] sm:$0xff] %v2
  %s4 = scalar_lea.vmem %s0, 8
  %v5 = vld [vmem:[%s4] sm:$0xff]
  %s6 = scalar_lea.vmem %s1, 8
  %7 = vst [vmem:[%s6] sm:$0xff] %v5
  %s8 = scalar_lea.vmem %s0, 16
  %v9 = vld [vmem:[%s8] ss:$8 sm:$0x7]
  %s10 = scalar_lea.vmem %s1, 16
  %11 = vst [vmem:[%s10] ss:$8 sm:$0x3] %v9
  %s12 = scalar_lea.vmem %s1, 15
  %13 = vst [vmem:[%s12] sm:$0x4] %v9
  %s14 = scalar_lea.vmem %s0, 33
  %v15 = vld [vmem:[%s14] sm:$0xff]
  %s16 = scalar_lea.vmem %s1, 18
  %17 = vst [vmem:[%s16] sm:$0x3f] %v15
  %s18 = scalar_lea.vmem %s1, 74
  %19 = vst [vmem:[%s18] ss:$-7 sm:$0xc0] %v15
  %s20 = scalar_lea.vmem %s0, 41
  %v21 = vld [vmem:[%s20] sm:$0xff]
  %s22 = scalar_lea.vmem %s1, 26
  %23 = vst [vmem:[%s22] sm:$0x3f] %v21
  %s24 = scalar_lea.vmem %s1, 82
  %25 = vst [vmem:[%s24] ss:$-7 sm:$0xc0] %v21
  %s26 = scalar_lea.vmem %s0, 56
  %v27 = vld [vmem:[%s26] sm:$0x1]
  %s28 = scalar_lea.vmem %s1, 41
  %29 = vst [vmem:[%s28] sm:$0x1] %v27

// kernel: discriminator_forward.5
$region0: #{discriminator_forward.5}
  #allocation0 [shape = 'u32[]', space=smem, size = 0x4, offset = 0x4, fixed_abs, tag = 'smem constant byte address 0x4 - core index']
  #allocation1 [shape = 'u32[72,128]{1,0:T(1,128)}', space=vmem, size = 0x9000, scoped, tag = 'internal scratch']
  %s0 = inlined_call_operand.vmem [shape: bf16[24,2048], index: 0, kind: input, shape index: {}]
  %s1 = inlined_call_operand.vmem [shape: bf16[2048,256], index: 1, kind: input, shape index: {}]
  %s2 = inlined_call_operand.vmem [shape: f32[1,256], index: 2, kind: input, shape index: {}]
  %s3 = inlined_call_operand.vmem [shape: f32[1,256], index: 3, kind: input, shape index: {}]
  %s4 = inlined_call_operand.vmem [shape: f32[24,256], index: 4, kind: input, shape index: {}]
  %s5 = inlined_call_operand.vmem [shape: f32[2,24], index: 5, kind: input, shape index: {}]
  %s6 = inlined_call_operand.vmem [shape: f32[2,1], index: 6, kind: output, shape index: {}]
  %s7 = sld [smem:[#allocation0]]
  $region34: #{discriminator_forward.5} parent=0
    _
  %s9 = ssub.s32 1, %s7
  %s10 = scalar_select 0, %s9, %s7
  // Predicated region
  $region2: #{discriminator_forward.5} parent=0 // pred_check
    _
  $region3: #{discriminator_forward.5} parent=0 // pred_check_branch
    %12 = sbr.rel (0) target = $region5
  $region4: #{discriminator_forward.5} parent=0 // pred_region
    _
  $region5: #{discriminator_forward.5} parent=0 // pred_fallthru
    _
  // Predicated region
  $region6: #{discriminator_forward.5} parent=0 // pred_check
    _
  $region7: #{discriminator_forward.5} parent=0 // pred_check_branch
    %14 = sbr.rel (0) target = $region9
  $region8: #{discriminator_forward.5} parent=0 // pred_region
    _
  $region9: #{discriminator_forward.5} parent=0 // pred_fallthru
    _
  // Predicated region
  $region10: #{discriminator_forward.5} parent=0 // pred_check
    _
  $region11: #{discriminator_forward.5} parent=0 // pred_check_branch
    %16 = sbr.rel (0) target = $region13
  $region12: #{discriminator_forward.5} parent=0 // pred_region
    _
  $region13: #{discriminator_forward.5} parent=0 // pred_fallthru
    _
  // Predicated region
  $region14: #{discriminator_forward.5} parent=0 // pred_check
    _
  $region15: #{discriminator_forward.5} parent=0 // pred_check_branch
    %18 = sbr.rel (0) target = $region17
  $region16: #{discriminator_forward.5} parent=0 // pred_region
    _
  $region17: #{discriminator_forward.5} parent=0 // pred_fallthru
    _
  // Predicated region
  $region18: #{discriminator_forward.5} parent=0 // pred_check
    _
  $region19: #{discriminator_forward.5} parent=0 // pred_check_branch
    %20 = sbr.rel (0) target = $region21
  $region20: #{discriminator_forward.5} parent=0 // pred_region
    _
  $region21: #{discriminator_forward.5} parent=0 // pred_fallthru
    _
  // Predicated region
  $region22: #{discriminator_forward.5} parent=0 // pred_check
    _
  $region23: #{discriminator_forward.5} parent=0 // pred_check_branch
    %22 = sbr.rel (0) target = $region25
  $region24: #{discriminator_forward.5} parent=0 // pred_region
    _
  $region25: #{discriminator_forward.5} parent=0 // pred_fallthru
    _
  %v23 = vld [vmem:[%s0] sm:$0xff]
  %v24 = vld [vmem:[%s0 + $0x8] sm:$0xff]
  %v25 = vld [vmem:[%s0 + $0x10] sm:$0xff]
  %v26 = vld [vmem:[%s0 + $0x18] sm:$0xff]
  %v27 = vld [vmem:[%s0 + $0x20] sm:$0xff]
  %v28 = vld [vmem:[%s0 + $0x28] sm:$0xff]
  %v29 = vld [vmem:[%s0 + $0x30] sm:$0xff]
  %v30 = vld [vmem:[%s0 + $0x38] sm:$0xff]
  %v31 = vld [vmem:[%s0 + $0x40] sm:$0xff]
  %v32 = vld [vmem:[%s0 + $0x48] sm:$0xff]
  %v33 = vld [vmem:[%s0 + $0x50] sm:$0xff]
  %v34 = vld [vmem:[%s0 + $0x58] sm:$0xff]
  %v35 = vld [vmem:[%s0 + $0x60] sm:$0xff]
  %v36 = vld [vmem:[%s0 + $0x68] sm:$0xff]
  %v37 = vld [vmem:[%s0 + $0x70] sm:$0xff]
  %v38 = vld [vmem:[%s0 + $0x78] sm:$0xff]
  %v39 = vld [vmem:[%s0 + $0x80] sm:$0xff]
  %v40 = vld [vmem:[%s0 + $0x88] sm:$0xff]
  %v41 = vld [vmem:[%s0 + $0x90] sm:$0xff]
  %v42 = vld [vmem:[%s0 + $0x98] sm:$0xff]
  %v43 = vld [vmem:[%s0 + $0xa0] sm:$0xff]
  %v44 = vld [vmem:[%s0 + $0xa8] sm:$0xff]
  %v45 = vld [vmem:[%s0 + $0xb0] sm:$0xff]
  %v46 = vld [vmem:[%s0 + $0xb8] sm:$0xff]
  %v47 = vld [vmem:[%s1] sm:$0xff]
  %v48 = vld [vmem:[%s1 + $0x8] sm:$0xff]
  %v49 = vld [vmem:[%s1 + $0x10] sm:$0xff]
  %v50 = vld [vmem:[%s1 + $0x18] sm:$0xff]
  %v51 = vld [vmem:[%s1 + $0x20] sm:$0xff]
  %v52 = vld [vmem:[%s1 + $0x28] sm:$0xff]
  %v53 = vld [vmem:[%s1 + $0x30] sm:$0xff]
  %v54 = vld [vmem:[%s1 + $0x38] sm:$0xff]
  %v55 = vld [vmem:[%s1 + $0x40] sm:$0xff]
  %v56 = vld [vmem:[%s1 + $0x48] sm:$0xff]
  %v57 = vld [vmem:[%s1 + $0x50] sm:$0xff]
  %v58 = vld [vmem:[%s1 + $0x58] sm:$0xff]
  %v59 = vld [vmem:[%s1 + $0x60] sm:$0xff]
  %v60 = vld [vmem:[%s1 + $0x68] sm:$0xff]
  %v61 = vld [vmem:[%s1 + $0x70] sm:$0xff]
  %v62 = vld [vmem:[%s1 + $0x78] sm:$0xff]
  %v63 = vld [vmem:[%s1 + $0x80] sm:$0xff]
  %v64 = vld [vmem:[%s1 + $0x88] sm:$0xff]
  %v65 = vld [vmem:[%s1 + $0x90] sm:$0xff]
  %v66 = vld [vmem:[%s1 + $0x98] sm:$0xff]
  %v67 = vld [vmem:[%s1 + $0xa0] sm:$0xff]
  %v68 = vld [vmem:[%s1 + $0xa8] sm:$0xff]
  %v69 = vld [vmem:[%s1 + $0xb0] sm:$0xff]
  %v70 = vld [vmem:[%s1 + $0xb8] sm:$0xff]
  %v71 = vld [vmem:[%s1 + $0xc0] sm:$0xff]
  %v72 = vld [vmem:[%s1 + $0xc8] sm:$0xff]
  %v73 = vld [vmem:[%s1 + $0xd0] sm:$0xff]
  %v74 = vld [vmem:[%s1 + $0xd8] sm:$0xff]
  %v75 = vld [vmem:[%s1 + $0xe0] sm:$0xff]
  %v76 = vld [vmem:[%s1 + $0xe8] sm:$0xff]
  %v77 = vld [vmem:[%s1 + $0xf0] sm:$0xff]
  %v78 = vld [vmem:[%s1 + $0xf8] sm:$0xff]
  %v79 = vld [vmem:[%s1 + $0x100] sm:$0xff]
  %v80 = vld [vmem:[%s1 + $0x108] sm:$0xff]
  %v81 = vld [vmem:[%s1 + $0x110] sm:$0xff]
  %v82 = vld [vmem:[%s1 + $0x118] sm:$0xff]
  %v83 = vld [vmem:[%s1 + $0x120] sm:$0xff]
  %v84 = vld [vmem:[%s1 + $0x128] sm:$0xff]
  %v85 = vld [vmem:[%s1 + $0x130] sm:$0xff]
  %v86 = vld [vmem:[%s1 + $0x138] sm:$0xff]
  %v87 = vld [vmem:[%s1 + $0x140] sm:$0xff]
  %v88 = vld [vmem:[%s1 + $0x148] sm:$0xff]
  %v89 = vld [vmem:[%s1 + $0x150] sm:$0xff]
  %v90 = vld [vmem:[%s1 + $0x158] sm:$0xff]
  %v91 = vld [vmem:[%s1 + $0x160] sm:$0xff]
  %v92 = vld [vmem:[%s1 + $0x168] sm:$0xff]
  %v93 = vld [vmem:[%s1 + $0x170] sm:$0xff]
  %v94 = vld [vmem:[%s1 + $0x178] sm:$0xff]
  %v95 = vld [vmem:[%s1 + $0x180] sm:$0xff]
  %v96 = vld [vmem:[%s1 + $0x188] sm:$0xff]
  %v97 = vld [vmem:[%s1 + $0x190] sm:$0xff]
  %v98 = vld [vmem:[%s1 + $0x198] sm:$0xff]
  %v99 = vld [vmem:[%s1 + $0x1a0] sm:$0xff]
  %v100 = vld [vmem:[%s1 + $0x1a8] sm:$0xff]
  %v101 = vld [vmem:[%s1 + $0x1b0] sm:$0xff]
  %v102 = vld [vmem:[%s1 + $0x1b8] sm:$0xff]
  %v103 = vld [vmem:[%s1 + $0x1c0] sm:$0xff]
  %v104 = vld [vmem:[%s1 + $0x1c8] sm:$0xff]
  %v105 = vld [vmem:[%s1 + $0x1d0] sm:$0xff]
  %v106 = vld [vmem:[%s1 + $0x1d8] sm:$0xff]
  %v107 = vld [vmem:[%s1 + $0x1e0] sm:$0xff]
  %v108 = vld [vmem:[%s1 + $0x1e8] sm:$0xff]
  %v109 = vld [vmem:[%s1 + $0x1f0] sm:$0xff]
  %v110 = vld [vmem:[%s1 + $0x1f8] sm:$0xff]
  %v111 = vld [vmem:[%s1 + $0x200] sm:$0xff]
  %v112 = vld [vmem:[%s1 + $0x208] sm:$0xff]
  %v113 = vld [vmem:[%s1 + $0x210] sm:$0xff]
  %v114 = vld [vmem:[%s1 + $0x218] sm:$0xff]
  %v115 = vld [vmem:[%s1 + $0x220] sm:$0xff]
  %v116 = vld [vmem:[%s1 + $0x228] sm:$0xff]
  %v117 = vld [vmem:[%s1 + $0x230] sm:$0xff]
  %v118 = vld [vmem:[%s1 + $0x238] sm:$0xff]
  %v119 = vld [vmem:[%s1 + $0x240] sm:$0xff]
  %v120 = vld [vmem:[%s1 + $0x248] sm:$0xff]
  %v121 = vld [vmem:[%s1 + $0x250] sm:$0xff]
  %v122 = vld [vmem:[%s1 + $0x258] sm:$0xff]
  %v123 = vld [vmem:[%s1 + $0x260] sm:$0xff]
  %v124 = vld [vmem:[%s1 + $0x268] sm:$0xff]
  %v125 = vld [vmem:[%s1 + $0x270] sm:$0xff]
  %v126 = vld [vmem:[%s1 + $0x278] sm:$0xff]
  %v127 = vld [vmem:[%s1 + $0x280] sm:$0xff]
  %v128 = vld [vmem:[%s1 + $0x288] sm:$0xff]
  %v129 = vld [vmem:[%s1 + $0x290] sm:$0xff]
  %v130 = vld [vmem:[%s1 + $0x298] sm:$0xff]
  %v131 = vld [vmem:[%s1 + $0x2a0] sm:$0xff]
  %v132 = vld [vmem:[%s1 + $0x2a8] sm:$0xff]
  %v133 = vld [vmem:[%s1 + $0x2b0] sm:$0xff]
  %v134 = vld [vmem:[%s1 + $0x2b8] sm:$0xff]
  %v135 = vld [vmem:[%s1 + $0x2c0] sm:$0xff]
  %v136 = vld [vmem:[%s1 + $0x2c8] sm:$0xff]
  %v137 = vld [vmem:[%s1 + $0x2d0] sm:$0xff]
  %v138 = vld [vmem:[%s1 + $0x2d8] sm:$0xff]
  %v139 = vld [vmem:[%s1 + $0x2e0] sm:$0xff]
  %v140 = vld [vmem:[%s1 + $0x2e8] sm:$0xff]
  %v141 = vld [vmem:[%s1 + $0x2f0] sm:$0xff]
  %v142 = vld [vmem:[%s1 + $0x2f8] sm:$0xff]
  %v143 = vld [vmem:[%s1 + $0x300] sm:$0xff]
  %v144 = vld [vmem:[%s1 + $0x308] sm:$0xff]
  %v145 = vld [vmem:[%s1 + $0x310] sm:$0xff]
  %v146 = vld [vmem:[%s1 + $0x318] sm:$0xff]
  %v147 = vld [vmem:[%s1 + $0x320] sm:$0xff]
  %v148 = vld [vmem:[%s1 + $0x328] sm:$0xff]
  %v149 = vld [vmem:[%s1 + $0x330] sm:$0xff]
  %v150 = vld [vmem:[%s1 + $0x338] sm:$0xff]
  %v151 = vld [vmem:[%s1 + $0x340] sm:$0xff]
  %v152 = vld [vmem:[%s1 + $0x348] sm:$0xff]
  %v153 = vld [vmem:[%s1 + $0x350] sm:$0xff]
  %v154 = vld [vmem:[%s1 + $0x358] sm:$0xff]
  %v155 = vld [vmem:[%s1 + $0x360] sm:$0xff]
  %v156 = vld [vmem:[%s1 + $0x368] sm:$0xff]
  %v157 = vld [vmem:[%s1 + $0x370] sm:$0xff]
  %v158 = vld [vmem:[%s1 + $0x378] sm:$0xff]
  %v159 = vld [vmem:[%s1 + $0x380] sm:$0xff]
  %v160 = vld [vmem:[%s1 + $0x388] sm:$0xff]
  %v161 = vld [vmem:[%s1 + $0x390] sm:$0xff]
  %v162 = vld [vmem:[%s1 + $0x398] sm:$0xff]
  %v163 = vld [vmem:[%s1 + $0x3a0] sm:$0xff]
  %v164 = vld [vmem:[%s1 + $0x3a8] sm:$0xff]
  %v165 = vld [vmem:[%s1 + $0x3b0] sm:$0xff]
  %v166 = vld [vmem:[%s1 + $0x3b8] sm:$0xff]
  %v167 = vld [vmem:[%s1 + $0x3c0] sm:$0xff]
  %v168 = vld [vmem:[%s1 + $0x3c8] sm:$0xff]
  %v169 = vld [vmem:[%s1 + $0x3d0] sm:$0xff]
  %v170 = vld [vmem:[%s1 + $0x3d8] sm:$0xff]
  %v171 = vld [vmem:[%s1 + $0x3e0] sm:$0xff]
  %v172 = vld [vmem:[%s1 + $0x3e8] sm:$0xff]
  %v173 = vld [vmem:[%s1 + $0x3f0] sm:$0xff]
  %v174 = vld [vmem:[%s1 + $0x3f8] sm:$0xff]
  %v175 = vld [vmem:[%s1 + $0x400] sm:$0xff]
  %v176 = vld [vmem:[%s1 + $0x408] sm:$0xff]
  %v177 = vld [vmem:[%s1 + $0x410] sm:$0xff]
  %v178 = vld [vmem:[%s1 + $0x418] sm:$0xff]
  %v179 = vld [vmem:[%s1 + $0x420] sm:$0xff]
  %v180 = vld [vmem:[%s1 + $0x428] sm:$0xff]
  %v181 = vld [vmem:[%s1 + $0x430] sm:$0xff]
  %v182 = vld [vmem:[%s1 + $0x438] sm:$0xff]
  %v183 = vld [vmem:[%s1 + $0x440] sm:$0xff]
  %v184 = vld [vmem:[%s1 + $0x448] sm:$0xff]
  %v185 = vld [vmem:[%s1 + $0x450] sm:$0xff]
  %v186 = vld [vmem:[%s1 + $0x458] sm:$0xff]
  %v187 = vld [vmem:[%s1 + $0x460] sm:$0xff]
  %v188 = vld [vmem:[%s1 + $0x468] sm:$0xff]
  %v189 = vld [vmem:[%s1 + $0x470] sm:$0xff]
  %v190 = vld [vmem:[%s1 + $0x478] sm:$0xff]
  %v191 = vld [vmem:[%s1 + $0x480] sm:$0xff]
  %v192 = vld [vmem:[%s1 + $0x488] sm:$0xff]
  %v193 = vld [vmem:[%s1 + $0x490] sm:$0xff]
  %v194 = vld [vmem:[%s1 + $0x498] sm:$0xff]
  %v195 = vld [vmem:[%s1 + $0x4a0] sm:$0xff]
  %v196 = vld [vmem:[%s1 + $0x4a8] sm:$0xff]
  %v197 = vld [vmem:[%s1 + $0x4b0] sm:$0xff]
  %v198 = vld [vmem:[%s1 + $0x4b8] sm:$0xff]
  %v199 = vld [vmem:[%s1 + $0x4c0] sm:$0xff]
  %v200 = vld [vmem:[%s1 + $0x4c8] sm:$0xff]
  %v201 = vld [vmem:[%s1 + $0x4d0] sm:$0xff]
  %v202 = vld [vmem:[%s1 + $0x4d8] sm:$0xff]
  %v203 = vld [vmem:[%s1 + $0x4e0] sm:$0xff]
  %v204 = vld [vmem:[%s1 + $0x4e8] sm:$0xff]
  %v205 = vld [vmem:[%s1 + $0x4f0] sm:$0xff]
  %v206 = vld [vmem:[%s1 + $0x4f8] sm:$0xff]
  %v207 = vld [vmem:[%s1 + $0x500] sm:$0xff]
  %v208 = vld [vmem:[%s1 + $0x508] sm:$0xff]
  %v209 = vld [vmem:[%s1 + $0x510] sm:$0xff]
  %v210 = vld [vmem:[%s1 + $0x518] sm:$0xff]
  %v211 = vld [vmem:[%s1 + $0x520] sm:$0xff]
  %v212 = vld [vmem:[%s1 + $0x528] sm:$0xff]
  %v213 = vld [vmem:[%s1 + $0x530] sm:$0xff]
  %v214 = vld [vmem:[%s1 + $0x538] sm:$0xff]
  %v215 = vld [vmem:[%s1 + $0x540] sm:$0xff]
  %v216 = vld [vmem:[%s1 + $0x548] sm:$0xff]
  %v217 = vld [vmem:[%s1 + $0x550] sm:$0xff]
  %v218 = vld [vmem:[%s1 + $0x558] sm:$0xff]
  %v219 = vld [vmem:[%s1 + $0x560] sm:$0xff]
  %v220 = vld [vmem:[%s1 + $0x568] sm:$0xff]
  %v221 = vld [vmem:[%s1 + $0x570] sm:$0xff]
  %v222 = vld [vmem:[%s1 + $0x578] sm:$0xff]
  %v223 = vld [vmem:[%s1 + $0x580] sm:$0xff]
  %v224 = vld [vmem:[%s1 + $0x588] sm:$0xff]
  %v225 = vld [vmem:[%s1 + $0x590] sm:$0xff]
  %v226 = vld [vmem:[%s1 + $0x598] sm:$0xff]
  %v227 = vld [vmem:[%s1 + $0x5a0] sm:$0xff]
  %v228 = vld [vmem:[%s1 + $0x5a8] sm:$0xff]
  %v229 = vld [vmem:[%s1 + $0x5b0] sm:$0xff]
  %v230 = vld [vmem:[%s1 + $0x5b8] sm:$0xff]
  %v231 = vld [vmem:[%s1 + $0x5c0] sm:$0xff]
  %v232 = vld [vmem:[%s1 + $0x5c8] sm:$0xff]
  %v233 = vld [vmem:[%s1 + $0x5d0] sm:$0xff]
  %v234 = vld [vmem:[%s1 + $0x5d8] sm:$0xff]
  %v235 = vld [vmem:[%s1 + $0x5e0] sm:$0xff]
  %v236 = vld [vmem:[%s1 + $0x5e8] sm:$0xff]
  %v237 = vld [vmem:[%s1 + $0x5f0] sm:$0xff]
  %v238 = vld [vmem:[%s1 + $0x5f8] sm:$0xff]
  %v239 = vld [vmem:[%s1 + $0x600] sm:$0xff]
  %v240 = vld [vmem:[%s1 + $0x608] sm:$0xff]
  %v241 = vld [vmem:[%s1 + $0x610] sm:$0xff]
  %v242 = vld [vmem:[%s1 + $0x618] sm:$0xff]
  %v243 = vld [vmem:[%s1 + $0x620] sm:$0xff]
  %v244 = vld [vmem:[%s1 + $0x628] sm:$0xff]
  %v245 = vld [vmem:[%s1 + $0x630] sm:$0xff]
  %v246 = vld [vmem:[%s1 + $0x638] sm:$0xff]
  %v247 = vld [vmem:[%s1 + $0x640] sm:$0xff]
  %v248 = vld [vmem:[%s1 + $0x648] sm:$0xff]
  %v249 = vld [vmem:[%s1 + $0x650] sm:$0xff]
  %v250 = vld [vmem:[%s1 + $0x658] sm:$0xff]
  %v251 = vld [vmem:[%s1 + $0x660] sm:$0xff]
  %v252 = vld [vmem:[%s1 + $0x668] sm:$0xff]
  %v253 = vld [vmem:[%s1 + $0x670] sm:$0xff]
  %v254 = vld [vmem:[%s1 + $0x678] sm:$0xff]
  %v255 = vld [vmem:[%s1 + $0x680] sm:$0xff]
  %v256 = vld [vmem:[%s1 + $0x688] sm:$0xff]
  %v257 = vld [vmem:[%s1 + $0x690] sm:$0xff]
  %v258 = vld [vmem:[%s1 + $0x698] sm:$0xff]
  %v259 = vld [vmem:[%s1 + $0x6a0] sm:$0xff]
  %v260 = vld [vmem:[%s1 + $0x6a8] sm:$0xff]
  %v261 = vld [vmem:[%s1 + $0x6b0] sm:$0xff]
  %v262 = vld [vmem:[%s1 + $0x6b8] sm:$0xff]
  %v263 = vld [vmem:[%s1 + $0x6c0] sm:$0xff]
  %v264 = vld [vmem:[%s1 + $0x6c8] sm:$0xff]
  %v265 = vld [vmem:[%s1 + $0x6d0] sm:$0xff]
  %v266 = vld [vmem:[%s1 + $0x6d8] sm:$0xff]
  %v267 = vld [vmem:[%s1 + $0x6e0] sm:$0xff]
  %v268 = vld [vmem:[%s1 + $0x6e8] sm:$0xff]
  %v269 = vld [vmem:[%s1 + $0x6f0] sm:$0xff]
  %v270 = vld [vmem:[%s1 + $0x6f8] sm:$0xff]
  %v271 = vld [vmem:[%s1 + $0x700] sm:$0xff]
  %v272 = vld [vmem:[%s1 + $0x708] sm:$0xff]
  %v273 = vld [vmem:[%s1 + $0x710] sm:$0xff]
  %v274 = vld [vmem:[%s1 + $0x718] sm:$0xff]
  %v275 = vld [vmem:[%s1 + $0x720] sm:$0xff]
  %v276 = vld [vmem:[%s1 + $0x728] sm:$0xff]
  %v277 = vld [vmem:[%s1 + $0x730] sm:$0xff]
  %v278 = vld [vmem:[%s1 + $0x738] sm:$0xff]
  %v279 = vld [vmem:[%s1 + $0x740] sm:$0xff]
  %v280 = vld [vmem:[%s1 + $0x748] sm:$0xff]
  %v281 = vld [vmem:[%s1 + $0x750] sm:$0xff]
  %v282 = vld [vmem:[%s1 + $0x758] sm:$0xff]
  %v283 = vld [vmem:[%s1 + $0x760] sm:$0xff]
  %v284 = vld [vmem:[%s1 + $0x768] sm:$0xff]
  %v285 = vld [vmem:[%s1 + $0x770] sm:$0xff]
  %v286 = vld [vmem:[%s1 + $0x778] sm:$0xff]
  %v287 = vld [vmem:[%s1 + $0x780] sm:$0xff]
  %v288 = vld [vmem:[%s1 + $0x788] sm:$0xff]
  %v289 = vld [vmem:[%s1 + $0x790] sm:$0xff]
  %v290 = vld [vmem:[%s1 + $0x798] sm:$0xff]
  %v291 = vld [vmem:[%s1 + $0x7a0] sm:$0xff]
  %v292 = vld [vmem:[%s1 + $0x7a8] sm:$0xff]
  %v293 = vld [vmem:[%s1 + $0x7b0] sm:$0xff]
  %v294 = vld [vmem:[%s1 + $0x7b8] sm:$0xff]
  %v295 = vld [vmem:[%s1 + $0x7c0] sm:$0xff]
  %v296 = vld [vmem:[%s1 + $0x7c8] sm:$0xff]
  %v297 = vld [vmem:[%s1 + $0x7d0] sm:$0xff]
  %v298 = vld [vmem:[%s1 + $0x7d8] sm:$0xff]
  %v299 = vld [vmem:[%s1 + $0x7e0] sm:$0xff]
  %v300 = vld [vmem:[%s1 + $0x7e8] sm:$0xff]
  %v301 = vld [vmem:[%s1 + $0x7f0] sm:$0xff]
  %v302 = vld [vmem:[%s1 + $0x7f8] sm:$0xff]
  %v327 = vunpack.c.l.b16 %v23
  %v328 = vunpack.c.h.b16 %v23
  %v329 = vunpack.c.l.b16 %v24
  %v330 = vunpack.c.h.b16 %v24
  %v331 = vunpack.c.l.b16 %v25
  %v332 = vunpack.c.h.b16 %v25
  %v333 = vunpack.c.l.b16 %v26
  %v334 = vunpack.c.h.b16 %v26
  %v335 = vunpack.c.l.b16 %v27
  %v336 = vunpack.c.h.b16 %v27
  %v337 = vunpack.c.l.b16 %v28
  %v338 = vunpack.c.h.b16 %v28
  %v339 = vunpack.c.l.b16 %v29
  %v340 = vunpack.c.h.b16 %v29
  %v341 = vunpack.c.l.b16 %v30
  %v342 = vunpack.c.h.b16 %v30
  %v343 = vunpack.c.l.b16 %v31
  %v344 = vunpack.c.h.b16 %v31
  %v345 = vunpack.c.l.b16 %v32
  %v346 = vunpack.c.h.b16 %v32
  %v347 = vunpack.c.l.b16 %v33
  %v348 = vunpack.c.h.b16 %v33
  %v349 = vunpack.c.l.b16 %v34
  %v350 = vunpack.c.h.b16 %v34
  %v351 = vunpack.c.l.b16 %v35
  %v352 = vunpack.c.h.b16 %v35
  %v353 = vunpack.c.l.b16 %v36
  %v354 = vunpack.c.h.b16 %v36
  %v355 = vunpack.c.l.b16 %v37
  %v356 = vunpack.c.h.b16 %v37
  %v357 = vunpack.c.l.b16 %v38
  %v358 = vunpack.c.h.b16 %v38
  %v359 = vunpack.c.l.b16 %v39
  %v360 = vunpack.c.h.b16 %v39
  %v361 = vunpack.c.l.b16 %v40
  %v362 = vunpack.c.h.b16 %v40
  %v363 = vunpack.c.l.b16 %v41
  %v364 = vunpack.c.h.b16 %v41
  %v365 = vunpack.c.l.b16 %v42
  %v366 = vunpack.c.h.b16 %v42
  %v367 = vunpack.c.l.b16 %v43
  %v368 = vunpack.c.h.b16 %v43
  %v369 = vunpack.c.l.b16 %v44
  %v370 = vunpack.c.h.b16 %v44
  %v371 = vunpack.c.l.b16 %v45
  %v372 = vunpack.c.h.b16 %v45
  %v373 = vunpack.c.l.b16 %v46
  %v374 = vunpack.c.h.b16 %v46
  %v375 = vpack.c.b16 %v343, %v327
  %v376 = vpack.c.b16 %v344, %v328
  %v377 = vpack.c.b16 %v345, %v329
  %v378 = vpack.c.b16 %v346, %v330
  %v379 = vpack.c.b16 %v347, %v331
  %v380 = vpack.c.b16 %v348, %v332
  %v381 = vpack.c.b16 %v349, %v333
  %v382 = vpack.c.b16 %v350, %v334
  %v383 = vpack.c.b16 %v351, %v335
  %v384 = vpack.c.b16 %v352, %v336
  %v385 = vpack.c.b16 %v353, %v337
  %v386 = vpack.c.b16 %v354, %v338
  %v387 = vpack.c.b16 %v355, %v339
  %v388 = vpack.c.b16 %v356, %v340
  %v389 = vpack.c.b16 %v357, %v341
  %v390 = vpack.c.b16 %v358, %v342
  %v391 = vpack.c.b16 %v359, %v359
  %v392 = vpack.c.b16 %v360, %v360
  %v393 = vpack.c.b16 %v361, %v361
  %v394 = vpack.c.b16 %v362, %v362
  %v395 = vpack.c.b16 %v363, %v363
  %v396 = vpack.c.b16 %v364, %v364
  %v397 = vpack.c.b16 %v365, %v365
  %v398 = vpack.c.b16 %v366, %v366
  %v399 = vpack.c.b16 %v367, %v367
  %v400 = vpack.c.b16 %v368, %v368
  %v401 = vpack.c.b16 %v369, %v369
  %v402 = vpack.c.b16 %v370, %v370
  %v403 = vpack.c.b16 %v371, %v371
  %v404 = vpack.c.b16 %v372, %v372
  %v405 = vpack.c.b16 %v373, %v373
  %v406 = vpack.c.b16 %v374, %v374
  %v695 = vunpack.c.l.b16 %v47
  %v696 = vunpack.c.h.b16 %v47
  %v697 = vunpack.c.l.b16 %v48
  %v698 = vunpack.c.h.b16 %v48
  %v699 = vunpack.c.l.b16 %v49
  %v700 = vunpack.c.h.b16 %v49
  %v701 = vunpack.c.l.b16 %v50
  %v702 = vunpack.c.h.b16 %v50
  %v703 = vunpack.c.l.b16 %v51
  %v704 = vunpack.c.h.b16 %v51
  %v705 = vunpack.c.l.b16 %v52
  %v706 = vunpack.c.h.b16 %v52
  %v707 = vunpack.c.l.b16 %v53
  %v708 = vunpack.c.h.b16 %v53
  %v709 = vunpack.c.l.b16 %v54
  %v710 = vunpack.c.h.b16 %v54
  %v711 = vunpack.c.l.b16 %v55
  %v712 = vunpack.c.h.b16 %v55
  %v713 = vunpack.c.l.b16 %v56
  %v714 = vunpack.c.h.b16 %v56
  %v715 = vunpack.c.l.b16 %v57
  %v716 = vunpack.c.h.b16 %v57
  %v717 = vunpack.c.l.b16 %v58
  %v718 = vunpack.c.h.b16 %v58
  %v719 = vunpack.c.l.b16 %v59
  %v720 = vunpack.c.h.b16 %v59
  %v721 = vunpack.c.l.b16 %v60
  %v722 = vunpack.c.h.b16 %v60
  %v723 = vunpack.c.l.b16 %v61
  %v724 = vunpack.c.h.b16 %v61
  %v725 = vunpack.c.l.b16 %v62
  %v726 = vunpack.c.h.b16 %v62
  %v727 = vunpack.c.l.b16 %v63
  %v728 = vunpack.c.h.b16 %v63
  %v729 = vunpack.c.l.b16 %v64
  %v730 = vunpack.c.h.b16 %v64
  %v731 = vunpack.c.l.b16 %v65
  %v732 = vunpack.c.h.b16 %v65
  %v733 = vunpack.c.l.b16 %v66
  %v734 = vunpack.c.h.b16 %v66
  %v735 = vunpack.c.l.b16 %v67
  %v736 = vunpack.c.h.b16 %v67
  %v737 = vunpack.c.l.b16 %v68
  %v738 = vunpack.c.h.b16 %v68
  %v739 = vunpack.c.l.b16 %v69
  %v740 = vunpack.c.h.b16 %v69
  %v741 = vunpack.c.l.b16 %v70
  %v742 = vunpack.c.h.b16 %v70
  %v743 = vunpack.c.l.b16 %v71
  %v744 = vunpack.c.h.b16 %v71
  %v745 = vunpack.c.l.b16 %v72
  %v746 = vunpack.c.h.b16 %v72
  %v747 = vunpack.c.l.b16 %v73
  %v748 = vunpack.c.h.b16 %v73
  %v749 = vunpack.c.l.b16 %v74
  %v750 = vunpack.c.h.b16 %v74
  %v751 = vunpack.c.l.b16 %v75
  %v752 = vunpack.c.h.b16 %v75
  %v753 = vunpack.c.l.b16 %v76
  %v754 = vunpack.c.h.b16 %v76
  %v755 = vunpack.c.l.b16 %v77
  %v756 = vunpack.c.h.b16 %v77
  %v757 = vunpack.c.l.b16 %v78
  %v758 = vunpack.c.h.b16 %v78
  %v759 = vunpack.c.l.b16 %v79
  %v760 = vunpack.c.h.b16 %v79
  %v761 = vunpack.c.l.b16 %v80
  %v762 = vunpack.c.h.b16 %v80
  %v763 = vunpack.c.l.b16 %v81
  %v764 = vunpack.c.h.b16 %v81
  %v765 = vunpack.c.l.b16 %v82
  %v766 = vunpack.c.h.b16 %v82
  %v767 = vunpack.c.l.b16 %v83
  %v768 = vunpack.c.h.b16 %v83
  %v769 = vunpack.c.l.b16 %v84
  %v770 = vunpack.c.h.b16 %v84
  %v771 = vunpack.c.l.b16 %v85
  %v772 = vunpack.c.h.b16 %v85
  %v773 = vunpack.c.l.b16 %v86
  %v774 = vunpack.c.h.b16 %v86
  %v775 = vunpack.c.l.b16 %v87
  %v776 = vunpack.c.h.b16 %v87
  %v777 = vunpack.c.l.b16 %v88
  %v778 = vunpack.c.h.b16 %v88
  %v779 = vunpack.c.l.b16 %v89
  %v780 = vunpack.c.h.b16 %v89
  %v781 = vunpack.c.l.b16 %v90
  %v782 = vunpack.c.h.b16 %v90
  %v783 = vunpack.c.l.b16 %v91
  %v784 = vunpack.c.h.b16 %v91
  %v785 = vunpack.c.l.b16 %v92
  %v786 = vunpack.c.h.b16 %v92
  %v787 = vunpack.c.l.b16 %v93
  %v788 = vunpack.c.h.b16 %v93
  %v789 = vunpack.c.l.b16 %v94
  %v790 = vunpack.c.h.b16 %v94
  %v791 = vunpack.c.l.b16 %v95
  %v792 = vunpack.c.h.b16 %v95
  %v793 = vunpack.c.l.b16 %v96
  %v794 = vunpack.c.h.b16 %v96
  %v795 = vunpack.c.l.b16 %v97
  %v796 = vunpack.c.h.b16 %v97
  %v797 = vunpack.c.l.b16 %v98
  %v798 = vunpack.c.h.b16 %v98
  %v799 = vunpack.c.l.b16 %v99
  %v800 = vunpack.c.h.b16 %v99
  %v801 = vunpack.c.l.b16 %v100
  %v802 = vunpack.c.h.b16 %v100
  %v803 = vunpack.c.l.b16 %v101
  %v804 = vunpack.c.h.b16 %v101
  %v805 = vunpack.c.l.b16 %v102
  %v806 = vunpack.c.h.b16 %v102
  %v807 = vunpack.c.l.b16 %v103
  %v808 = vunpack.c.h.b16 %v103
  %v809 = vunpack.c.l.b16 %v104
  %v810 = vunpack.c.h.b16 %v104
  %v811 = vunpack.c.l.b16 %v105
  %v812 = vunpack.c.h.b16 %v105
  %v813 = vunpack.c.l.b16 %v106
  %v814 = vunpack.c.h.b16 %v106
  %v815 = vunpack.c.l.b16 %v107
  %v816 = vunpack.c.h.b16 %v107
  %v817 = vunpack.c.l.b16 %v108
  %v818 = vunpack.c.h.b16 %v108
  %v819 = vunpack.c.l.b16 %v109
  %v820 = vunpack.c.h.b16 %v109
  %v821 = vunpack.c.l.b16 %v110
  %v822 = vunpack.c.h.b16 %v110
  %v823 = vunpack.c.l.b16 %v111
  %v824 = vunpack.c.h.b16 %v111
  %v825 = vunpack.c.l.b16 %v112
  %v826 = vunpack.c.h.b16 %v112
  %v827 = vunpack.c.l.b16 %v113
  %v828 = vunpack.c.h.b16 %v113
  %v829 = vunpack.c.l.b16 %v114
  %v830 = vunpack.c.h.b16 %v114
  %v831 = vunpack.c.l.b16 %v115
  %v832 = vunpack.c.h.b16 %v115
  %v833 = vunpack.c.l.b16 %v116
  %v834 = vunpack.c.h.b16 %v116
  %v835 = vunpack.c.l.b16 %v117
  %v836 = vunpack.c.h.b16 %v117
  %v837 = vunpack.c.l.b16 %v118
  %v838 = vunpack.c.h.b16 %v118
  %v839 = vunpack.c.l.b16 %v119
  %v840 = vunpack.c.h.b16 %v119
  %v841 = vunpack.c.l.b16 %v120
  %v842 = vunpack.c.h.b16 %v120
  %v843 = vunpack.c.l.b16 %v121
  %v844 = vunpack.c.h.b16 %v121
  %v845 = vunpack.c.l.b16 %v122
  %v846 = vunpack.c.h.b16 %v122
  %v847 = vunpack.c.l.b16 %v123
  %v848 = vunpack.c.h.b16 %v123
  %v849 = vunpack.c.l.b16 %v124
  %v850 = vunpack.c.h.b16 %v124
  %v851 = vunpack.c.l.b16 %v125
  %v852 = vunpack.c.h.b16 %v125
  %v853 = vunpack.c.l.b16 %v126
  %v854 = vunpack.c.h.b16 %v126
  %v855 = vunpack.c.l.b16 %v127
  %v856 = vunpack.c.h.b16 %v127
  %v857 = vunpack.c.l.b16 %v128
  %v858 = vunpack.c.h.b16 %v128
  %v859 = vunpack.c.l.b16 %v129
  %v860 = vunpack.c.h.b16 %v129
  %v861 = vunpack.c.l.b16 %v130
  %v862 = vunpack.c.h.b16 %v130
  %v863 = vunpack.c.l.b16 %v131
  %v864 = vunpack.c.h.b16 %v131
  %v865 = vunpack.c.l.b16 %v132
  %v866 = vunpack.c.h.b16 %v132
  %v867 = vunpack.c.l.b16 %v133
  %v868 = vunpack.c.h.b16 %v133
  %v869 = vunpack.c.l.b16 %v134
  %v870 = vunpack.c.h.b16 %v134
  %v871 = vunpack.c.l.b16 %v135
  %v872 = vunpack.c.h.b16 %v135
  %v873 = vunpack.c.l.b16 %v136
  %v874 = vunpack.c.h.b16 %v136
  %v875 = vunpack.c.l.b16 %v137
  %v876 = vunpack.c.h.b16 %v137
  %v877 = vunpack.c.l.b16 %v138
  %v878 = vunpack.c.h.b16 %v138
  %v879 = vunpack.c.l.b16 %v139
  %v880 = vunpack.c.h.b16 %v139
  %v881 = vunpack.c.l.b16 %v140
  %v882 = vunpack.c.h.b16 %v140
  %v883 = vunpack.c.l.b16 %v141
  %v884 = vunpack.c.h.b16 %v141
  %v885 = vunpack.c.l.b16 %v142
  %v886 = vunpack.c.h.b16 %v142
  %v887 = vunpack.c.l.b16 %v143
  %v888 = vunpack.c.h.b16 %v143
  %v889 = vunpack.c.l.b16 %v144
  %v890 = vunpack.c.h.b16 %v144
  %v891 = vunpack.c.l.b16 %v145
  %v892 = vunpack.c.h.b16 %v145
  %v893 = vunpack.c.l.b16 %v146
  %v894 = vunpack.c.h.b16 %v146
  %v895 = vunpack.c.l.b16 %v147
  %v896 = vunpack.c.h.b16 %v147
  %v897 = vunpack.c.l.b16 %v148
  %v898 = vunpack.c.h.b16 %v148
  %v899 = vunpack.c.l.b16 %v149
  %v900 = vunpack.c.h.b16 %v149
  %v901 = vunpack.c.l.b16 %v150
  %v902 = vunpack.c.h.b16 %v150
  %v903 = vunpack.c.l.b16 %v151
  %v904 = vunpack.c.h.b16 %v151
  %v905 = vunpack.c.l.b16 %v152
  %v906 = vunpack.c.h.b16 %v152
  %v907 = vunpack.c.l.b16 %v153
  %v908 = vunpack.c.h.b16 %v153
  %v909 = vunpack.c.l.b16 %v154
  %v910 = vunpack.c.h.b16 %v154
  %v911 = vunpack.c.l.b16 %v155
  %v912 = vunpack.c.h.b16 %v155
  %v913 = vunpack.c.l.b16 %v156
  %v914 = vunpack.c.h.b16 %v156
  %v915 = vunpack.c.l.b16 %v157
  %v916 = vunpack.c.h.b16 %v157
  %v917 = vunpack.c.l.b16 %v158
  %v918 = vunpack.c.h.b16 %v158
  %v919 = vunpack.c.l.b16 %v159
  %v920 = vunpack.c.h.b16 %v159
  %v921 = vunpack.c.l.b16 %v160
  %v922 = vunpack.c.h.b16 %v160
  %v923 = vunpack.c.l.b16 %v161
  %v924 = vunpack.c.h.b16 %v161
  %v925 = vunpack.c.l.b16 %v162
  %v926 = vunpack.c.h.b16 %v162
  %v927 = vunpack.c.l.b16 %v163
  %v928 = vunpack.c.h.b16 %v163
  %v929 = vunpack.c.l.b16 %v164
  %v930 = vunpack.c.h.b16 %v164
  %v931 = vunpack.c.l.b16 %v165
  %v932 = vunpack.c.h.b16 %v165
  %v933 = vunpack.c.l.b16 %v166
  %v934 = vunpack.c.h.b16 %v166
  %v935 = vunpack.c.l.b16 %v167
  %v936 = vunpack.c.h.b16 %v167
  %v937 = vunpack.c.l.b16 %v168
  %v938 = vunpack.c.h.b16 %v168
  %v939 = vunpack.c.l.b16 %v169
  %v940 = vunpack.c.h.b16 %v169
  %v941 = vunpack.c.l.b16 %v170
  %v942 = vunpack.c.h.b16 %v170
  %v943 = vunpack.c.l.b16 %v171
  %v944 = vunpack.c.h.b16 %v171
  %v945 = vunpack.c.l.b16 %v172
  %v946 = vunpack.c.h.b16 %v172
  %v947 = vunpack.c.l.b16 %v173
  %v948 = vunpack.c.h.b16 %v173
  %v949 = vunpack.c.l.b16 %v174
  %v950 = vunpack.c.h.b16 %v174
  %v951 = vunpack.c.l.b16 %v175
  %v952 = vunpack.c.h.b16 %v175
  %v953 = vunpack.c.l.b16 %v176
  %v954 = vunpack.c.h.b16 %v176
  %v955 = vunpack.c.l.b16 %v177
  %v956 = vunpack.c.h.b16 %v177
  %v957 = vunpack.c.l.b16 %v178
  %v958 = vunpack.c.h.b16 %v178
  %v959 = vunpack.c.l.b16 %v179
  %v960 = vunpack.c.h.b16 %v179
  %v961 = vunpack.c.l.b16 %v180
  %v962 = vunpack.c.h.b16 %v180
  %v963 = vunpack.c.l.b16 %v181
  %v964 = vunpack.c.h.b16 %v181
  %v965 = vunpack.c.l.b16 %v182
  %v966 = vunpack.c.h.b16 %v182
  %v967 = vunpack.c.l.b16 %v183
  %v968 = vunpack.c.h.b16 %v183
  %v969 = vunpack.c.l.b16 %v184
  %v970 = vunpack.c.h.b16 %v184
  %v971 = vunpack.c.l.b16 %v185
  %v972 = vunpack.c.h.b16 %v185
  %v973 = vunpack.c.l.b16 %v186
  %v974 = vunpack.c.h.b16 %v186
  %v975 = vunpack.c.l.b16 %v187
  %v976 = vunpack.c.h.b16 %v187
  %v977 = vunpack.c.l.b16 %v188
  %v978 = vunpack.c.h.b16 %v188
  %v979 = vunpack.c.l.b16 %v189
  %v980 = vunpack.c.h.b16 %v189
  %v981 = vunpack.c.l.b16 %v190
  %v982 = vunpack.c.h.b16 %v190
  %v983 = vunpack.c.l.b16 %v191
  %v984 = vunpack.c.h.b16 %v191
  %v985 = vunpack.c.l.b16 %v192
  %v986 = vunpack.c.h.b16 %v192
  %v987 = vunpack.c.l.b16 %v193
  %v988 = vunpack.c.h.b16 %v193
  %v989 = vunpack.c.l.b16 %v194
  %v990 = vunpack.c.h.b16 %v194
  %v991 = vunpack.c.l.b16 %v195
  %v992 = vunpack.c.h.b16 %v195
  %v993 = vunpack.c.l.b16 %v196
  %v994 = vunpack.c.h.b16 %v196
  %v995 = vunpack.c.l.b16 %v197
  %v996 = vunpack.c.h.b16 %v197
  %v997 = vunpack.c.l.b16 %v198
  %v998 = vunpack.c.h.b16 %v198
  %v999 = vunpack.c.l.b16 %v199
  %v1000 = vunpack.c.h.b16 %v199
  %v1001 = vunpack.c.l.b16 %v200
  %v1002 = vunpack.c.h.b16 %v200
  %v1003 = vunpack.c.l.b16 %v201
  %v1004 = vunpack.c.h.b16 %v201
  %v1005 = vunpack.c.l.b16 %v202
  %v1006 = vunpack.c.h.b16 %v202
  %v1007 = vunpack.c.l.b16 %v203
  %v1008 = vunpack.c.h.b16 %v203
  %v1009 = vunpack.c.l.b16 %v204
  %v1010 = vunpack.c.h.b16 %v204
  %v1011 = vunpack.c.l.b16 %v205
  %v1012 = vunpack.c.h.b16 %v205
  %v1013 = vunpack.c.l.b16 %v206
  %v1014 = vunpack.c.h.b16 %v206
  %v1015 = vunpack.c.l.b16 %v207
  %v1016 = vunpack.c.h.b16 %v207
  %v1017 = vunpack.c.l.b16 %v208
  %v1018 = vunpack.c.h.b16 %v208
  %v1019 = vunpack.c.l.b16 %v209
  %v1020 = vunpack.c.h.b16 %v209
  %v1021 = vunpack.c.l.b16 %v210
  %v1022 = vunpack.c.h.b16 %v210
  %v1023 = vunpack.c.l.b16 %v211
  %v1024 = vunpack.c.h.b16 %v211
  %v1025 = vunpack.c.l.b16 %v212
  %v1026 = vunpack.c.h.b16 %v212
  %v1027 = vunpack.c.l.b16 %v213
  %v1028 = vunpack.c.h.b16 %v213
  %v1029 = vunpack.c.l.b16 %v214
  %v1030 = vunpack.c.h.b16 %v214
  %v1031 = vunpack.c.l.b16 %v215
  %v1032 = vunpack.c.h.b16 %v215
  %v1033 = vunpack.c.l.b16 %v216
  %v1034 = vunpack.c.h.b16 %v216
  %v1035 = vunpack.c.l.b16 %v217
  %v1036 = vunpack.c.h.b16 %v217
  %v1037 = vunpack.c.l.b16 %v218
  %v1038 = vunpack.c.h.b16 %v218
  %v1039 = vunpack.c.l.b16 %v219
  %v1040 = vunpack.c.h.b16 %v219
  %v1041 = vunpack.c.l.b16 %v220
  %v1042 = vunpack.c.h.b16 %v220
  %v1043 = vunpack.c.l.b16 %v221
  %v1044 = vunpack.c.h.b16 %v221
  %v1045 = vunpack.c.l.b16 %v222
  %v1046 = vunpack.c.h.b16 %v222
  %v1047 = vunpack.c.l.b16 %v223
  %v1048 = vunpack.c.h.b16 %v223
  %v1049 = vunpack.c.l.b16 %v224
  %v1050 = vunpack.c.h.b16 %v224
  %v1051 = vunpack.c.l.b16 %v225
  %v1052 = vunpack.c.h.b16 %v225
  %v1053 = vunpack.c.l.b16 %v226
  %v1054 = vunpack.c.h.b16 %v226
  %v1055 = vunpack.c.l.b16 %v227
  %v1056 = vunpack.c.h.b16 %v227
  %v1057 = vunpack.c.l.b16 %v228
  %v1058 = vunpack.c.h.b16 %v228
  %v1059 = vunpack.c.l.b16 %v229
  %v1060 = vunpack.c.h.b16 %v229
  %v1061 = vunpack.c.l.b16 %v230
  %v1062 = vunpack.c.h.b16 %v230
  %v1063 = vunpack.c.l.b16 %v231
  %v1064 = vunpack.c.h.b16 %v231
  %v1065 = vunpack.c.l.b16 %v232
  %v1066 = vunpack.c.h.b16 %v232
  %v1067 = vunpack.c.l.b16 %v233
  %v1068 = vunpack.c.h.b16 %v233
  %v1069 = vunpack.c.l.b16 %v234
  %v1070 = vunpack.c.h.b16 %v234
  %v1071 = vunpack.c.l.b16 %v235
  %v1072 = vunpack.c.h.b16 %v235
  %v1073 = vunpack.c.l.b16 %v236
  %v1074 = vunpack.c.h.b16 %v236
  %v1075 = vunpack.c.l.b16 %v237
  %v1076 = vunpack.c.h.b16 %v237
  %v1077 = vunpack.c.l.b16 %v238
  %v1078 = vunpack.c.h.b16 %v238
  %v1079 = vunpack.c.l.b16 %v239
  %v1080 = vunpack.c.h.b16 %v239
  %v1081 = vunpack.c.l.b16 %v240
  %v1082 = vunpack.c.h.b16 %v240
  %v1083 = vunpack.c.l.b16 %v241
  %v1084 = vunpack.c.h.b16 %v241
  %v1085 = vunpack.c.l.b16 %v242
  %v1086 = vunpack.c.h.b16 %v242
  %v1087 = vunpack.c.l.b16 %v243
  %v1088 = vunpack.c.h.b16 %v243
  %v1089 = vunpack.c.l.b16 %v244
  %v1090 = vunpack.c.h.b16 %v244
  %v1091 = vunpack.c.l.b16 %v245
  %v1092 = vunpack.c.h.b16 %v245
  %v1093 = vunpack.c.l.b16 %v246
  %v1094 = vunpack.c.h.b16 %v246
  %v1095 = vunpack.c.l.b16 %v247
  %v1096 = vunpack.c.h.b16 %v247
  %v1097 = vunpack.c.l.b16 %v248
  %v1098 = vunpack.c.h.b16 %v248
  %v1099 = vunpack.c.l.b16 %v249
  %v1100 = vunpack.c.h.b16 %v249
  %v1101 = vunpack.c.l.b16 %v250
  %v1102 = vunpack.c.h.b16 %v250
  %v1103 = vunpack.c.l.b16 %v251
  %v1104 = vunpack.c.h.b16 %v251
  %v1105 = vunpack.c.l.b16 %v252
  %v1106 = vunpack.c.h.b16 %v252
  %v1107 = vunpack.c.l.b16 %v253
  %v1108 = vunpack.c.h.b16 %v253
  %v1109 = vunpack.c.l.b16 %v254
  %v1110 = vunpack.c.h.b16 %v254
  %v1111 = vunpack.c.l.b16 %v255
  %v1112 = vunpack.c.h.b16 %v255
  %v1113 = vunpack.c.l.b16 %v256
  %v1114 = vunpack.c.h.b16 %v256
  %v1115 = vunpack.c.l.b16 %v257
  %v1116 = vunpack.c.h.b16 %v257
  %v1117 = vunpack.c.l.b16 %v258
  %v1118 = vunpack.c.h.b16 %v258
  %v1119 = vunpack.c.l.b16 %v259
  %v1120 = vunpack.c.h.b16 %v259
  %v1121 = vunpack.c.l.b16 %v260
  %v1122 = vunpack.c.h.b16 %v260
  %v1123 = vunpack.c.l.b16 %v261
  %v1124 = vunpack.c.h.b16 %v261
  %v1125 = vunpack.c.l.b16 %v262
  %v1126 = vunpack.c.h.b16 %v262
  %v1127 = vunpack.c.l.b16 %v263
  %v1128 = vunpack.c.h.b16 %v263
  %v1129 = vunpack.c.l.b16 %v264
  %v1130 = vunpack.c.h.b16 %v264
  %v1131 = vunpack.c.l.b16 %v265
  %v1132 = vunpack.c.h.b16 %v265
  %v1133 = vunpack.c.l.b16 %v266
  %v1134 = vunpack.c.h.b16 %v266
  %v1135 = vunpack.c.l.b16 %v267
  %v1136 = vunpack.c.h.b16 %v267
  %v1137 = vunpack.c.l.b16 %v268
  %v1138 = vunpack.c.h.b16 %v268
  %v1139 = vunpack.c.l.b16 %v269
  %v1140 = vunpack.c.h.b16 %v269
  %v1141 = vunpack.c.l.b16 %v270
  %v1142 = vunpack.c.h.b16 %v270
  %v1143 = vunpack.c.l.b16 %v271
  %v1144 = vunpack.c.h.b16 %v271
  %v1145 = vunpack.c.l.b16 %v272
  %v1146 = vunpack.c.h.b16 %v272
  %v1147 = vunpack.c.l.b16 %v273
  %v1148 = vunpack.c.h.b16 %v273
  %v1149 = vunpack.c.l.b16 %v274
  %v1150 = vunpack.c.h.b16 %v274
  %v1151 = vunpack.c.l.b16 %v275
  %v1152 = vunpack.c.h.b16 %v275
  %v1153 = vunpack.c.l.b16 %v276
  %v1154 = vunpack.c.h.b16 %v276
  %v1155 = vunpack.c.l.b16 %v277
  %v1156 = vunpack.c.h.b16 %v277
  %v1157 = vunpack.c.l.b16 %v278
  %v1158 = vunpack.c.h.b16 %v278
  %v1159 = vunpack.c.l.b16 %v279
  %v1160 = vunpack.c.h.b16 %v279
  %v1161 = vunpack.c.l.b16 %v280
  %v1162 = vunpack.c.h.b16 %v280
  %v1163 = vunpack.c.l.b16 %v281
  %v1164 = vunpack.c.h.b16 %v281
  %v1165 = vunpack.c.l.b16 %v282
  %v1166 = vunpack.c.h.b16 %v282
  %v1167 = vunpack.c.l.b16 %v283
  %v1168 = vunpack.c.h.b16 %v283
  %v1169 = vunpack.c.l.b16 %v284
  %v1170 = vunpack.c.h.b16 %v284
  %v1171 = vunpack.c.l.b16 %v285
  %v1172 = vunpack.c.h.b16 %v285
  %v1173 = vunpack.c.l.b16 %v286
  %v1174 = vunpack.c.h.b16 %v286
  %v1175 = vunpack.c.l.b16 %v287
  %v1176 = vunpack.c.h.b16 %v287
  %v1177 = vunpack.c.l.b16 %v288
  %v1178 = vunpack.c.h.b16 %v288
  %v1179 = vunpack.c.l.b16 %v289
  %v1180 = vunpack.c.h.b16 %v289
  %v1181 = vunpack.c.l.b16 %v290
  %v1182 = vunpack.c.h.b16 %v290
  %v1183 = vunpack.c.l.b16 %v291
  %v1184 = vunpack.c.h.b16 %v291
  %v1185 = vunpack.c.l.b16 %v292
  %v1186 = vunpack.c.h.b16 %v292
  %v1187 = vunpack.c.l.b16 %v293
  %v1188 = vunpack.c.h.b16 %v293
  %v1189 = vunpack.c.l.b16 %v294
  %v1190 = vunpack.c.h.b16 %v294
  %v1191 = vunpack.c.l.b16 %v295
  %v1192 = vunpack.c.h.b16 %v295
  %v1193 = vunpack.c.l.b16 %v296
  %v1194 = vunpack.c.h.b16 %v296
  %v1195 = vunpack.c.l.b16 %v297
  %v1196 = vunpack.c.h.b16 %v297
  %v1197 = vunpack.c.l.b16 %v298
  %v1198 = vunpack.c.h.b16 %v298
  %v1199 = vunpack.c.l.b16 %v299
  %v1200 = vunpack.c.h.b16 %v299
  %v1201 = vunpack.c.l.b16 %v300
  %v1202 = vunpack.c.h.b16 %v300
  %v1203 = vunpack.c.l.b16 %v301
  %v1204 = vunpack.c.h.b16 %v301
  %v1205 = vunpack.c.l.b16 %v302
  %v1206 = vunpack.c.h.b16 %v302
  %v1207 = vpack.c.b16 %v697, %v695
  %v1208 = vpack.c.b16 %v698, %v696
  %v1209 = vpack.c.b16 %v701, %v699
  %v1210 = vpack.c.b16 %v702, %v700
  %v1211 = vpack.c.b16 %v705, %v703
  %v1212 = vpack.c.b16 %v706, %v704
  %v1213 = vpack.c.b16 %v709, %v707
  %v1214 = vpack.c.b16 %v710, %v708
  %v1215 = vpack.c.b16 %v713, %v711
  %v1216 = vpack.c.b16 %v714, %v712
  %v1217 = vpack.c.b16 %v717, %v715
  %v1218 = vpack.c.b16 %v718, %v716
  %v1219 = vpack.c.b16 %v721, %v719
  %v1220 = vpack.c.b16 %v722, %v720
  %v1221 = vpack.c.b16 %v725, %v723
  %v1222 = vpack.c.b16 %v726, %v724
  %v1223 = vpack.c.b16 %v729, %v727
  %v1224 = vpack.c.b16 %v730, %v728
  %v1225 = vpack.c.b16 %v733, %v731
  %v1226 = vpack.c.b16 %v734, %v732
  %v1227 = vpack.c.b16 %v737, %v735
  %v1228 = vpack.c.b16 %v738, %v736
  %v1229 = vpack.c.b16 %v741, %v739
  %v1230 = vpack.c.b16 %v742, %v740
  %v1231 = vpack.c.b16 %v745, %v743
  %v1232 = vpack.c.b16 %v746, %v744
  %v1233 = vpack.c.b16 %v749, %v747
  %v1234 = vpack.c.b16 %v750, %v748
  %v1235 = vpack.c.b16 %v753, %v751
  %v1236 = vpack.c.b16 %v754, %v752
  %v1237 = vpack.c.b16 %v757, %v755
  %v1238 = vpack.c.b16 %v758, %v756
  %v1239 = vpack.c.b16 %v761, %v759
  %v1240 = vpack.c.b16 %v762, %v760
  %v1241 = vpack.c.b16 %v765, %v763
  %v1242 = vpack.c.b16 %v766, %v764
  %v1243 = vpack.c.b16 %v769, %v767
  %v1244 = vpack.c.b16 %v770, %v768
  %v1245 = vpack.c.b16 %v773, %v771
  %v1246 = vpack.c.b16 %v774, %v772
  %v1247 = vpack.c.b16 %v777, %v775
  %v1248 = vpack.c.b16 %v778, %v776
  %v1249 = vpack.c.b16 %v781, %v779
  %v1250 = vpack.c.b16 %v782, %v780
  %v1251 = vpack.c.b16 %v785, %v783
  %v1252 = vpack.c.b16 %v786, %v784
  %v1253 = vpack.c.b16 %v789, %v787
  %v1254 = vpack.c.b16 %v790, %v788
  %v1255 = vpack.c.b16 %v793, %v791
  %v1256 = vpack.c.b16 %v794, %v792
  %v1257 = vpack.c.b16 %v797, %v795
  %v1258 = vpack.c.b16 %v798, %v796
  %v1259 = vpack.c.b16 %v801, %v799
  %v1260 = vpack.c.b16 %v802, %v800
  %v1261 = vpack.c.b16 %v805, %v803
  %v1262 = vpack.c.b16 %v806, %v804
  %v1263 = vpack.c.b16 %v809, %v807
  %v1264 = vpack.c.b16 %v810, %v808
  %v1265 = vpack.c.b16 %v813, %v811
  %v1266 = vpack.c.b16 %v814, %v812
  %v1267 = vpack.c.b16 %v817, %v815
  %v1268 = vpack.c.b16 %v818, %v816
  %v1269 = vpack.c.b16 %v821, %v819
  %v1270 = vpack.c.b16 %v822, %v820
  %v1271 = vpack.c.b16 %v825, %v823
  %v1272 = vpack.c.b16 %v826, %v824
  %v1273 = vpack.c.b16 %v829, %v827
  %v1274 = vpack.c.b16 %v830, %v828
  %v1275 = vpack.c.b16 %v833, %v831
  %v1276 = vpack.c.b16 %v834, %v832
  %v1277 = vpack.c.b16 %v837, %v835
  %v1278 = vpack.c.b16 %v838, %v836
  %v1279 = vpack.c.b16 %v841, %v839
  %v1280 = vpack.c.b16 %v842, %v840
  %v1281 = vpack.c.b16 %v845, %v843
  %v1282 = vpack.c.b16 %v846, %v844
  %v1283 = vpack.c.b16 %v849, %v847
  %v1284 = vpack.c.b16 %v850, %v848
  %v1285 = vpack.c.b16 %v853, %v851
  %v1286 = vpack.c.b16 %v854, %v852
  %v1287 = vpack.c.b16 %v857, %v855
  %v1288 = vpack.c.b16 %v858, %v856
  %v1289 = vpack.c.b16 %v861, %v859
  %v1290 = vpack.c.b16 %v862, %v860
  %v1291 = vpack.c.b16 %v865, %v863
  %v1292 = vpack.c.b16 %v866, %v864
  %v1293 = vpack.c.b16 %v869, %v867
  %v1294 = vpack.c.b16 %v870, %v868
  %v1295 = vpack.c.b16 %v873, %v871
  %v1296 = vpack.c.b16 %v874, %v872
  %v1297 = vpack.c.b16 %v877, %v875
  %v1298 = vpack.c.b16 %v878, %v876
  %v1299 = vpack.c.b16 %v881, %v879
  %v1300 = vpack.c.b16 %v882, %v880
  %v1301 = vpack.c.b16 %v885, %v883
  %v1302 = vpack.c.b16 %v886, %v884
  %v1303 = vpack.c.b16 %v889, %v887
  %v1304 = vpack.c.b16 %v890, %v888
  %v1305 = vpack.c.b16 %v893, %v891
  %v1306 = vpack.c.b16 %v894, %v892
  %v1307 = vpack.c.b16 %v897, %v895
  %v1308 = vpack.c.b16 %v898, %v896
  %v1309 = vpack.c.b16 %v901, %v899
  %v1310 = vpack.c.b16 %v902, %v900
  %v1311 = vpack.c.b16 %v905, %v903
  %v1312 = vpack.c.b16 %v906, %v904
  %v1313 = vpack.c.b16 %v909, %v907
  %v1314 = vpack.c.b16 %v910, %v908
  %v1315 = vpack.c.b16 %v913, %v911
  %v1316 = vpack.c.b16 %v914, %v912
  %v1317 = vpack.c.b16 %v917, %v915
  %v1318 = vpack.c.b16 %v918, %v916
  %v1319 = vpack.c.b16 %v921, %v919
  %v1320 = vpack.c.b16 %v922, %v920
  %v1321 = vpack.c.b16 %v925, %v923
  %v1322 = vpack.c.b16 %v926, %v924
  %v1323 = vpack.c.b16 %v929, %v927
  %v1324 = vpack.c.b16 %v930, %v928
  %v1325 = vpack.c.b16 %v933, %v931
  %v1326 = vpack.c.b16 %v934, %v932
  %v1327 = vpack.c.b16 %v937, %v935
  %v1328 = vpack.c.b16 %v938, %v936
  %v1329 = vpack.c.b16 %v941, %v939
  %v1330 = vpack.c.b16 %v942, %v940
  %v1331 = vpack.c.b16 %v945, %v943
  %v1332 = vpack.c.b16 %v946, %v944
  %v1333 = vpack.c.b16 %v949, %v947
  %v1334 = vpack.c.b16 %v950, %v948
  %v1335 = vpack.c.b16 %v953, %v951
  %v1336 = vpack.c.b16 %v954, %v952
  %v1337 = vpack.c.b16 %v957, %v955
  %v1338 = vpack.c.b16 %v958, %v956
  %v1339 = vpack.c.b16 %v961, %v959
  %v1340 = vpack.c.b16 %v962, %v960
  %v1341 = vpack.c.b16 %v965, %v963
  %v1342 = vpack.c.b16 %v966, %v964
  %v1343 = vpack.c.b16 %v969, %v967
  %v1344 = vpack.c.b16 %v970, %v968
  %v1345 = vpack.c.b16 %v973, %v971
  %v1346 = vpack.c.b16 %v974, %v972
  %v1347 = vpack.c.b16 %v977, %v975
  %v1348 = vpack.c.b16 %v978, %v976
  %v1349 = vpack.c.b16 %v981, %v979
  %v1350 = vpack.c.b16 %v982, %v980
  %v1351 = vpack.c.b16 %v985, %v983
  %v1352 = vpack.c.b16 %v986, %v984
  %v1353 = vpack.c.b16 %v989, %v987
  %v1354 = vpack.c.b16 %v990, %v988
  %v1355 = vpack.c.b16 %v993, %v991
  %v1356 = vpack.c.b16 %v994, %v992
  %v1357 = vpack.c.b16 %v997, %v995
  %v1358 = vpack.c.b16 %v998, %v996
  %v1359 = vpack.c.b16 %v1001, %v999
  %v1360 = vpack.c.b16 %v1002, %v1000
  %v1361 = vpack.c.b16 %v1005, %v1003
  %v1362 = vpack.c.b16 %v1006, %v1004
  %v1363 = vpack.c.b16 %v1009, %v1007
  %v1364 = vpack.c.b16 %v1010, %v1008
  %v1365 = vpack.c.b16 %v1013, %v1011
  %v1366 = vpack.c.b16 %v1014, %v1012
  %v1367 = vpack.c.b16 %v1017, %v1015
  %v1368 = vpack.c.b16 %v1018, %v1016
  %v1369 = vpack.c.b16 %v1021, %v1019
  %v1370 = vpack.c.b16 %v1022, %v1020
  %v1371 = vpack.c.b16 %v1025, %v1023
  %v1372 = vpack.c.b16 %v1026, %v1024
  %v1373 = vpack.c.b16 %v1029, %v1027
  %v1374 = vpack.c.b16 %v1030, %v1028
  %v1375 = vpack.c.b16 %v1033, %v1031
  %v1376 = vpack.c.b16 %v1034, %v1032
  %v1377 = vpack.c.b16 %v1037, %v1035
  %v1378 = vpack.c.b16 %v1038, %v1036
  %v1379 = vpack.c.b16 %v1041, %v1039
  %v1380 = vpack.c.b16 %v1042, %v1040
  %v1381 = vpack.c.b16 %v1045, %v1043
  %v1382 = vpack.c.b16 %v1046, %v1044
  %v1383 = vpack.c.b16 %v1049, %v1047
  %v1384 = vpack.c.b16 %v1050, %v1048
  %v1385 = vpack.c.b16 %v1053, %v1051
  %v1386 = vpack.c.b16 %v1054, %v1052
  %v1387 = vpack.c.b16 %v1057, %v1055
  %v1388 = vpack.c.b16 %v1058, %v1056
  %v1389 = vpack.c.b16 %v1061, %v1059
  %v1390 = vpack.c.b16 %v1062, %v1060
  %v1391 = vpack.c.b16 %v1065, %v1063
  %v1392 = vpack.c.b16 %v1066, %v1064
  %v1393 = vpack.c.b16 %v1069, %v1067
  %v1394 = vpack.c.b16 %v1070, %v1068
  %v1395 = vpack.c.b16 %v1073, %v1071
  %v1396 = vpack.c.b16 %v1074, %v1072
  %v1397 = vpack.c.b16 %v1077, %v1075
  %v1398 = vpack.c.b16 %v1078, %v1076
  %v1399 = vpack.c.b16 %v1081, %v1079
  %v1400 = vpack.c.b16 %v1082, %v1080
  %v1401 = vpack.c.b16 %v1085, %v1083
  %v1402 = vpack.c.b16 %v1086, %v1084
  %v1403 = vpack.c.b16 %v1089, %v1087
  %v1404 = vpack.c.b16 %v1090, %v1088
  %v1405 = vpack.c.b16 %v1093, %v1091
  %v1406 = vpack.c.b16 %v1094, %v1092
  %v1407 = vpack.c.b16 %v1097, %v1095
  %v1408 = vpack.c.b16 %v1098, %v1096
  %v1409 = vpack.c.b16 %v1101, %v1099
  %v1410 = vpack.c.b16 %v1102, %v1100
  %v1411 = vpack.c.b16 %v1105, %v1103
  %v1412 = vpack.c.b16 %v1106, %v1104
  %v1413 = vpack.c.b16 %v1109, %v1107
  %v1414 = vpack.c.b16 %v1110, %v1108
  %v1415 = vpack.c.b16 %v1113, %v1111
  %v1416 = vpack.c.b16 %v1114, %v1112
  %v1417 = vpack.c.b16 %v1117, %v1115
  %v1418 = vpack.c.b16 %v1118, %v1116
  %v1419 = vpack.c.b16 %v1121, %v1119
  %v1420 = vpack.c.b16 %v1122, %v1120
  %v1421 = vpack.c.b16 %v1125, %v1123
  %v1422 = vpack.c.b16 %v1126, %v1124
  %v1423 = vpack.c.b16 %v1129, %v1127
  %v1424 = vpack.c.b16 %v1130, %v1128
  %v1425 = vpack.c.b16 %v1133, %v1131
  %v1426 = vpack.c.b16 %v1134, %v1132
  %v1427 = vpack.c.b16 %v1137, %v1135
  %v1428 = vpack.c.b16 %v1138, %v1136
  %v1429 = vpack.c.b16 %v1141, %v1139
  %v1430 = vpack.c.b16 %v1142, %v1140
  %v1431 = vpack.c.b16 %v1145, %v1143
  %v1432 = vpack.c.b16 %v1146, %v1144
  %v1433 = vpack.c.b16 %v1149, %v1147
  %v1434 = vpack.c.b16 %v1150, %v1148
  %v1435 = vpack.c.b16 %v1153, %v1151
  %v1436 = vpack.c.b16 %v1154, %v1152
  %v1437 = vpack.c.b16 %v1157, %v1155
  %v1438 = vpack.c.b16 %v1158, %v1156
  %v1439 = vpack.c.b16 %v1161, %v1159
  %v1440 = vpack.c.b16 %v1162, %v1160
  %v1441 = vpack.c.b16 %v1165, %v1163
  %v1442 = vpack.c.b16 %v1166, %v1164
  %v1443 = vpack.c.b16 %v1169, %v1167
  %v1444 = vpack.c.b16 %v1170, %v1168
  %v1445 = vpack.c.b16 %v1173, %v1171
  %v1446 = vpack.c.b16 %v1174, %v1172
  %v1447 = vpack.c.b16 %v1177, %v1175
  %v1448 = vpack.c.b16 %v1178, %v1176
  %v1449 = vpack.c.b16 %v1181, %v1179
  %v1450 = vpack.c.b16 %v1182, %v1180
  %v1451 = vpack.c.b16 %v1185, %v1183
  %v1452 = vpack.c.b16 %v1186, %v1184
  %v1453 = vpack.c.b16 %v1189, %v1187
  %v1454 = vpack.c.b16 %v1190, %v1188
  %v1455 = vpack.c.b16 %v1193, %v1191
  %v1456 = vpack.c.b16 %v1194, %v1192
  %v1457 = vpack.c.b16 %v1197, %v1195
  %v1458 = vpack.c.b16 %v1198, %v1196
  %v1459 = vpack.c.b16 %v1201, %v1199
  %v1460 = vpack.c.b16 %v1202, %v1200
  %v1461 = vpack.c.b16 %v1205, %v1203
  %v1462 = vpack.c.b16 %v1206, %v1204
  %1719 = vmatpush.bf16.msra.mxu0 %v1221
  %1720 = vmatpush.bf16.msra.mxu0 %v1219
  %1721 = vmatpush.bf16.msra.mxu0 %v1217
  %1722 = vmatpush.bf16.msra.mxu0 %v1215
  %1723 = vmatpush.bf16.msra.mxu0 %v1213
  %1724 = vmatpush.bf16.msra.mxu0 %v1211
  %1725 = vmatpush.bf16.msra.mxu0 %v1209
  %1726 = vmatpush.bf16.msra.mxu0 %v1207
  %1727 = vmatmul.bf16.gmra.mxu0 %v375
  %v1728 = vpop.f32.mrf.mxu0
  %v1729 = vadd.f32 0.0, %v1728
  %v1730 = vpop.f32.mrf.mxu0
  %v1731 = vadd.f32 0.0, %v1730
  %1732 = vmatmul.bf16.gmra.mxu0 %v391
  %v1733 = vpop.f32.mrf.mxu0
  %v1734 = vadd.f32 0.0, %v1733
  %v1735 = vpop.f32.mrf.mxu0
  %1736 = vdwg.mxu0
  %1737 = vmatpush.bf16.msra.mxu0 %v1237
  %1738 = vmatpush.bf16.msra.mxu0 %v1235
  %1739 = vmatpush.bf16.msra.mxu0 %v1233
  %1740 = vmatpush.bf16.msra.mxu0 %v1231
  %1741 = vmatpush.bf16.msra.mxu0 %v1229
  %1742 = vmatpush.bf16.msra.mxu0 %v1227
  %1743 = vmatpush.bf16.msra.mxu0 %v1225
  %1744 = vmatpush.bf16.msra.mxu0 %v1223
  %1745 = vmatmul.bf16.gmra.mxu0 %v376
  %v1746 = vpop.f32.mrf.mxu0
  %v1747 = vadd.f32 %v1729, %v1746
  %v1748 = vpop.f32.mrf.mxu0
  %v1749 = vadd.f32 %v1731, %v1748
  %1750 = vmatmul.bf16.gmra.mxu0 %v392
  %v1751 = vpop.f32.mrf.mxu0
  %v1752 = vadd.f32 %v1734, %v1751
  %v1753 = vpop.f32.mrf.mxu0
  %1754 = vdwg.mxu0
  %1755 = vmatpush.bf16.msra.mxu0 %v1253
  %1756 = vmatpush.bf16.msra.mxu0 %v1251
  %1757 = vmatpush.bf16.msra.mxu0 %v1249
  %1758 = vmatpush.bf16.msra.mxu0 %v1247
  %1759 = vmatpush.bf16.msra.mxu0 %v1245
  %1760 = vmatpush.bf16.msra.mxu0 %v1243
  %1761 = vmatpush.bf16.msra.mxu0 %v1241
  %1762 = vmatpush.bf16.msra.mxu0 %v1239
  %1763 = vmatmul.bf16.gmra.mxu0 %v377
  %v1764 = vpop.f32.mrf.mxu0
  %v1765 = vadd.f32 %v1747, %v1764
  %v1766 = vpop.f32.mrf.mxu0
  %v1767 = vadd.f32 %v1749, %v1766
  %1768 = vmatmul.bf16.gmra.mxu0 %v393
  %v1769 = vpop.f32.mrf.mxu0
  %v1770 = vadd.f32 %v1752, %v1769
  %v1771 = vpop.f32.mrf.mxu0
  %1772 = vdwg.mxu0
  %1773 = vmatpush.bf16.msra.mxu0 %v1269
  %1774 = vmatpush.bf16.msra.mxu0 %v1267
  %1775 = vmatpush.bf16.msra.mxu0 %v1265
  %1776 = vmatpush.bf16.msra.mxu0 %v1263
  %1777 = vmatpush.bf16.msra.mxu0 %v1261
  %1778 = vmatpush.bf16.msra.mxu0 %v1259
  %1779 = vmatpush.bf16.msra.mxu0 %v1257
  %1780 = vmatpush.bf16.msra.mxu0 %v1255
  %1781 = vmatmul.bf16.gmra.mxu0 %v378
  %v1782 = vpop.f32.mrf.mxu0
  %v1783 = vadd.f32 %v1765, %v1782
  %v1784 = vpop.f32.mrf.mxu0
  %v1785 = vadd.f32 %v1767, %v1784
  %1786 = vmatmul.bf16.gmra.mxu0 %v394
  %v1787 = vpop.f32.mrf.mxu0
  %v1788 = vadd.f32 %v1770, %v1787
  %v1789 = vpop.f32.mrf.mxu0
  %1790 = vdwg.mxu0
  %1791 = vmatpush.bf16.msra.mxu0 %v1285
  %1792 = vmatpush.bf16.msra.mxu0 %v1283
  %1793 = vmatpush.bf16.msra.mxu0 %v1281
  %1794 = vmatpush.bf16.msra.mxu0 %v1279
  %1795 = vmatpush.bf16.msra.mxu0 %v1277
  %1796 = vmatpush.bf16.msra.mxu0 %v1275
  %1797 = vmatpush.bf16.msra.mxu0 %v1273
  %1798 = vmatpush.bf16.msra.mxu0 %v1271
  %1799 = vmatmul.bf16.gmra.mxu0 %v379
  %v1800 = vpop.f32.mrf.mxu0
  %v1801 = vadd.f32 %v1783, %v1800
  %v1802 = vpop.f32.mrf.mxu0
  %v1803 = vadd.f32 %v1785, %v1802
  %1804 = vmatmul.bf16.gmra.mxu0 %v395
  %v1805 = vpop.f32.mrf.mxu0
  %v1806 = vadd.f32 %v1788, %v1805
  %v1807 = vpop.f32.mrf.mxu0
  %1808 = vdwg.mxu0
  %1809 = vmatpush.bf16.msra.mxu0 %v1301
  %1810 = vmatpush.bf16.msra.mxu0 %v1299
  %1811 = vmatpush.bf16.msra.mxu0 %v1297
  %1812 = vmatpush.bf16.msra.mxu0 %v1295
  %1813 = vmatpush.bf16.msra.mxu0 %v1293
  %1814 = vmatpush.bf16.msra.mxu0 %v1291
  %1815 = vmatpush.bf16.msra.mxu0 %v1289
  %1816 = vmatpush.bf16.msra.mxu0 %v1287
  %1817 = vmatmul.bf16.gmra.mxu0 %v380
  %v1818 = vpop.f32.mrf.mxu0
  %v1819 = vadd.f32 %v1801, %v1818
  %v1820 = vpop.f32.mrf.mxu0
  %v1821 = vadd.f32 %v1803, %v1820
  %1822 = vmatmul.bf16.gmra.mxu0 %v396
  %v1823 = vpop.f32.mrf.mxu0
  %v1824 = vadd.f32 %v1806, %v1823
  %v1825 = vpop.f32.mrf.mxu0
  %1826 = vdwg.mxu0
  %1827 = vmatpush.bf16.msra.mxu0 %v1317
  %1828 = vmatpush.bf16.msra.mxu0 %v1315
  %1829 = vmatpush.bf16.msra.mxu0 %v1313
  %1830 = vmatpush.bf16.msra.mxu0 %v1311
  %1831 = vmatpush.bf16.msra.mxu0 %v1309
  %1832 = vmatpush.bf16.msra.mxu0 %v1307
  %1833 = vmatpush.bf16.msra.mxu0 %v1305
  %1834 = vmatpush.bf16.msra.mxu0 %v1303
  %1835 = vmatmul.bf16.gmra.mxu0 %v381
  %v1836 = vpop.f32.mrf.mxu0
  %v1837 = vadd.f32 %v1819, %v1836
  %v1838 = vpop.f32.mrf.mxu0
  %v1839 = vadd.f32 %v1821, %v1838
  %1840 = vmatmul.bf16.gmra.mxu0 %v397
  %v1841 = vpop.f32.mrf.mxu0
  %v1842 = vadd.f32 %v1824, %v1841
  %v1843 = vpop.f32.mrf.mxu0
  %1844 = vdwg.mxu0
  %1845 = vmatpush.bf16.msra.mxu0 %v1333
  %1846 = vmatpush.bf16.msra.mxu0 %v1331
  %1847 = vmatpush.bf16.msra.mxu0 %v1329
  %1848 = vmatpush.bf16.msra.mxu0 %v1327
  %1849 = vmatpush.bf16.msra.mxu0 %v1325
  %1850 = vmatpush.bf16.msra.mxu0 %v1323
  %1851 = vmatpush.bf16.msra.mxu0 %v1321
  %1852 = vmatpush.bf16.msra.mxu0 %v1319
  %1853 = vmatmul.bf16.gmra.mxu0 %v382
  %v1854 = vpop.f32.mrf.mxu0
  %v1855 = vadd.f32 %v1837, %v1854
  %v1856 = vpop.f32.mrf.mxu0
  %v1857 = vadd.f32 %v1839, %v1856
  %1858 = vmatmul.bf16.gmra.mxu0 %v398
  %v1859 = vpop.f32.mrf.mxu0
  %v1860 = vadd.f32 %v1842, %v1859
  %v1861 = vpop.f32.mrf.mxu0
  %1862 = vdwg.mxu0
  %1863 = vmatpush.bf16.msra.mxu0 %v1349
  %1864 = vmatpush.bf16.msra.mxu0 %v1347
  %1865 = vmatpush.bf16.msra.mxu0 %v1345
  %1866 = vmatpush.bf16.msra.mxu0 %v1343
  %1867 = vmatpush.bf16.msra.mxu0 %v1341
  %1868 = vmatpush.bf16.msra.mxu0 %v1339
  %1869 = vmatpush.bf16.msra.mxu0 %v1337
  %1870 = vmatpush.bf16.msra.mxu0 %v1335
  %1871 = vmatmul.bf16.gmra.mxu0 %v383
  %v1872 = vpop.f32.mrf.mxu0
  %v1873 = vadd.f32 %v1855, %v1872
  %v1874 = vpop.f32.mrf.mxu0
  %v1875 = vadd.f32 %v1857, %v1874
  %1876 = vmatmul.bf16.gmra.mxu0 %v399
  %v1877 = vpop.f32.mrf.mxu0
  %v1878 = vadd.f32 %v1860, %v1877
  %v1879 = vpop.f32.mrf.mxu0
  %1880 = vdwg.mxu0
  %1881 = vmatpush.bf16.msra.mxu0 %v1365
  %1882 = vmatpush.bf16.msra.mxu0 %v1363
  %1883 = vmatpush.bf16.msra.mxu0 %v1361
  %1884 = vmatpush.bf16.msra.mxu0 %v1359
  %1885 = vmatpush.bf16.msra.mxu0 %v1357
  %1886 = vmatpush.bf16.msra.mxu0 %v1355
  %1887 = vmatpush.bf16.msra.mxu0 %v1353
  %1888 = vmatpush.bf16.msra.mxu0 %v1351
  %1889 = vmatmul.bf16.gmra.mxu0 %v384
  %v1890 = vpop.f32.mrf.mxu0
  %v1891 = vadd.f32 %v1873, %v1890
  %v1892 = vpop.f32.mrf.mxu0
  %v1893 = vadd.f32 %v1875, %v1892
  %1894 = vmatmul.bf16.gmra.mxu0 %v400
  %v1895 = vpop.f32.mrf.mxu0
  %v1896 = vadd.f32 %v1878, %v1895
  %v1897 = vpop.f32.mrf.mxu0
  %1898 = vdwg.mxu0
  %1899 = vmatpush.bf16.msra.mxu0 %v1381
  %1900 = vmatpush.bf16.msra.mxu0 %v1379
  %1901 = vmatpush.bf16.msra.mxu0 %v1377
  %1902 = vmatpush.bf16.msra.mxu0 %v1375
  %1903 = vmatpush.bf16.msra.mxu0 %v1373
  %1904 = vmatpush.bf16.msra.mxu0 %v1371
  %1905 = vmatpush.bf16.msra.mxu0 %v1369
  %1906 = vmatpush.bf16.msra.mxu0 %v1367
  %1907 = vmatmul.bf16.gmra.mxu0 %v385
  %v1908 = vpop.f32.mrf.mxu0
  %v1909 = vadd.f32 %v1891, %v1908
  %v1910 = vpop.f32.mrf.mxu0
  %v1911 = vadd.f32 %v1893, %v1910
  %1912 = vmatmul.bf16.gmra.mxu0 %v401
  %v1913 = vpop.f32.mrf.mxu0
  %v1914 = vadd.f32 %v1896, %v1913
  %v1915 = vpop.f32.mrf.mxu0
  %1916 = vdwg.mxu0
  %1917 = vmatpush.bf16.msra.mxu0 %v1397
  %1918 = vmatpush.bf16.msra.mxu0 %v1395
  %1919 = vmatpush.bf16.msra.mxu0 %v1393
  %1920 = vmatpush.bf16.msra.mxu0 %v1391
  %1921 = vmatpush.bf16.msra.mxu0 %v1389
  %1922 = vmatpush.bf16.msra.mxu0 %v1387
  %1923 = vmatpush.bf16.msra.mxu0 %v1385
  %1924 = vmatpush.bf16.msra.mxu0 %v1383
  %1925 = vmatmul.bf16.gmra.mxu0 %v386
  %v1926 = vpop.f32.mrf.mxu0
  %v1927 = vadd.f32 %v1909, %v1926
  %v1928 = vpop.f32.mrf.mxu0
  %v1929 = vadd.f32 %v1911, %v1928
  %1930 = vmatmul.bf16.gmra.mxu0 %v402
  %v1931 = vpop.f32.mrf.mxu0
  %v1932 = vadd.f32 %v1914, %v1931
  %v1933 = vpop.f32.mrf.mxu0
  %1934 = vdwg.mxu0
  %1935 = vmatpush.bf16.msra.mxu0 %v1413
  %1936 = vmatpush.bf16.msra.mxu0 %v1411
  %1937 = vmatpush.bf16.msra.mxu0 %v1409
  %1938 = vmatpush.bf16.msra.mxu0 %v1407
  %1939 = vmatpush.bf16.msra.mxu0 %v1405
  %1940 = vmatpush.bf16.msra.mxu0 %v1403
  %1941 = vmatpush.bf16.msra.mxu0 %v1401
  %1942 = vmatpush.bf16.msra.mxu0 %v1399
  %1943 = vmatmul.bf16.gmra.mxu0 %v387
  %v1944 = vpop.f32.mrf.mxu0
  %v1945 = vadd.f32 %v1927, %v1944
  %v1946 = vpop.f32.mrf.mxu0
  %v1947 = vadd.f32 %v1929, %v1946
  %1948 = vmatmul.bf16.gmra.mxu0 %v403
  %v1949 = vpop.f32.mrf.mxu0
  %v1950 = vadd.f32 %v1932, %v1949
  %v1951 = vpop.f32.mrf.mxu0
  %1952 = vdwg.mxu0
  %1953 = vmatpush.bf16.msra.mxu0 %v1429
  %1954 = vmatpush.bf16.msra.mxu0 %v1427
  %1955 = vmatpush.bf16.msra.mxu0 %v1425
  %1956 = vmatpush.bf16.msra.mxu0 %v1423
  %1957 = vmatpush.bf16.msra.mxu0 %v1421
  %1958 = vmatpush.bf16.msra.mxu0 %v1419
  %1959 = vmatpush.bf16.msra.mxu0 %v1417
  %1960 = vmatpush.bf16.msra.mxu0 %v1415
  %1961 = vmatmul.bf16.gmra.mxu0 %v388
  %v1962 = vpop.f32.mrf.mxu0
  %v1963 = vadd.f32 %v1945, %v1962
  %v1964 = vpop.f32.mrf.mxu0
  %v1965 = vadd.f32 %v1947, %v1964
  %1966 = vmatmul.bf16.gmra.mxu0 %v404
  %v1967 = vpop.f32.mrf.mxu0
  %v1968 = vadd.f32 %v1950, %v1967
  %v1969 = vpop.f32.mrf.mxu0
  %1970 = vdwg.mxu0
  %1971 = vmatpush.bf16.msra.mxu0 %v1445
  %1972 = vmatpush.bf16.msra.mxu0 %v1443
  %1973 = vmatpush.bf16.msra.mxu0 %v1441
  %1974 = vmatpush.bf16.msra.mxu0 %v1439
  %1975 = vmatpush.bf16.msra.mxu0 %v1437
  %1976 = vmatpush.bf16.msra.mxu0 %v1435
  %1977 = vmatpush.bf16.msra.mxu0 %v1433
  %1978 = vmatpush.bf16.msra.mxu0 %v1431
  %1979 = vmatmul.bf16.gmra.mxu0 %v389
  %v1980 = vpop.f32.mrf.mxu0
  %v1981 = vadd.f32 %v1963, %v1980
  %v1982 = vpop.f32.mrf.mxu0
  %v1983 = vadd.f32 %v1965, %v1982
  %1984 = vmatmul.bf16.gmra.mxu0 %v405
  %v1985 = vpop.f32.mrf.mxu0
  %v1986 = vadd.f32 %v1968, %v1985
  %v1987 = vpop.f32.mrf.mxu0
  %1988 = vdwg.mxu0
  %1989 = vmatpush.bf16.msra.mxu0 %v1461
  %1990 = vmatpush.bf16.msra.mxu0 %v1459
  %1991 = vmatpush.bf16.msra.mxu0 %v1457
  %1992 = vmatpush.bf16.msra.mxu0 %v1455
  %1993 = vmatpush.bf16.msra.mxu0 %v1453
  %1994 = vmatpush.bf16.msra.mxu0 %v1451
  %1995 = vmatpush.bf16.msra.mxu0 %v1449
  %1996 = vmatpush.bf16.msra.mxu0 %v1447
  %1997 = vmatmul.bf16.gmra.mxu0 %v390
  %v1998 = vpop.f32.mrf.mxu0
  %v1999 = vadd.f32 %v1981, %v1998
  %v2000 = vpop.f32.mrf.mxu0
  %v2001 = vadd.f32 %v1983, %v2000
  %2002 = vmatmul.bf16.gmra.mxu0 %v406
  %v2003 = vpop.f32.mrf.mxu0
  %v2004 = vadd.f32 %v1986, %v2003
  %v2005 = vpop.f32.mrf.mxu0
  %2006 = vdwg.mxu0
  %2007 = vmatpush.bf16.msra.mxu0 %v1222
  %2008 = vmatpush.bf16.msra.mxu0 %v1220
  %2009 = vmatpush.bf16.msra.mxu0 %v1218
  %2010 = vmatpush.bf16.msra.mxu0 %v1216
  %2011 = vmatpush.bf16.msra.mxu0 %v1214
  %2012 = vmatpush.bf16.msra.mxu0 %v1212
  %2013 = vmatpush.bf16.msra.mxu0 %v1210
  %2014 = vmatpush.bf16.msra.mxu0 %v1208
  %2015 = vmatmul.bf16.gmra.mxu0 %v375
  %v2016 = vpop.f32.mrf.mxu0
  %v2017 = vadd.f32 0.0, %v2016
  %v2018 = vpop.f32.mrf.mxu0
  %v2019 = vadd.f32 0.0, %v2018
  %2020 = vmatmul.bf16.gmra.mxu0 %v391
  %v2021 = vpop.f32.mrf.mxu0
  %v2022 = vadd.f32 0.0, %v2021
  %v2023 = vpop.f32.mrf.mxu0
  %2024 = vdwg.mxu0
  %2025 = vmatpush.bf16.msra.mxu0 %v1238
  %2026 = vmatpush.bf16.msra.mxu0 %v1236
  %2027 = vmatpush.bf16.msra.mxu0 %v1234
  %2028 = vmatpush.bf16.msra.mxu0 %v1232
  %2029 = vmatpush.bf16.msra.mxu0 %v1230
  %2030 = vmatpush.bf16.msra.mxu0 %v1228
  %2031 = vmatpush.bf16.msra.mxu0 %v1226
  %2032 = vmatpush.bf16.msra.mxu0 %v1224
  %2033 = vmatmul.bf16.gmra.mxu0 %v376
  %v2034 = vpop.f32.mrf.mxu0
  %v2035 = vadd.f32 %v2017, %v2034
  %v2036 = vpop.f32.mrf.mxu0
  %v2037 = vadd.f32 %v2019, %v2036
  %2038 = vmatmul.bf16.gmra.mxu0 %v392
  %v2039 = vpop.f32.mrf.mxu0
  %v2040 = vadd.f32 %v2022, %v2039
  %v2041 = vpop.f32.mrf.mxu0
  %2042 = vdwg.mxu0
  %2043 = vmatpush.bf16.msra.mxu0 %v1254
  %2044 = vmatpush.bf16.msra.mxu0 %v1252
  %2045 = vmatpush.bf16.msra.mxu0 %v1250
  %2046 = vmatpush.bf16.msra.mxu0 %v1248
  %2047 = vmatpush.bf16.msra.mxu0 %v1246
  %2048 = vmatpush.bf16.msra.mxu0 %v1244
  %2049 = vmatpush.bf16.msra.mxu0 %v1242
  %2050 = vmatpush.bf16.msra.mxu0 %v1240
  %2051 = vmatmul.bf16.gmra.mxu0 %v377
  %v2052 = vpop.f32.mrf.mxu0
  %v2053 = vadd.f32 %v2035, %v2052
  %v2054 = vpop.f32.mrf.mxu0
  %v2055 = vadd.f32 %v2037, %v2054
  %2056 = vmatmul.bf16.gmra.mxu0 %v393
  %v2057 = vpop.f32.mrf.mxu0
  %v2058 = vadd.f32 %v2040, %v2057
  %v2059 = vpop.f32.mrf.mxu0
  %2060 = vdwg.mxu0
  %2061 = vmatpush.bf16.msra.mxu0 %v1270
  %2062 = vmatpush.bf16.msra.mxu0 %v1268
  %2063 = vmatpush.bf16.msra.mxu0 %v1266
  %2064 = vmatpush.bf16.msra.mxu0 %v1264
  %2065 = vmatpush.bf16.msra.mxu0 %v1262
  %2066 = vmatpush.bf16.msra.mxu0 %v1260
  %2067 = vmatpush.bf16.msra.mxu0 %v1258
  %2068 = vmatpush.bf16.msra.mxu0 %v1256
  %2069 = vmatmul.bf16.gmra.mxu0 %v378
  %v2070 = vpop.f32.mrf.mxu0
  %v2071 = vadd.f32 %v2053, %v2070
  %v2072 = vpop.f32.mrf.mxu0
  %v2073 = vadd.f32 %v2055, %v2072
  %2074 = vmatmul.bf16.gmra.mxu0 %v394
  %v2075 = vpop.f32.mrf.mxu0
  %v2076 = vadd.f32 %v2058, %v2075
  %v2077 = vpop.f32.mrf.mxu0
  %2078 = vdwg.mxu0
  %2079 = vmatpush.bf16.msra.mxu0 %v1286
  %2080 = vmatpush.bf16.msra.mxu0 %v1284
  %2081 = vmatpush.bf16.msra.mxu0 %v1282
  %2082 = vmatpush.bf16.msra.mxu0 %v1280
  %2083 = vmatpush.bf16.msra.mxu0 %v1278
  %2084 = vmatpush.bf16.msra.mxu0 %v1276
  %2085 = vmatpush.bf16.msra.mxu0 %v1274
  %2086 = vmatpush.bf16.msra.mxu0 %v1272
  %2087 = vmatmul.bf16.gmra.mxu0 %v379
  %v2088 = vpop.f32.mrf.mxu0
  %v2089 = vadd.f32 %v2071, %v2088
  %v2090 = vpop.f32.mrf.mxu0
  %v2091 = vadd.f32 %v2073, %v2090
  %2092 = vmatmul.bf16.gmra.mxu0 %v395
  %v2093 = vpop.f32.mrf.mxu0
  %v2094 = vadd.f32 %v2076, %v2093
  %v2095 = vpop.f32.mrf.mxu0
  %2096 = vdwg.mxu0
  %2097 = vmatpush.bf16.msra.mxu0 %v1302
  %2098 = vmatpush.bf16.msra.mxu0 %v1300
  %2099 = vmatpush.bf16.msra.mxu0 %v1298
  %2100 = vmatpush.bf16.msra.mxu0 %v1296
  %2101 = vmatpush.bf16.msra.mxu0 %v1294
  %2102 = vmatpush.bf16.msra.mxu0 %v1292
  %2103 = vmatpush.bf16.msra.mxu0 %v1290
  %2104 = vmatpush.bf16.msra.mxu0 %v1288
  %2105 = vmatmul.bf16.gmra.mxu0 %v380
  %v2106 = vpop.f32.mrf.mxu0
  %v2107 = vadd.f32 %v2089, %v2106
  %v2108 = vpop.f32.mrf.mxu0
  %v2109 = vadd.f32 %v2091, %v2108
  %2110 = vmatmul.bf16.gmra.mxu0 %v396
  %v2111 = vpop.f32.mrf.mxu0
  %v2112 = vadd.f32 %v2094, %v2111
  %v2113 = vpop.f32.mrf.mxu0
  %2114 = vdwg.mxu0
  %2115 = vmatpush.bf16.msra.mxu0 %v1318
  %2116 = vmatpush.bf16.msra.mxu0 %v1316
  %2117 = vmatpush.bf16.msra.mxu0 %v1314
  %2118 = vmatpush.bf16.msra.mxu0 %v1312
  %2119 = vmatpush.bf16.msra.mxu0 %v1310
  %2120 = vmatpush.bf16.msra.mxu0 %v1308
  %2121 = vmatpush.bf16.msra.mxu0 %v1306
  %2122 = vmatpush.bf16.msra.mxu0 %v1304
  %2123 = vmatmul.bf16.gmra.mxu0 %v381
  %v2124 = vpop.f32.mrf.mxu0
  %v2125 = vadd.f32 %v2107, %v2124
  %v2126 = vpop.f32.mrf.mxu0
  %v2127 = vadd.f32 %v2109, %v2126
  %2128 = vmatmul.bf16.gmra.mxu0 %v397
  %v2129 = vpop.f32.mrf.mxu0
  %v2130 = vadd.f32 %v2112, %v2129
  %v2131 = vpop.f32.mrf.mxu0
  %2132 = vdwg.mxu0
  %2133 = vmatpush.bf16.msra.mxu0 %v1334
  %2134 = vmatpush.bf16.msra.mxu0 %v1332
  %2135 = vmatpush.bf16.msra.mxu0 %v1330
  %2136 = vmatpush.bf16.msra.mxu0 %v1328
  %2137 = vmatpush.bf16.msra.mxu0 %v1326
  %2138 = vmatpush.bf16.msra.mxu0 %v1324
  %2139 = vmatpush.bf16.msra.mxu0 %v1322
  %2140 = vmatpush.bf16.msra.mxu0 %v1320
  %2141 = vmatmul.bf16.gmra.mxu0 %v382
  %v2142 = vpop.f32.mrf.mxu0
  %v2143 = vadd.f32 %v2125, %v2142
  %v2144 = vpop.f32.mrf.mxu0
  %v2145 = vadd.f32 %v2127, %v2144
  %2146 = vmatmul.bf16.gmra.mxu0 %v398
  %v2147 = vpop.f32.mrf.mxu0
  %v2148 = vadd.f32 %v2130, %v2147
  %v2149 = vpop.f32.mrf.mxu0
  %2150 = vdwg.mxu0
  %2151 = vmatpush.bf16.msra.mxu0 %v1350
  %2152 = vmatpush.bf16.msra.mxu0 %v1348
  %2153 = vmatpush.bf16.msra.mxu0 %v1346
  %2154 = vmatpush.bf16.msra.mxu0 %v1344
  %2155 = vmatpush.bf16.msra.mxu0 %v1342
  %2156 = vmatpush.bf16.msra.mxu0 %v1340
  %2157 = vmatpush.bf16.msra.mxu0 %v1338
  %2158 = vmatpush.bf16.msra.mxu0 %v1336
  %2159 = vmatmul.bf16.gmra.mxu0 %v383
  %v2160 = vpop.f32.mrf.mxu0
  %v2161 = vadd.f32 %v2143, %v2160
  %v2162 = vpop.f32.mrf.mxu0
  %v2163 = vadd.f32 %v2145, %v2162
  %2164 = vmatmul.bf16.gmra.mxu0 %v399
  %v2165 = vpop.f32.mrf.mxu0
  %v2166 = vadd.f32 %v2148, %v2165
  %v2167 = vpop.f32.mrf.mxu0
  %2168 = vdwg.mxu0
  %2169 = vmatpush.bf16.msra.mxu0 %v1366
  %2170 = vmatpush.bf16.msra.mxu0 %v1364
  %2171 = vmatpush.bf16.msra.mxu0 %v1362
  %2172 = vmatpush.bf16.msra.mxu0 %v1360
  %2173 = vmatpush.bf16.msra.mxu0 %v1358
  %2174 = vmatpush.bf16.msra.mxu0 %v1356
  %2175 = vmatpush.bf16.msra.mxu0 %v1354
  %2176 = vmatpush.bf16.msra.mxu0 %v1352
  %2177 = vmatmul.bf16.gmra.mxu0 %v384
  %v2178 = vpop.f32.mrf.mxu0
  %v2179 = vadd.f32 %v2161, %v2178
  %v2180 = vpop.f32.mrf.mxu0
  %v2181 = vadd.f32 %v2163, %v2180
  %2182 = vmatmul.bf16.gmra.mxu0 %v400
  %v2183 = vpop.f32.mrf.mxu0
  %v2184 = vadd.f32 %v2166, %v2183
  %v2185 = vpop.f32.mrf.mxu0
  %2186 = vdwg.mxu0
  %2187 = vmatpush.bf16.msra.mxu0 %v1382
  %2188 = vmatpush.bf16.msra.mxu0 %v1380
  %2189 = vmatpush.bf16.msra.mxu0 %v1378
  %2190 = vmatpush.bf16.msra.mxu0 %v1376
  %2191 = vmatpush.bf16.msra.mxu0 %v1374
  %2192 = vmatpush.bf16.msra.mxu0 %v1372
  %2193 = vmatpush.bf16.msra.mxu0 %v1370
  %2194 = vmatpush.bf16.msra.mxu0 %v1368
  %2195 = vmatmul.bf16.gmra.mxu0 %v385
  %v2196 = vpop.f32.mrf.mxu0
  %v2197 = vadd.f32 %v2179, %v2196
  %v2198 = vpop.f32.mrf.mxu0
  %v2199 = vadd.f32 %v2181, %v2198
  %2200 = vmatmul.bf16.gmra.mxu0 %v401
  %v2201 = vpop.f32.mrf.mxu0
  %v2202 = vadd.f32 %v2184, %v2201
  %v2203 = vpop.f32.mrf.mxu0
  %2204 = vdwg.mxu0
  %2205 = vmatpush.bf16.msra.mxu0 %v1398
  %2206 = vmatpush.bf16.msra.mxu0 %v1396
  %2207 = vmatpush.bf16.msra.mxu0 %v1394
  %2208 = vmatpush.bf16.msra.mxu0 %v1392
  %2209 = vmatpush.bf16.msra.mxu0 %v1390
  %2210 = vmatpush.bf16.msra.mxu0 %v1388
  %2211 = vmatpush.bf16.msra.mxu0 %v1386
  %2212 = vmatpush.bf16.msra.mxu0 %v1384
  %2213 = vmatmul.bf16.gmra.mxu0 %v386
  %v2214 = vpop.f32.mrf.mxu0
  %v2215 = vadd.f32 %v2197, %v2214
  %v2216 = vpop.f32.mrf.mxu0
  %v2217 = vadd.f32 %v2199, %v2216
  %2218 = vmatmul.bf16.gmra.mxu0 %v402
  %v2219 = vpop.f32.mrf.mxu0
  %v2220 = vadd.f32 %v2202, %v2219
  %v2221 = vpop.f32.mrf.mxu0
  %2222 = vdwg.mxu0
  %2223 = vmatpush.bf16.msra.mxu0 %v1414
  %2224 = vmatpush.bf16.msra.mxu0 %v1412
  %2225 = vmatpush.bf16.msra.mxu0 %v1410
  %2226 = vmatpush.bf16.msra.mxu0 %v1408
  %2227 = vmatpush.bf16.msra.mxu0 %v1406
  %2228 = vmatpush.bf16.msra.mxu0 %v1404
  %2229 = vmatpush.bf16.msra.mxu0 %v1402
  %2230 = vmatpush.bf16.msra.mxu0 %v1400
  %2231 = vmatmul.bf16.gmra.mxu0 %v387
  %v2232 = vpop.f32.mrf.mxu0
  %v2233 = vadd.f32 %v2215, %v2232
  %v2234 = vpop.f32.mrf.mxu0
  %v2235 = vadd.f32 %v2217, %v2234
  %2236 = vmatmul.bf16.gmra.mxu0 %v403
  %v2237 = vpop.f32.mrf.mxu0
  %v2238 = vadd.f32 %v2220, %v2237
  %v2239 = vpop.f32.mrf.mxu0
  %2240 = vdwg.mxu0
  %2241 = vmatpush.bf16.msra.mxu0 %v1430
  %2242 = vmatpush.bf16.msra.mxu0 %v1428
  %2243 = vmatpush.bf16.msra.mxu0 %v1426
  %2244 = vmatpush.bf16.msra.mxu0 %v1424
  %2245 = vmatpush.bf16.msra.mxu0 %v1422
  %2246 = vmatpush.bf16.msra.mxu0 %v1420
  %2247 = vmatpush.bf16.msra.mxu0 %v1418
  %2248 = vmatpush.bf16.msra.mxu0 %v1416
  %2249 = vmatmul.bf16.gmra.mxu0 %v388
  %v2250 = vpop.f32.mrf.mxu0
  %v2251 = vadd.f32 %v2233, %v2250
  %v2252 = vpop.f32.mrf.mxu0
  %v2253 = vadd.f32 %v2235, %v2252
  %2254 = vmatmul.bf16.gmra.mxu0 %v404
  %v2255 = vpop.f32.mrf.mxu0
  %v2256 = vadd.f32 %v2238, %v2255
  %v2257 = vpop.f32.mrf.mxu0
  %2258 = vdwg.mxu0
  %2259 = vmatpush.bf16.msra.mxu0 %v1446
  %2260 = vmatpush.bf16.msra.mxu0 %v1444
  %2261 = vmatpush.bf16.msra.mxu0 %v1442
  %2262 = vmatpush.bf16.msra.mxu0 %v1440
  %2263 = vmatpush.bf16.msra.mxu0 %v1438
  %2264 = vmatpush.bf16.msra.mxu0 %v1436
  %2265 = vmatpush.bf16.msra.mxu0 %v1434
  %2266 = vmatpush.bf16.msra.mxu0 %v1432
  %2267 = vmatmul.bf16.gmra.mxu0 %v389
  %v2268 = vpop.f32.mrf.mxu0
  %v2269 = vadd.f32 %v2251, %v2268
  %v2270 = vpop.f32.mrf.mxu0
  %v2271 = vadd.f32 %v2253, %v2270
  %2272 = vmatmul.bf16.gmra.mxu0 %v405
  %v2273 = vpop.f32.mrf.mxu0
  %v2274 = vadd.f32 %v2256, %v2273
  %v2275 = vpop.f32.mrf.mxu0
  %2276 = vdwg.mxu0
  %2277 = vmatpush.bf16.msra.mxu0 %v1462
  %2278 = vmatpush.bf16.msra.mxu0 %v1460
  %2279 = vmatpush.bf16.msra.mxu0 %v1458
  %2280 = vmatpush.bf16.msra.mxu0 %v1456
  %2281 = vmatpush.bf16.msra.mxu0 %v1454
  %2282 = vmatpush.bf16.msra.mxu0 %v1452
  %2283 = vmatpush.bf16.msra.mxu0 %v1450
  %2284 = vmatpush.bf16.msra.mxu0 %v1448
  %2285 = vmatmul.bf16.gmra.mxu0 %v390
  %v2286 = vpop.f32.mrf.mxu0
  %v2287 = vadd.f32 %v2269, %v2286
  %v2288 = vpop.f32.mrf.mxu0
  %v2289 = vadd.f32 %v2271, %v2288
  %2290 = vmatmul.bf16.gmra.mxu0 %v406
  %v2291 = vpop.f32.mrf.mxu0
  %v2292 = vadd.f32 %v2274, %v2291
  %v2293 = vpop.f32.mrf.mxu0
  %2294 = vdwg.mxu0
  %v2295 = vadd.f32 %v1999, %v2001
  %v2296 = vadd.f32 %v2295, %v2004
  %v2297 = vrot.slane %v2296, 4
  %v2298 = vadd.f32 %v2296, %v2297
  %v2299 = vrot.slane %v2298, 2
  %v2300 = vadd.f32 %v2298, %v2299
  %v2301 = vrot.slane %v2300, 1
  %v2302 = vadd.f32 %v2300, %v2301
  %v2303 = vadd.f32 %v2287, %v2289
  %v2304 = vadd.f32 %v2303, %v2292
  %v2305 = vrot.slane %v2304, 4
  %v2306 = vadd.f32 %v2304, %v2305
  %v2307 = vrot.slane %v2306, 2
  %v2308 = vadd.f32 %v2306, %v2307
  %v2309 = vrot.slane %v2308, 1
  %v2310 = vadd.f32 %v2308, %v2309
  %v2311 = vmul.f32 %v2302, 0.055555556
  %v2312 = vmul.f32 %v2310, 0.055555556
  %v2313 = vmul.f32 %v1999, %v1999
  %v2314 = vmul.f32 %v2287, %v2287
  %v2315 = vmul.f32 %v2001, %v2001
  %v2316 = vmul.f32 %v2289, %v2289
  %v2317 = vmul.f32 %v2004, %v2004
  %v2318 = vmul.f32 %v2292, %v2292
  %v2319 = vadd.f32 %v2313, %v2315
  %v2320 = vadd.f32 %v2319, %v2317
  %v2321 = vrot.slane %v2320, 4
  %v2322 = vadd.f32 %v2320, %v2321
  %v2323 = vrot.slane %v2322, 2
  %v2324 = vadd.f32 %v2322, %v2323
  %v2325 = vrot.slane %v2324, 1
  %v2326 = vadd.f32 %v2324, %v2325
  %v2327 = vadd.f32 %v2314, %v2316
  %v2328 = vadd.f32 %v2327, %v2318
  %v2329 = vrot.slane %v2328, 4
  %v2330 = vadd.f32 %v2328, %v2329
  %v2331 = vrot.slane %v2330, 2
  %v2332 = vadd.f32 %v2330, %v2331
  %v2333 = vrot.slane %v2332, 1
  %v2334 = vadd.f32 %v2332, %v2333
  %v2335 = vmul.f32 %v2326, 0.055555556
  %v2336 = vmul.f32 %v2334, 0.055555556
  %v2337 = vmul.f32 %v2311, %v2311
  %v2338 = vmul.f32 %v2312, %v2312
  %v2339 = vsub.f32 %v2335, %v2337
  %v2340 = vsub.f32 %v2336, %v2338
  %v2341 = vmax.f32 %v2339, 0.0
  %v2342 = vmax.f32 %v2340, 0.0
  %v2343 = vsub.f32 %v1999, %v2311
  %v2344 = vsub.f32 %v2287, %v2312
  %v2345 = vsub.f32 %v2001, %v2311
  %v2346 = vsub.f32 %v2289, %v2312
  %v2347 = vsub.f32 %v2004, %v2311
  %v2348 = vsub.f32 %v2292, %v2312
  %v2349 = vadd.f32 %v2341, 1e-05
  %v2350 = vadd.f32 %v2342, 1e-05
  %v2351 = vrsqrt.pop %v2349
  %v2352 = vmul.f32 %v2351, %v2349
  %v2353 = vmul.f32 %v2352, %v2351
  %v2354 = vmul.f32 0.5, %v2353
  %v2355 = vsub.f32 1.5, %v2354
  %v2356 = vmul.f32 %v2351, %v2355
  %vm2357 = vweird.f32 %v2349
  %vm2358 = vweird.f32 %v2351
  %vm2359 = vmor %vm2357, %vm2358
  %v2360 = vsel %vm2359, %v2351, %v2356
  %v2361 = vrsqrt.pop %v2350
  %v2362 = vmul.f32 %v2361, %v2350
  %v2363 = vmul.f32 %v2362, %v2361
  %v2364 = vmul.f32 0.5, %v2363
  %v2365 = vsub.f32 1.5, %v2364
  %v2366 = vmul.f32 %v2361, %v2365
  %vm2367 = vweird.f32 %v2350
  %vm2368 = vweird.f32 %v2361
  %vm2369 = vmor %vm2367, %vm2368
  %v2370 = vsel %vm2369, %v2361, %v2366
  %v2371 = vmul.f32 %v2343, %v2360
  %v2372 = vmul.f32 %v2344, %v2370
  %v2373 = vmul.f32 %v2345, %v2360
  %v2374 = vmul.f32 %v2346, %v2370
  %v2375 = vmul.f32 %v2347, %v2360
  %v2376 = vmul.f32 %v2348, %v2370
  %v2377 = vld [vmem:[%s2] sm:$0x3]
  %v2379 = vperm.slane %v2377, 0
  %v2380 = vperm.slane %v2377, 1
  %v2383 = vmul.f32 %v2371, %v2379
  %v2384 = vmul.f32 %v2372, %v2380
  %v2385 = vmul.f32 %v2373, %v2379
  %v2386 = vmul.f32 %v2374, %v2380
  %v2387 = vmul.f32 %v2375, %v2379
  %v2388 = vmul.f32 %v2376, %v2380
  %v2389 = vld [vmem:[%s3] sm:$0x3]
  %v2391 = vperm.slane %v2389, 0
  %v2392 = vperm.slane %v2389, 1
  %v2395 = vadd.f32 %v2383, %v2391
  %v2396 = vadd.f32 %v2384, %v2392
  %v2397 = vadd.f32 %v2385, %v2391
  %v2398 = vadd.f32 %v2386, %v2392
  %v2399 = vadd.f32 %v2387, %v2391
  %v2400 = vadd.f32 %v2388, %v2392
  %vm2401 = vcmp.gt.f32.partialorder %v2395, 0.0
  %vm2402 = vcmp.gt.f32.partialorder %v2396, 0.0
  %vm2403 = vcmp.gt.f32.partialorder %v2397, 0.0
  %vm2404 = vcmp.gt.f32.partialorder %v2398, 0.0
  %vm2405 = vcmp.gt.f32.partialorder %v2399, 0.0
  %vm2406 = vcmp.gt.f32.partialorder %v2400, 0.0
  %v2407 = vmul.f32 %v2395, 0.2
  %v2408 = vmul.f32 %v2396, 0.2
  %v2409 = vmul.f32 %v2397, 0.2
  %v2410 = vmul.f32 %v2398, 0.2
  %v2411 = vmul.f32 %v2399, 0.2
  %v2412 = vmul.f32 %v2400, 0.2
  %v2413 = vsel %vm2401, %v2395, %v2407
  %v2414 = vsel %vm2402, %v2396, %v2408
  %v2415 = vsel %vm2403, %v2397, %v2409
  %v2416 = vsel %vm2404, %v2398, %v2410
  %v2417 = vsel %vm2405, %v2399, %v2411
  %v2418 = vsel %vm2406, %v2400, %v2412
  %v2419 = vld [vmem:[%s4] sm:$0xff]
  %v2420 = vld [vmem:[%s4 + $0x8] sm:$0xff]
  %v2421 = vld [vmem:[%s4 + $0x10] sm:$0xff]
  %v2422 = vld [vmem:[%s4 + $0x18] sm:$0xff]
  %v2423 = vld [vmem:[%s4 + $0x20] sm:$0xff]
  %v2424 = vld [vmem:[%s4 + $0x28] sm:$0xff]
  %v2425 = vmul.f32 %v2413, %v2419
  %v2426 = vmul.f32 %v2414, %v2420
  %v2427 = vmul.f32 %v2415, %v2421
  %v2428 = vmul.f32 %v2416, %v2422
  %v2429 = vmul.f32 %v2417, %v2423
  %v2430 = vmul.f32 %v2418, %v2424
  %v2431 = vld [vmem:[%s5] sm:$0x3]
  %vm2432 = vcmask 195584
  %v2434 = vsel %vm2432, %v2431, 0
  %2436 = vmatpush.msra.mxu0 0.0
  %2437 = vmatpush.msra.mxu0 0.0
  %2438 = vmatpush.msra.mxu0 0.0
  %2439 = vmatpush.msra.mxu0 0.0
  %2440 = vmatpush.msra.mxu0 0.0
  %2441 = vmatpush.msra.mxu0 0.0
  %2442 = vmatpush.msra.mxu0 0.0
  %2443 = vmatpush.msra.mxu0 0.0
  %2444 = vmatpush.msra.mxu0 0.0
  %2445 = vmatpush.msra.mxu0 0.0
  %2446 = vmatpush.msra.mxu0 0.0
  %2447 = vmatpush.msra.mxu0 0.0
  %2448 = vmatpush.msra.mxu0 0.0
  %2449 = vmatpush.msra.mxu0 %v2429
  %2450 = vmatpush.msra.mxu0 %v2427
  %2451 = vmatpush.msra.mxu0 %v2425
  %2452 = vmatmul.f32.gmra.mxu0 %v2434
  %v2453 = vpop.f32.mrf.mxu0
  %v2454 = vadd.f32 0.0, %v2453
  %2455 = vdwg.mxu0
  %2456 = vmatpush.msra.mxu0 0.0
  %2457 = vmatpush.msra.mxu0 0.0
  %2458 = vmatpush.msra.mxu0 0.0
  %2459 = vmatpush.msra.mxu0 0.0
  %2460 = vmatpush.msra.mxu0 0.0
  %2461 = vmatpush.msra.mxu0 0.0
  %2462 = vmatpush.msra.mxu0 0.0
  %2463 = vmatpush.msra.mxu0 0.0
  %2464 = vmatpush.msra.mxu0 0.0
  %2465 = vmatpush.msra.mxu0 0.0
  %2466 = vmatpush.msra.mxu0 0.0
  %2467 = vmatpush.msra.mxu0 0.0
  %2468 = vmatpush.msra.mxu0 0.0
  %2469 = vmatpush.msra.mxu0 %v2430
  %2470 = vmatpush.msra.mxu0 %v2428
  %2471 = vmatpush.msra.mxu0 %v2426
  %2472 = vmatmul.f32.gmra.mxu0 %v2434
  %v2473 = vpop.f32.mrf.mxu0
  %v2474 = vadd.f32 0.0, %v2473
  %2475 = vdwg.mxu0
  %vm2476 = vcmask 1041408
  %v2477 = vsel %vm2476, %v2454, 0.0
  %v2478 = vsel %vm2476, %v2474, 0.0
  %v2479 = vadd.f32 %v2477, %v2478
  %2480 = vadd.xlane.f32.xlu0 %v2479
  %v2481 = vpop.xlane.xlu0 %2480
  %v2482 = vand.u32 2147483647, %v2481
  %v2483 = vsub.f32 0.0, %v2482
  %v2484 = vmul.f32 %v2483, 1.442695
  %v2485 = vpow.pop %v2484
  %vm2486 = vcmp.ge.f32.partialorder %v2481, 0.0
  %v2487 = vadd.f32 %v2485, 1.0
  %v2488 = vrcp.pop %v2487
  %v2489 = vmul.f32 %v2487, %v2488
  %v2490 = vsub.f32 1.0, %v2489
  %v2491 = vmul.f32 %v2488, %v2490
  %v2492 = vadd.f32 %v2488, %v2491
  %vm2493 = vweird.f32 %v2487
  %vm2494 = vweird.f32 %v2488
  %vm2495 = vmor %vm2493, %vm2494
  %v2496 = vsel %vm2495, %v2488, %v2492
  %v2497 = vand.u32 2147483647, %v2487
  %vm2498 = vcmp.eq.f32.partialorder %v2497, 8.507059e+37
  %v2499 = vand.u32 %v2487, 2147483648
  %v2500 = vor.u32 1.1754944e-38, %v2499
  %v2501 = vsel %vm2498, %v2500, %v2496
  %v2502 = vmul.f32 1.0, %v2501
  %v2503 = vmul.f32 %v2485, %v2501
  %v2504 = vsel %vm2486, %v2502, %v2503
  %vm2505 = vcmask 1024
  %2506 = vst.msk [vmem:[%s6] sm:$0x3] %vm2505, %v2504
  // Predicated region
  $region26: #{discriminator_forward.5} parent=0 // pred_check
    _
  $region27: #{discriminator_forward.5} parent=0 // pred_check_branch
    %2508 = sbr.rel (0) target = $region29
  $region28: #{discriminator_forward.5} parent=0 // pred_region
    _
  $region29: #{discriminator_forward.5} parent=0 // pred_fallthru
    _
  // Predicated region
  $region30: #{discriminator_forward.5} parent=0 // pred_check
    _
  $region31: #{discriminator_forward.5} parent=0 // pred_check_branch
    %2510 = sbr.rel (0) target = $region33
  $region32: #{discriminator_forward.5} parent=0 // pred_region
    _
  $region33: #{discriminator_forward.5} parent=0 // pred_fallthru
    _

</llo_original>
